<compile_context>
chip_gen: v5e
topology: v5e:2x2
jax: 0.10.0
libtpu: 0.0.40
codegen_flags: <defaults>
</compile_context>

<pallas_src>
import jax
import jax.numpy as jnp
from jax import lax
from jax.experimental import pallas as pl
from jax.experimental.pallas import tpu as pltpu

_BIG = 1e30     # "infinity" sentinel for min/max accumulators
_BIG_T = 1e18   # masked-target sentinel: (c - 1e18)^2 ~ 1e36 stays finite in f32

_SUB = 256      # lanes per register-resident sub-chunk inside a grid tile
_NCORES = 2     # pixel-range partitions (maps to the two TensorCores on v7x)


def _round_up(x, m):
    return -(-x // m) * m


def losses_forward(epoch, output, centers, target, *,
                   alpha=10.0, beta=0.1, gamma=0.1, lamb=0.85):
    """JAX/Pallas equivalent of Losses.forward(epoch, output, centers, d_dict)."""
    # TODO(synk): F.interpolate(output, [228, 304], mode='nearest') branch when
    # output spatial dims differ from target; this script requires matching shapes.
    assert output.shape[-2:] == target.shape[-2:], "shape-mismatch branch not supported"
    assert centers.ndim == 2, "expect (B, nbins) bin centers"

    B = output.shape[0]
    nbins = centers.shape[-1]
    R = B * 8

    out2 = output.reshape(B, -1)          # keep native dtype; cast in-kernel
    tgt2 = target.reshape(B, -1)
    P = out2.shape[1]

    # ---- tile geometry -------------------------------------------------------
    # lane tile: multiple of _SUB (and 128).  Per-array tile kept <= ~512 KiB so
    # double-buffered inputs + 7 accumulators stay well inside every
    # generation's scoped-VMEM budget (v5e 16 MiB default, v7x 64 MiB physical).
    cap = max(_SUB, min(4096, (131072 // R) // _SUB * _SUB))
    l_needed = -(-P // 8)                              # lanes per sub-row (unpadded)
    per_core = -(-l_needed // _NCORES)
    tiles_per_core = max(1, -(-per_core // cap))
    lane_tile = _round_up(-(-per_core // tiles_per_core), _SUB)
    n_tiles = tiles_per_core * _NCORES
    L_pad = lane_tile * n_tiles
    P_pad = 8 * L_pad

    if P_pad != P:
        pad = P_pad - P
        out2 = jnp.pad(out2, ((0, 0), (0, pad)))       # pad value 0.0 (< 0.01)
        tgt2 = jnp.pad(tgt2, ((0, 0), (0, pad)))
    out2 = out2.reshape(R, L_pad)
    tgt2 = tgt2.reshape(R, L_pad)

    # first global lane-tile index that can contain padded pixels
    if P == P_pad:
        first_pad_tile = n_tiles
    else:
        first_pad_tile = max(0, P - 7 * L_pad) // lane_tile

    # bin centers pre-broadcast to (nbins, B*8, 128): the hot loop reads one
    # (R, 128) block per bin -- no per-bin lane splat inside the kernel.
    cen_b = jnp.broadcast_to(
        jnp.transpose(centers.astype(jnp.float32))[:, :, None, None],
        (nbins, B, 8, 128)).reshape(nbins, R, 128)

    n_sub = lane_tile // _SUB
    n_cs = _SUB // 128

    def kernel(pred_ref, tgt_ref, cen_ref, stat_ref, binmin_ref,
               sumg_acc, sumg2_acc, cnt_acc, chamy_acc, nvalid_acc,
               maxt_acc, mint_acc, binmin_acc):
        core = pl.program_id(0)
        j = pl.program_id(1)
        gtile = core * tiles_per_core + j

        # ---- init per-partition accumulators --------------------------------
        @pl.when(j == 0)
        def _init():
            z = jnp.zeros((R, lane_tile), jnp.float32)
            sumg_acc[...] = z
            sumg2_acc[...] = z
            cnt_acc[...] = z
            chamy_acc[...] = z
            nvalid_acc[...] = z
            maxt_acc[...] = jnp.full((R, lane_tile), -_BIG, jnp.float32)
            mint_acc[...] = jnp.full((R, lane_tile), _BIG, jnp.float32)
            binmin_acc[...] = jnp.full((nbins, R, 128), _BIG, jnp.float32)

        pred = pred_ref[...].astype(jnp.float32)       # (R, lane_tile)
        tgt = tgt_ref[...].astype(jnp.float32)         # (R, lane_tile)

        # ---- SILogLoss streaming stats (zero padding auto-fails the mask) ----
        mask = jnp.logical_and(pred >= 0.01, tgt >= 0.01)
        maskf = mask.astype(jnp.float32)
        num = jnp.where(mask, pred + 0.01, 1.0)
        den = jnp.where(mask, tgt + 0.01, 1.0)
        g = jnp.log(num / den)                         # one log/element; 0 if masked
        sumg_acc[...] += g
        sumg2_acc[...] += g * g
        cnt_acc[...] += maskf

        # ---- BinsChamferLoss: unrolled bins x chunk loop ----------------------
        valid = tgt >= 0.01
        validf = valid.astype(jnp.float32)
        nvalid_acc[...] += validf
        tgt_m = jnp.where(valid, tgt, _BIG_T)          # single pre-mask select

        for s in range(n_sub):
            base = s * _SUB
            t_ch = [tgt_m[:, base + c * 128: base + (c + 1) * 128]
                    for c in range(n_cs)]
            pixmin = [jnp.full((R, 128), _BIG, jnp.float32) for _ in range(n_cs)]
            for k in range(nbins):
                ck = cen_ref[k]                        # (R, 128) resident centers
                fold = None
                for c in range(n_cs):
                    d = ck - t_ch[c]
                    d = d * d
                    pixmin[c] = jnp.minimum(pixmin[c], d)
                    fold = d if fold is None else jnp.minimum(fold, d)
                binmin_acc[k] = jnp.minimum(binmin_acc[k], fold)
            for c in range(n_cs):
                sl = slice(base + c * 128, base + (c + 1) * 128)
                chamy_acc[:, sl] += pixmin[c] * validf[:, sl]

        # ---- MinMaxLoss running min/max (pad-mask only where needed) ----------
        if first_pad_tile > 0:
            @pl.when(gtile < first_pad_tile)
            def _mm_fast():
                maxt_acc[...] = jnp.maximum(maxt_acc[...], tgt)
                mint_acc[...] = jnp.minimum(mint_acc[...], tgt)
        if first_pad_tile < n_tiles:
            @pl.when(gtile >= first_pad_tile)
            def _mm_masked():
                row = lax.broadcasted_iota(jnp.int32, (R, lane_tile), 0)
                col = lax.broadcasted_iota(jnp.int32, (R, lane_tile), 1)
                flat = (row & 7) * L_pad + gtile * lane_tile + col
                inb = flat < P
                maxt_acc[...] = jnp.maximum(maxt_acc[...],
                                            jnp.where(inb, tgt, -_BIG))
                mint_acc[...] = jnp.minimum(mint_acc[...],
                                            jnp.where(inb, tgt, _BIG))

        # ---- per-partition finalize: reduce lanes, emit per-row statistics ----
        @pl.when(j == tiles_per_core - 1)
        def _finalize():
            stat_ref[0, :, 0:1] = jnp.sum(sumg_acc[...], axis=1, keepdims=True)
            stat_ref[0, :, 1:2] = jnp.sum(sumg2_acc[...], axis=1, keepdims=True)
            stat_ref[0, :, 2:3] = jnp.sum(cnt_acc[...], axis=1, keepdims=True)
            stat_ref[0, :, 3:4] = jnp.sum(nvalid_acc[...], axis=1, keepdims=True)
            stat_ref[0, :, 4:5] = jnp.sum(chamy_acc[...], axis=1, keepdims=True)
            stat_ref[0, :, 5:6] = jnp.max(maxt_acc[...], axis=1, keepdims=True)
            stat_ref[0, :, 6:7] = jnp.min(mint_acc[...], axis=1, keepdims=True)
            stat_ref[0, :, 7:8] = jnp.zeros((R, 1), jnp.float32)
            for k in range(nbins):
                binmin_ref[0, :, k:k + 1] = jnp.min(binmin_acc[k], axis=1,
                                                    keepdims=True)

    grid_spec = pltpu.PrefetchScalarGridSpec(
        num_scalar_prefetch=0,
        grid=(_NCORES, tiles_per_core),
        in_specs=[
            pl.BlockSpec((R, lane_tile),
                         lambda c, j: (0, c * tiles_per_core + j)),   # pred tile
            pl.BlockSpec((R, lane_tile),
                         lambda c, j: (0, c * tiles_per_core + j)),   # target tile
            pl.BlockSpec((nbins, R, 128), lambda c, j: (0, 0, 0)),    # centers
        ],
        out_specs=[
            pl.BlockSpec((1, R, 8), lambda c, j: (c, 0, 0)),          # row stats
            pl.BlockSpec((1, R, nbins), lambda c, j: (c, 0, 0)),      # per-bin mins
        ],
        scratch_shapes=[pltpu.VMEM((R, lane_tile), jnp.float32)] * 7
                       + [pltpu.VMEM((nbins, R, 128), jnp.float32)],
    )

    stat, binmin = pl.pallas_call(
        kernel,
        out_shape=(jax.ShapeDtypeStruct((_NCORES, R, 8), jnp.float32),
                   jax.ShapeDtypeStruct((_NCORES, R, nbins), jnp.float32)),
        grid_spec=grid_spec,
        compiler_params=pltpu.CompilerParams(
            dimension_semantics=("parallel", "arbitrary"),
            vmem_limit_bytes=32 * 1024 * 1024),
    )(out2, tgt2, cen_b)

    # ---- trivial epilogue: combine the per-partition partials -----------------
    s = stat.reshape(_NCORES, B, 8, 8)
    sum_g = jnp.sum(stat[..., 0])
    sum_g2 = jnp.sum(stat[..., 1])
    cnt = jnp.sum(stat[..., 2])
    nvalid_b = jnp.sum(s[..., 3], axis=(0, 2))                    # (B,)
    chy_b = jnp.sum(s[..., 4], axis=(0, 2))
    maxt_b = jnp.max(s[..., 5], axis=(0, 2))
    mint_b = jnp.min(s[..., 6], axis=(0, 2))
    binmin_b = jnp.min(binmin.reshape(_NCORES, B, 8, nbins), axis=(0, 2))

    # SILogLoss (torch.var is unbiased; counts clamped to avoid NaN when empty)
    mean_g = sum_g / jnp.maximum(cnt, 1.0)
    var_g = (jnp.maximum(sum_g2 - cnt * mean_g * mean_g, 0.0)
             / jnp.maximum(cnt - 1.0, 1.0))
    dg = var_g + (1.0 - lamb) * mean_g * mean_g
    sil = jnp.sqrt(jnp.maximum(dg, 0.0))

    # BinsChamferLoss (pytorch3d chamfer: point_reduction/batch_reduction "mean")
    has_valid = nvalid_b > 0.0
    cham_y = jnp.where(has_valid, chy_b / jnp.maximum(nvalid_b, 1.0), 0.0)
    cham_x = jnp.where(has_valid, jnp.sum(binmin_b, axis=1) / nbins, 0.0)
    chamfer = jnp.mean(cham_x) + jnp.mean(cham_y)

    # MinMaxLoss (min/max over the raw target, per reference)
    cenf = centers.astype(jnp.float32)
    mm = (jnp.sum(jnp.abs(cenf[:, -1] - maxt_b))
          + jnp.sum(jnp.abs(cenf[:, 0] - mint_b)))

    gamma_eff = jnp.where(jnp.asarray(epoch, jnp.float32) < 10.0, 0.0, gamma)
    return alpha * sil + beta * chamfer + gamma_eff * mm


if __name__ == "__main__":
    key = jax.random.PRNGKey(0)
    k1, k2, k3 = jax.random.split(key, 3)

    # quarter-resolution depth maps (228x304 -> 57x76): exercises the two
    # pixel partitions plus the padded tail handling.
    B, C, H, W = 2, 1, 57, 76
    nbins = 16

    # positive "depth"-like values; a few below the 0.01 threshold get masked out
    output = jax.random.uniform(k1, (B, C, H, W), minval=0.0, maxval=10.0)
    target = jax.random.uniform(k2, (B, C, H, W), minval=0.0, maxval=10.0)
    centers = jnp.sort(
        jax.random.uniform(k3, (B, nbins), minval=0.1, maxval=10.0), axis=1)

    # epoch >= 10 exercises the MinMax-weighted branch
    loss = losses_forward(12, output, centers, target,
                          alpha=10.0, beta=0.1, gamma=0.1)
    jax.block_until_ready(loss)
    print("KERNEL_OK")
</pallas_src>

<mosaic_0001>
module attributes {stable_mosaic.version = 11 : i64} {
  func.func @kernel(%arg0: i32, %arg1: i32, %arg2: memref<16x512xf32, #tpu.memory_space<vmem>>, %arg3: memref<16x512xf32, #tpu.memory_space<vmem>>, %arg4: memref<16x16x128xf32, #tpu.memory_space<vmem>>, %arg5: memref<1x16x8xf32, #tpu.memory_space<vmem>>, %arg6: memref<1x16x16xf32, #tpu.memory_space<vmem>>, %arg7: memref<16x512xf32, #tpu.memory_space<vmem>>, %arg8: memref<16x512xf32, #tpu.memory_space<vmem>>, %arg9: memref<16x512xf32, #tpu.memory_space<vmem>>, %arg10: memref<16x512xf32, #tpu.memory_space<vmem>>, %arg11: memref<16x512xf32, #tpu.memory_space<vmem>>, %arg12: memref<16x512xf32, #tpu.memory_space<vmem>>, %arg13: memref<16x512xf32, #tpu.memory_space<vmem>>, %arg14: memref<16x16x128xf32, #tpu.memory_space<vmem>>) attributes {dimension_semantics = [#tpu.dimension_semantics<parallel>, #tpu.dimension_semantics<arbitrary>], iteration_bounds = array<i64: 2, 1>, scalar_prefetch = 0 : i64, scratch_operands = 8 : i64, tpu.core_type = #tpu.core_type<tc>, window_params = [{transform_indices = @transform_0, window_bounds = array<i64: 16, 512>}, {transform_indices = @transform_1, window_bounds = array<i64: 16, 512>}, {pipeline_mode = #tpu.pipeline_mode<synchronous>, transform_indices = @transform_2, window_bounds = array<i64: 16, 16, 128>}, {transform_indices = @transform_3, window_bounds = array<i64: 1, 16, 8>}, {transform_indices = @transform_4, window_bounds = array<i64: 1, 16, 16>}]} {
    %c1_i32 = arith.constant 1 : i32
    %0 = arith.muli %arg0, %c1_i32 : i32
    %1 = arith.addi %0, %arg1 : i32
    %c0_i32 = arith.constant 0 : i32
    %2 = arith.cmpi eq, %arg1, %c0_i32 : i32
    %3 = arith.extui %2 : i1 to i32
    %c0_i32_0 = arith.constant 0 : i32
    %4 = arith.cmpi ne, %3, %c0_i32_0 : i32
    scf.if %4 {
      %cst_321 = arith.constant 0.000000e+00 : f32
      %557 = vector.broadcast %cst_321 : f32 to vector<16x512xf32>
      %c0_322 = arith.constant 0 : index
      %c0_323 = arith.constant 0 : index
      %558 = vector.load %arg7[%c0_322, %c0_323] : memref<16x512xf32, #tpu.memory_space<vmem>>, vector<16x512xf32>
      tpu.vector_store %arg7[%c0_322, %c0_323], %557 {strides = array<i32>} : memref<16x512xf32, #tpu.memory_space<vmem>>, vector<16x512xf32>,
      %c0_324 = arith.constant 0 : index
      %c0_325 = arith.constant 0 : index
      %559 = vector.load %arg8[%c0_324, %c0_325] : memref<16x512xf32, #tpu.memory_space<vmem>>, vector<16x512xf32>
      tpu.vector_store %arg8[%c0_324, %c0_325], %557 {strides = array<i32>} : memref<16x512xf32, #tpu.memory_space<vmem>>, vector<16x512xf32>,
      %c0_326 = arith.constant 0 : index
      %c0_327 = arith.constant 0 : index
      %560 = vector.load %arg9[%c0_326, %c0_327] : memref<16x512xf32, #tpu.memory_space<vmem>>, vector<16x512xf32>
      tpu.vector_store %arg9[%c0_326, %c0_327], %557 {strides = array<i32>} : memref<16x512xf32, #tpu.memory_space<vmem>>, vector<16x512xf32>,
      %c0_328 = arith.constant 0 : index
      %c0_329 = arith.constant 0 : index
      %561 = vector.load %arg10[%c0_328, %c0_329] : memref<16x512xf32, #tpu.memory_space<vmem>>, vector<16x512xf32>
      tpu.vector_store %arg10[%c0_328, %c0_329], %557 {strides = array<i32>} : memref<16x512xf32, #tpu.memory_space<vmem>>, vector<16x512xf32>,
      %c0_330 = arith.constant 0 : index
      %c0_331 = arith.constant 0 : index
      %562 = vector.load %arg11[%c0_330, %c0_331] : memref<16x512xf32, #tpu.memory_space<vmem>>, vector<16x512xf32>
      tpu.vector_store %arg11[%c0_330, %c0_331], %557 {strides = array<i32>} : memref<16x512xf32, #tpu.memory_space<vmem>>, vector<16x512xf32>,
      %cst_332 = arith.constant -1.000000e+30 : f32
      %563 = vector.broadcast %cst_332 : f32 to vector<16x512xf32>
      %c0_333 = arith.constant 0 : index
      %c0_334 = arith.constant 0 : index
      %564 = vector.load %arg12[%c0_333, %c0_334] : memref<16x512xf32, #tpu.memory_space<vmem>>, vector<16x512xf32>
      tpu.vector_store %arg12[%c0_333, %c0_334], %563 {strides = array<i32>} : memref<16x512xf32, #tpu.memory_space<vmem>>, vector<16x512xf32>,
      %cst_335 = arith.constant 1.000000e+30 : f32
      %565 = vector.broadcast %cst_335 : f32 to vector<16x512xf32>
      %c0_336 = arith.constant 0 : index
      %c0_337 = arith.constant 0 : index
      %566 = vector.load %arg13[%c0_336, %c0_337] : memref<16x512xf32, #tpu.memory_space<vmem>>, vector<16x512xf32>
      tpu.vector_store %arg13[%c0_336, %c0_337], %565 {strides = array<i32>} : memref<16x512xf32, #tpu.memory_space<vmem>>, vector<16x512xf32>,
      %cst_338 = arith.constant 1.000000e+30 : f32
      %567 = vector.broadcast %cst_338 : f32 to vector<16x16x128xf32>
      %c0_339 = arith.constant 0 : index
      %c0_340 = arith.constant 0 : index
      %c0_341 = arith.constant 0 : index
      %568 = vector.load %arg14[%c0_339, %c0_340, %c0_341] : memref<16x16x128xf32, #tpu.memory_space<vmem>>, vector<16x16x128xf32>
      tpu.vector_store %arg14[%c0_339, %c0_340, %c0_341], %567 {strides = array<i32>} : memref<16x16x128xf32, #tpu.memory_space<vmem>>, vector<16x16x128xf32>,
    } else {
    }
    %c0 = arith.constant 0 : index
    %c0_1 = arith.constant 0 : index
    %5 = vector.load %arg2[%c0, %c0_1] : memref<16x512xf32, #tpu.memory_space<vmem>>, vector<16x512xf32>
    %c0_2 = arith.constant 0 : index
    %c0_3 = arith.constant 0 : index
    %6 = vector.load %arg3[%c0_2, %c0_3] : memref<16x512xf32, #tpu.memory_space<vmem>>, vector<16x512xf32>
    %cst = arith.constant 0.00999999977 : f32
    %7 = vector.broadcast %cst : f32 to vector<16x512xf32>
    %8 = arith.cmpf oge, %5, %7 : vector<16x512xf32>
    %cst_4 = arith.constant 0.00999999977 : f32
    %9 = vector.broadcast %cst_4 : f32 to vector<16x512xf32>
    %10 = arith.cmpf oge, %6, %9 : vector<16x512xf32>
    %11 = arith.andi %8, %10 : vector<16x512xi1>
    %12 = arith.extui %11 : vector<16x512xi1> to vector<16x512xi32>
    %13 = arith.sitofp %12 : vector<16x512xi32> to vector<16x512xf32>
    %cst_5 = arith.constant 0.00999999977 : f32
    %14 = vector.broadcast %cst_5 : f32 to vector<16x512xf32>
    %15 = arith.addf %5, %14 : vector<16x512xf32>
    %cst_6 = arith.constant 1.000000e+00 : f32
    %16 = vector.broadcast %cst_6 : f32 to vector<16x512xf32>
    %17 = arith.select %11, %15, %16 : vector<16x512xi1>, vector<16x512xf32>
    %cst_7 = arith.constant 0.00999999977 : f32
    %18 = vector.broadcast %cst_7 : f32 to vector<16x512xf32>
    %19 = arith.addf %6, %18 : vector<16x512xf32>
    %cst_8 = arith.constant 1.000000e+00 : f32
    %20 = vector.broadcast %cst_8 : f32 to vector<16x512xf32>
    %21 = arith.select %11, %19, %20 : vector<16x512xi1>, vector<16x512xf32>
    %22 = arith.divf %17, %21 : vector<16x512xf32>
    %23 = math.log %22 : vector<16x512xf32>
    %c0_9 = arith.constant 0 : index
    %c0_10 = arith.constant 0 : index
    %24 = vector.load %arg7[%c0_9, %c0_10] : memref<16x512xf32, #tpu.memory_space<vmem>>, vector<16x512xf32>
    %25 = arith.addf %24, %23 : vector<16x512xf32>
    %c0_11 = arith.constant 0 : index
    %c0_12 = arith.constant 0 : index
    %26 = vector.load %arg7[%c0_11, %c0_12] : memref<16x512xf32, #tpu.memory_space<vmem>>, vector<16x512xf32>
    tpu.vector_store %arg7[%c0_11, %c0_12], %25 {strides = array<i32>} : memref<16x512xf32, #tpu.memory_space<vmem>>, vector<16x512xf32>,
    %c0_13 = arith.constant 0 : index
    %c0_14 = arith.constant 0 : index
    %27 = vector.load %arg8[%c0_13, %c0_14] : memref<16x512xf32, #tpu.memory_space<vmem>>, vector<16x512xf32>
    %28 = arith.mulf %23, %23 : vector<16x512xf32>
    %29 = arith.addf %27, %28 : vector<16x512xf32>
    %c0_15 = arith.constant 0 : index
    %c0_16 = arith.constant 0 : index
    %30 = vector.load %arg8[%c0_15, %c0_16] : memref<16x512xf32, #tpu.memory_space<vmem>>, vector<16x512xf32>
    tpu.vector_store %arg8[%c0_15, %c0_16], %29 {strides = array<i32>} : memref<16x512xf32, #tpu.memory_space<vmem>>, vector<16x512xf32>,
    %c0_17 = arith.constant 0 : index
    %c0_18 = arith.constant 0 : index
    %31 = vector.load %arg9[%c0_17, %c0_18] : memref<16x512xf32, #tpu.memory_space<vmem>>, vector<16x512xf32>
    %32 = arith.addf %31, %13 : vector<16x512xf32>
    %c0_19 = arith.constant 0 : index
    %c0_20 = arith.constant 0 : index
    %33 = vector.load %arg9[%c0_19, %c0_20] : memref<16x512xf32, #tpu.memory_space<vmem>>, vector<16x512xf32>
    tpu.vector_store %arg9[%c0_19, %c0_20], %32 {strides = array<i32>} : memref<16x512xf32, #tpu.memory_space<vmem>>, vector<16x512xf32>,
    %cst_21 = arith.constant 0.00999999977 : f32
    %34 = vector.broadcast %cst_21 : f32 to vector<16x512xf32>
    %35 = arith.cmpf oge, %6, %34 : vector<16x512xf32>
    %36 = arith.extui %35 : vector<16x512xi1> to vector<16x512xi32>
    %37 = arith.sitofp %36 : vector<16x512xi32> to vector<16x512xf32>
    %c0_22 = arith.constant 0 : index
    %c0_23 = arith.constant 0 : index
    %38 = vector.load %arg11[%c0_22, %c0_23] : memref<16x512xf32, #tpu.memory_space<vmem>>, vector<16x512xf32>
    %39 = arith.addf %38, %37 : vector<16x512xf32>
    %c0_24 = arith.constant 0 : index
    %c0_25 = arith.constant 0 : index
    %40 = vector.load %arg11[%c0_24, %c0_25] : memref<16x512xf32, #tpu.memory_space<vmem>>, vector<16x512xf32>
    tpu.vector_store %arg11[%c0_24, %c0_25], %39 {strides = array<i32>} : memref<16x512xf32, #tpu.memory_space<vmem>>, vector<16x512xf32>,
    %cst_26 = arith.constant 9.99999984E+17 : f32
    %41 = vector.broadcast %cst_26 : f32 to vector<16x512xf32>
    %42 = arith.select %35, %6, %41 : vector<16x512xi1>, vector<16x512xf32>
    %43 = vector.extract_strided_slice %42 {offsets = [0, 0], sizes = [16, 128], strides = [1, 1]} : vector<16x512xf32> to vector<16x128xf32>
    %44 = vector.extract_strided_slice %42 {offsets = [0, 128], sizes = [16, 128], strides = [1, 1]} : vector<16x512xf32> to vector<16x128xf32>
    %cst_27 = arith.constant 1.000000e+30 : f32
    %45 = vector.broadcast %cst_27 : f32 to vector<16x128xf32>
    %cst_28 = arith.constant 1.000000e+30 : f32
    %46 = vector.broadcast %cst_28 : f32 to vector<16x128xf32>
    %c0_29 = arith.constant 0 : index
    %c0_30 = arith.constant 0 : index
    %c0_31 = arith.constant 0 : index
    %47 = vector.load %arg4[%c0_29, %c0_30, %c0_31] : memref<16x16x128xf32, #tpu.memory_space<vmem>>, vector<1x16x128xf32>
    %48 = vector.shape_cast %47 : vector<1x16x128xf32> to vector<16x128xf32>
    %49 = arith.subf %48, %43 : vector<16x128xf32>
    %50 = arith.mulf %49, %49 : vector<16x128xf32>
    %51 = arith.minimumf %45, %50 : vector<16x128xf32>
    %52 = arith.subf %48, %44 : vector<16x128xf32>
    %53 = arith.mulf %52, %52 : vector<16x128xf32>
    %54 = arith.minimumf %46, %53 : vector<16x128xf32>
    %55 = arith.minimumf %50, %53 : vector<16x128xf32>
    %c0_32 = arith.constant 0 : index
    %c0_33 = arith.constant 0 : index
    %c0_34 = arith.constant 0 : index
    %56 = vector.load %arg14[%c0_32, %c0_33, %c0_34] : memref<16x16x128xf32, #tpu.memory_space<vmem>>, vector<1x16x128xf32>
    %57 = vector.shape_cast %56 : vector<1x16x128xf32> to vector<16x128xf32>
    %58 = arith.minimumf %57, %55 : vector<16x128xf32>
    %c0_35 = arith.constant 0 : index
    %c0_36 = arith.constant 0 : index
    %c0_37 = arith.constant 0 : index
    %59 = vector.load %arg14[%c0_35, %c0_36, %c0_37] : memref<16x16x128xf32, #tpu.memory_space<vmem>>, vector<1x16x128xf32>
    %60 = vector.shape_cast %59 : vector<1x16x128xf32> to vector<16x128xf32>
    %61 = vector.shape_cast %58 : vector<16x128xf32> to vector<1x16x128xf32>
    tpu.vector_store %arg14[%c0_35, %c0_36, %c0_37], %61 {strides = array<i32>} : memref<16x16x128xf32, #tpu.memory_space<vmem>>, vector<1x16x128xf32>,
    %c1 = arith.constant 1 : index
    %c0_38 = arith.constant 0 : index
    %c0_39 = arith.constant 0 : index
    %62 = vector.load %arg4[%c1, %c0_38, %c0_39] : memref<16x16x128xf32, #tpu.memory_space<vmem>>, vector<1x16x128xf32>
    %63 = vector.shape_cast %62 : vector<1x16x128xf32> to vector<16x128xf32>
    %64 = arith.subf %63, %43 : vector<16x128xf32>
    %65 = arith.mulf %64, %64 : vector<16x128xf32>
    %66 = arith.minimumf %51, %65 : vector<16x128xf32>
    %67 = arith.subf %63, %44 : vector<16x128xf32>
    %68 = arith.mulf %67, %67 : vector<16x128xf32>
    %69 = arith.minimumf %54, %68 : vector<16x128xf32>
    %70 = arith.minimumf %65, %68 : vector<16x128xf32>
    %c1_40 = arith.constant 1 : index
    %c0_41 = arith.constant 0 : index
    %c0_42 = arith.constant 0 : index
    %71 = vector.load %arg14[%c1_40, %c0_41, %c0_42] : memref<16x16x128xf32, #tpu.memory_space<vmem>>, vector<1x16x128xf32>
    %72 = vector.shape_cast %71 : vector<1x16x128xf32> to vector<16x128xf32>
    %73 = arith.minimumf %72, %70 : vector<16x128xf32>
    %c1_43 = arith.constant 1 : index
    %c0_44 = arith.constant 0 : index
    %c0_45 = arith.constant 0 : index
    %74 = vector.load %arg14[%c1_43, %c0_44, %c0_45] : memref<16x16x128xf32, #tpu.memory_space<vmem>>, vector<1x16x128xf32>
    %75 = vector.shape_cast %74 : vector<1x16x128xf32> to vector<16x128xf32>
    %76 = vector.shape_cast %73 : vector<16x128xf32> to vector<1x16x128xf32>
    tpu.vector_store %arg14[%c1_43, %c0_44, %c0_45], %76 {strides = array<i32>} : memref<16x16x128xf32, #tpu.memory_space<vmem>>, vector<1x16x128xf32>,
    %c2 = arith.constant 2 : index
    %c0_46 = arith.constant 0 : index
    %c0_47 = arith.constant 0 : index
    %77 = vector.load %arg4[%c2, %c0_46, %c0_47] : memref<16x16x128xf32, #tpu.memory_space<vmem>>, vector<1x16x128xf32>
    %78 = vector.shape_cast %77 : vector<1x16x128xf32> to vector<16x128xf32>
    %79 = arith.subf %78, %43 : vector<16x128xf32>
    %80 = arith.mulf %79, %79 : vector<16x128xf32>
    %81 = arith.minimumf %66, %80 : vector<16x128xf32>
    %82 = arith.subf %78, %44 : vector<16x128xf32>
    %83 = arith.mulf %82, %82 : vector<16x128xf32>
    %84 = arith.minimumf %69, %83 : vector<16x128xf32>
    %85 = arith.minimumf %80, %83 : vector<16x128xf32>
    %c2_48 = arith.constant 2 : index
    %c0_49 = arith.constant 0 : index
    %c0_50 = arith.constant 0 : index
    %86 = vector.load %arg14[%c2_48, %c0_49, %c0_50] : memref<16x16x128xf32, #tpu.memory_space<vmem>>, vector<1x16x128xf32>
    %87 = vector.shape_cast %86 : vector<1x16x128xf32> to vector<16x128xf32>
    %88 = arith.minimumf %87, %85 : vector<16x128xf32>
    %c2_51 = arith.constant 2 : index
    %c0_52 = arith.constant 0 : index
    %c0_53 = arith.constant 0 : index
    %89 = vector.load %arg14[%c2_51, %c0_52, %c0_53] : memref<16x16x128xf32, #tpu.memory_space<vmem>>, vector<1x16x128xf32>
    %90 = vector.shape_cast %89 : vector<1x16x128xf32> to vector<16x128xf32>
    %91 = vector.shape_cast %88 : vector<16x128xf32> to vector<1x16x128xf32>
    tpu.vector_store %arg14[%c2_51, %c0_52, %c0_53], %91 {strides = array<i32>} : memref<16x16x128xf32, #tpu.memory_space<vmem>>, vector<1x16x128xf32>,
    %c3 = arith.constant 3 : index
    %c0_54 = arith.constant 0 : index
    %c0_55 = arith.constant 0 : index
    %92 = vector.load %arg4[%c3, %c0_54, %c0_55] : memref<16x16x128xf32, #tpu.memory_space<vmem>>, vector<1x16x128xf32>
    %93 = vector.shape_cast %92 : vector<1x16x128xf32> to vector<16x128xf32>
    %94 = arith.subf %93, %43 : vector<16x128xf32>
    %95 = arith.mulf %94, %94 : vector<16x128xf32>
    %96 = arith.minimumf %81, %95 : vector<16x128xf32>
    %97 = arith.subf %93, %44 : vector<16x128xf32>
    %98 = arith.mulf %97, %97 : vector<16x128xf32>
    %99 = arith.minimumf %84, %98 : vector<16x128xf32>
    %100 = arith.minimumf %95, %98 : vector<16x128xf32>
    %c3_56 = arith.constant 3 : index
    %c0_57 = arith.constant 0 : index
    %c0_58 = arith.constant 0 : index
    %101 = vector.load %arg14[%c3_56, %c0_57, %c0_58] : memref<16x16x128xf32, #tpu.memory_space<vmem>>, vector<1x16x128xf32>
    %102 = vector.shape_cast %101 : vector<1x16x128xf32> to vector<16x128xf32>
    %103 = arith.minimumf %102, %100 : vector<16x128xf32>
    %c3_59 = arith.constant 3 : index
    %c0_60 = arith.constant 0 : index
    %c0_61 = arith.constant 0 : index
    %104 = vector.load %arg14[%c3_59, %c0_60, %c0_61] : memref<16x16x128xf32, #tpu.memory_space<vmem>>, vector<1x16x128xf32>
    %105 = vector.shape_cast %104 : vector<1x16x128xf32> to vector<16x128xf32>
    %106 = vector.shape_cast %103 : vector<16x128xf32> to vector<1x16x128xf32>
    tpu.vector_store %arg14[%c3_59, %c0_60, %c0_61], %106 {strides = array<i32>} : memref<16x16x128xf32, #tpu.memory_space<vmem>>, vector<1x16x128xf32>,
    %c4 = arith.constant 4 : index
    %c0_62 = arith.constant 0 : index
    %c0_63 = arith.constant 0 : index
    %107 = vector.load %arg4[%c4, %c0_62, %c0_63] : memref<16x16x128xf32, #tpu.memory_space<vmem>>, vector<1x16x128xf32>
    %108 = vector.shape_cast %107 : vector<1x16x128xf32> to vector<16x128xf32>
    %109 = arith.subf %108, %43 : vector<16x128xf32>
    %110 = arith.mulf %109, %109 : vector<16x128xf32>
    %111 = arith.minimumf %96, %110 : vector<16x128xf32>
    %112 = arith.subf %108, %44 : vector<16x128xf32>
    %113 = arith.mulf %112, %112 : vector<16x128xf32>
    %114 = arith.minimumf %99, %113 : vector<16x128xf32>
    %115 = arith.minimumf %110, %113 : vector<16x128xf32>
    %c4_64 = arith.constant 4 : index
    %c0_65 = arith.constant 0 : index
    %c0_66 = arith.constant 0 : index
    %116 = vector.load %arg14[%c4_64, %c0_65, %c0_66] : memref<16x16x128xf32, #tpu.memory_space<vmem>>, vector<1x16x128xf32>
    %117 = vector.shape_cast %116 : vector<1x16x128xf32> to vector<16x128xf32>
    %118 = arith.minimumf %117, %115 : vector<16x128xf32>
    %c4_67 = arith.constant 4 : index
    %c0_68 = arith.constant 0 : index
    %c0_69 = arith.constant 0 : index
    %119 = vector.load %arg14[%c4_67, %c0_68, %c0_69] : memref<16x16x128xf32, #tpu.memory_space<vmem>>, vector<1x16x128xf32>
    %120 = vector.shape_cast %119 : vector<1x16x128xf32> to vector<16x128xf32>
    %121 = vector.shape_cast %118 : vector<16x128xf32> to vector<1x16x128xf32>
    tpu.vector_store %arg14[%c4_67, %c0_68, %c0_69], %121 {strides = array<i32>} : memref<16x16x128xf32, #tpu.memory_space<vmem>>, vector<1x16x128xf32>,
    %c5 = arith.constant 5 : index
    %c0_70 = arith.constant 0 : index
    %c0_71 = arith.constant 0 : index
    %122 = vector.load %arg4[%c5, %c0_70, %c0_71] : memref<16x16x128xf32, #tpu.memory_space<vmem>>, vector<1x16x128xf32>
    %123 = vector.shape_cast %122 : vector<1x16x128xf32> to vector<16x128xf32>
    %124 = arith.subf %123, %43 : vector<16x128xf32>
    %125 = arith.mulf %124, %124 : vector<16x128xf32>
    %126 = arith.minimumf %111, %125 : vector<16x128xf32>
    %127 = arith.subf %123, %44 : vector<16x128xf32>
    %128 = arith.mulf %127, %127 : vector<16x128xf32>
    %129 = arith.minimumf %114, %128 : vector<16x128xf32>
    %130 = arith.minimumf %125, %128 : vector<16x128xf32>
    %c5_72 = arith.constant 5 : index
    %c0_73 = arith.constant 0 : index
    %c0_74 = arith.constant 0 : index
    %131 = vector.load %arg14[%c5_72, %c0_73, %c0_74] : memref<16x16x128xf32, #tpu.memory_space<vmem>>, vector<1x16x128xf32>
    %132 = vector.shape_cast %131 : vector<1x16x128xf32> to vector<16x128xf32>
    %133 = arith.minimumf %132, %130 : vector<16x128xf32>
    %c5_75 = arith.constant 5 : index
    %c0_76 = arith.constant 0 : index
    %c0_77 = arith.constant 0 : index
    %134 = vector.load %arg14[%c5_75, %c0_76, %c0_77] : memref<16x16x128xf32, #tpu.memory_space<vmem>>, vector<1x16x128xf32>
    %135 = vector.shape_cast %134 : vector<1x16x128xf32> to vector<16x128xf32>
    %136 = vector.shape_cast %133 : vector<16x128xf32> to vector<1x16x128xf32>
    tpu.vector_store %arg14[%c5_75, %c0_76, %c0_77], %136 {strides = array<i32>} : memref<16x16x128xf32, #tpu.memory_space<vmem>>, vector<1x16x128xf32>,
    %c6 = arith.constant 6 : index
    %c0_78 = arith.constant 0 : index
    %c0_79 = arith.constant 0 : index
    %137 = vector.load %arg4[%c6, %c0_78, %c0_79] : memref<16x16x128xf32, #tpu.memory_space<vmem>>, vector<1x16x128xf32>
    %138 = vector.shape_cast %137 : vector<1x16x128xf32> to vector<16x128xf32>
    %139 = arith.subf %138, %43 : vector<16x128xf32>
    %140 = arith.mulf %139, %139 : vector<16x128xf32>
    %141 = arith.minimumf %126, %140 : vector<16x128xf32>
    %142 = arith.subf %138, %44 : vector<16x128xf32>
    %143 = arith.mulf %142, %142 : vector<16x128xf32>
    %144 = arith.minimumf %129, %143 : vector<16x128xf32>
    %145 = arith.minimumf %140, %143 : vector<16x128xf32>
    %c6_80 = arith.constant 6 : index
    %c0_81 = arith.constant 0 : index
    %c0_82 = arith.constant 0 : index
    %146 = vector.load %arg14[%c6_80, %c0_81, %c0_82] : memref<16x16x128xf32, #tpu.memory_space<vmem>>, vector<1x16x128xf32>
    %147 = vector.shape_cast %146 : vector<1x16x128xf32> to vector<16x128xf32>
    %148 = arith.minimumf %147, %145 : vector<16x128xf32>
    %c6_83 = arith.constant 6 : index
    %c0_84 = arith.constant 0 : index
    %c0_85 = arith.constant 0 : index
    %149 = vector.load %arg14[%c6_83, %c0_84, %c0_85] : memref<16x16x128xf32, #tpu.memory_space<vmem>>, vector<1x16x128xf32>
    %150 = vector.shape_cast %149 : vector<1x16x128xf32> to vector<16x128xf32>
    %151 = vector.shape_cast %148 : vector<16x128xf32> to vector<1x16x128xf32>
    tpu.vector_store %arg14[%c6_83, %c0_84, %c0_85], %151 {strides = array<i32>} : memref<16x16x128xf32, #tpu.memory_space<vmem>>, vector<1x16x128xf32>,
    %c7 = arith.constant 7 : index
    %c0_86 = arith.constant 0 : index
    %c0_87 = arith.constant 0 : index
    %152 = vector.load %arg4[%c7, %c0_86, %c0_87] : memref<16x16x128xf32, #tpu.memory_space<vmem>>, vector<1x16x128xf32>
    %153 = vector.shape_cast %152 : vector<1x16x128xf32> to vector<16x128xf32>
    %154 = arith.subf %153, %43 : vector<16x128xf32>
    %155 = arith.mulf %154, %154 : vector<16x128xf32>
    %156 = arith.minimumf %141, %155 : vector<16x128xf32>
    %157 = arith.subf %153, %44 : vector<16x128xf32>
    %158 = arith.mulf %157, %157 : vector<16x128xf32>
    %159 = arith.minimumf %144, %158 : vector<16x128xf32>
    %160 = arith.minimumf %155, %158 : vector<16x128xf32>
    %c7_88 = arith.constant 7 : index
    %c0_89 = arith.constant 0 : index
    %c0_90 = arith.constant 0 : index
    %161 = vector.load %arg14[%c7_88, %c0_89, %c0_90] : memref<16x16x128xf32, #tpu.memory_space<vmem>>, vector<1x16x128xf32>
    %162 = vector.shape_cast %161 : vector<1x16x128xf32> to vector<16x128xf32>
    %163 = arith.minimumf %162, %160 : vector<16x128xf32>
    %c7_91 = arith.constant 7 : index
    %c0_92 = arith.constant 0 : index
    %c0_93 = arith.constant 0 : index
    %164 = vector.load %arg14[%c7_91, %c0_92, %c0_93] : memref<16x16x128xf32, #tpu.memory_space<vmem>>, vector<1x16x128xf32>
    %165 = vector.shape_cast %164 : vector<1x16x128xf32> to vector<16x128xf32>
    %166 = vector.shape_cast %163 : vector<16x128xf32> to vector<1x16x128xf32>
    tpu.vector_store %arg14[%c7_91, %c0_92, %c0_93], %166 {strides = array<i32>} : memref<16x16x128xf32, #tpu.memory_space<vmem>>, vector<1x16x128xf32>,
    %c8 = arith.constant 8 : index
    %c0_94 = arith.constant 0 : index
    %c0_95 = arith.constant 0 : index
    %167 = vector.load %arg4[%c8, %c0_94, %c0_95] : memref<16x16x128xf32, #tpu.memory_space<vmem>>, vector<1x16x128xf32>
    %168 = vector.shape_cast %167 : vector<1x16x128xf32> to vector<16x128xf32>
    %169 = arith.subf %168, %43 : vector<16x128xf32>
    %170 = arith.mulf %169, %169 : vector<16x128xf32>
    %171 = arith.minimumf %156, %170 : vector<16x128xf32>
    %172 = arith.subf %168, %44 : vector<16x128xf32>
    %173 = arith.mulf %172, %172 : vector<16x128xf32>
    %174 = arith.minimumf %159, %173 : vector<16x128xf32>
    %175 = arith.minimumf %170, %173 : vector<16x128xf32>
    %c8_96 = arith.constant 8 : index
    %c0_97 = arith.constant 0 : index
    %c0_98 = arith.constant 0 : index
    %176 = vector.load %arg14[%c8_96, %c0_97, %c0_98] : memref<16x16x128xf32, #tpu.memory_space<vmem>>, vector<1x16x128xf32>
    %177 = vector.shape_cast %176 : vector<1x16x128xf32> to vector<16x128xf32>
    %178 = arith.minimumf %177, %175 : vector<16x128xf32>
    %c8_99 = arith.constant 8 : index
    %c0_100 = arith.constant 0 : index
    %c0_101 = arith.constant 0 : index
    %179 = vector.load %arg14[%c8_99, %c0_100, %c0_101] : memref<16x16x128xf32, #tpu.memory_space<vmem>>, vector<1x16x128xf32>
    %180 = vector.shape_cast %179 : vector<1x16x128xf32> to vector<16x128xf32>
    %181 = vector.shape_cast %178 : vector<16x128xf32> to vector<1x16x128xf32>
    tpu.vector_store %arg14[%c8_99, %c0_100, %c0_101], %181 {strides = array<i32>} : memref<16x16x128xf32, #tpu.memory_space<vmem>>, vector<1x16x128xf32>,
    %c9 = arith.constant 9 : index
    %c0_102 = arith.constant 0 : index
    %c0_103 = arith.constant 0 : index
    %182 = vector.load %arg4[%c9, %c0_102, %c0_103] : memref<16x16x128xf32, #tpu.memory_space<vmem>>, vector<1x16x128xf32>
    %183 = vector.shape_cast %182 : vector<1x16x128xf32> to vector<16x128xf32>
    %184 = arith.subf %183, %43 : vector<16x128xf32>
    %185 = arith.mulf %184, %184 : vector<16x128xf32>
    %186 = arith.minimumf %171, %185 : vector<16x128xf32>
    %187 = arith.subf %183, %44 : vector<16x128xf32>
    %188 = arith.mulf %187, %187 : vector<16x128xf32>
    %189 = arith.minimumf %174, %188 : vector<16x128xf32>
    %190 = arith.minimumf %185, %188 : vector<16x128xf32>
    %c9_104 = arith.constant 9 : index
    %c0_105 = arith.constant 0 : index
    %c0_106 = arith.constant 0 : index
    %191 = vector.load %arg14[%c9_104, %c0_105, %c0_106] : memref<16x16x128xf32, #tpu.memory_space<vmem>>, vector<1x16x128xf32>
    %192 = vector.shape_cast %191 : vector<1x16x128xf32> to vector<16x128xf32>
    %193 = arith.minimumf %192, %190 : vector<16x128xf32>
    %c9_107 = arith.constant 9 : index
    %c0_108 = arith.constant 0 : index
    %c0_109 = arith.constant 0 : index
    %194 = vector.load %arg14[%c9_107, %c0_108, %c0_109] : memref<16x16x128xf32, #tpu.memory_space<vmem>>, vector<1x16x128xf32>
    %195 = vector.shape_cast %194 : vector<1x16x128xf32> to vector<16x128xf32>
    %196 = vector.shape_cast %193 : vector<16x128xf32> to vector<1x16x128xf32>
    tpu.vector_store %arg14[%c9_107, %c0_108, %c0_109], %196 {strides = array<i32>} : memref<16x16x128xf32, #tpu.memory_space<vmem>>, vector<1x16x128xf32>,
    %c10 = arith.constant 10 : index
    %c0_110 = arith.constant 0 : index
    %c0_111 = arith.constant 0 : index
    %197 = vector.load %arg4[%c10, %c0_110, %c0_111] : memref<16x16x128xf32, #tpu.memory_space<vmem>>, vector<1x16x128xf32>
    %198 = vector.shape_cast %197 : vector<1x16x128xf32> to vector<16x128xf32>
    %199 = arith.subf %198, %43 : vector<16x128xf32>
    %200 = arith.mulf %199, %199 : vector<16x128xf32>
    %201 = arith.minimumf %186, %200 : vector<16x128xf32>
    %202 = arith.subf %198, %44 : vector<16x128xf32>
    %203 = arith.mulf %202, %202 : vector<16x128xf32>
    %204 = arith.minimumf %189, %203 : vector<16x128xf32>
    %205 = arith.minimumf %200, %203 : vector<16x128xf32>
    %c10_112 = arith.constant 10 : index
    %c0_113 = arith.constant 0 : index
    %c0_114 = arith.constant 0 : index
    %206 = vector.load %arg14[%c10_112, %c0_113, %c0_114] : memref<16x16x128xf32, #tpu.memory_space<vmem>>, vector<1x16x128xf32>
    %207 = vector.shape_cast %206 : vector<1x16x128xf32> to vector<16x128xf32>
    %208 = arith.minimumf %207, %205 : vector<16x128xf32>
    %c10_115 = arith.constant 10 : index
    %c0_116 = arith.constant 0 : index
    %c0_117 = arith.constant 0 : index
    %209 = vector.load %arg14[%c10_115, %c0_116, %c0_117] : memref<16x16x128xf32, #tpu.memory_space<vmem>>, vector<1x16x128xf32>
    %210 = vector.shape_cast %209 : vector<1x16x128xf32> to vector<16x128xf32>
    %211 = vector.shape_cast %208 : vector<16x128xf32> to vector<1x16x128xf32>
    tpu.vector_store %arg14[%c10_115, %c0_116, %c0_117], %211 {strides = array<i32>} : memref<16x16x128xf32, #tpu.memory_space<vmem>>, vector<1x16x128xf32>,
    %c11 = arith.constant 11 : index
    %c0_118 = arith.constant 0 : index
    %c0_119 = arith.constant 0 : index
    %212 = vector.load %arg4[%c11, %c0_118, %c0_119] : memref<16x16x128xf32, #tpu.memory_space<vmem>>, vector<1x16x128xf32>
    %213 = vector.shape_cast %212 : vector<1x16x128xf32> to vector<16x128xf32>
    %214 = arith.subf %213, %43 : vector<16x128xf32>
    %215 = arith.mulf %214, %214 : vector<16x128xf32>
    %216 = arith.minimumf %201, %215 : vector<16x128xf32>
    %217 = arith.subf %213, %44 : vector<16x128xf32>
    %218 = arith.mulf %217, %217 : vector<16x128xf32>
    %219 = arith.minimumf %204, %218 : vector<16x128xf32>
    %220 = arith.minimumf %215, %218 : vector<16x128xf32>
    %c11_120 = arith.constant 11 : index
    %c0_121 = arith.constant 0 : index
    %c0_122 = arith.constant 0 : index
    %221 = vector.load %arg14[%c11_120, %c0_121, %c0_122] : memref<16x16x128xf32, #tpu.memory_space<vmem>>, vector<1x16x128xf32>
    %222 = vector.shape_cast %221 : vector<1x16x128xf32> to vector<16x128xf32>
    %223 = arith.minimumf %222, %220 : vector<16x128xf32>
    %c11_123 = arith.constant 11 : index
    %c0_124 = arith.constant 0 : index
    %c0_125 = arith.constant 0 : index
    %224 = vector.load %arg14[%c11_123, %c0_124, %c0_125] : memref<16x16x128xf32, #tpu.memory_space<vmem>>, vector<1x16x128xf32>
    %225 = vector.shape_cast %224 : vector<1x16x128xf32> to vector<16x128xf32>
    %226 = vector.shape_cast %223 : vector<16x128xf32> to vector<1x16x128xf32>
    tpu.vector_store %arg14[%c11_123, %c0_124, %c0_125], %226 {strides = array<i32>} : memref<16x16x128xf32, #tpu.memory_space<vmem>>, vector<1x16x128xf32>,
    %c12 = arith.constant 12 : index
    %c0_126 = arith.constant 0 : index
    %c0_127 = arith.constant 0 : index
    %227 = vector.load %arg4[%c12, %c0_126, %c0_127] : memref<16x16x128xf32, #tpu.memory_space<vmem>>, vector<1x16x128xf32>
    %228 = vector.shape_cast %227 : vector<1x16x128xf32> to vector<16x128xf32>
    %229 = arith.subf %228, %43 : vector<16x128xf32>
    %230 = arith.mulf %229, %229 : vector<16x128xf32>
    %231 = arith.minimumf %216, %230 : vector<16x128xf32>
    %232 = arith.subf %228, %44 : vector<16x128xf32>
    %233 = arith.mulf %232, %232 : vector<16x128xf32>
    %234 = arith.minimumf %219, %233 : vector<16x128xf32>
    %235 = arith.minimumf %230, %233 : vector<16x128xf32>
    %c12_128 = arith.constant 12 : index
    %c0_129 = arith.constant 0 : index
    %c0_130 = arith.constant 0 : index
    %236 = vector.load %arg14[%c12_128, %c0_129, %c0_130] : memref<16x16x128xf32, #tpu.memory_space<vmem>>, vector<1x16x128xf32>
    %237 = vector.shape_cast %236 : vector<1x16x128xf32> to vector<16x128xf32>
    %238 = arith.minimumf %237, %235 : vector<16x128xf32>
    %c12_131 = arith.constant 12 : index
    %c0_132 = arith.constant 0 : index
    %c0_133 = arith.constant 0 : index
    %239 = vector.load %arg14[%c12_131, %c0_132, %c0_133] : memref<16x16x128xf32, #tpu.memory_space<vmem>>, vector<1x16x128xf32>
    %240 = vector.shape_cast %239 : vector<1x16x128xf32> to vector<16x128xf32>
    %241 = vector.shape_cast %238 : vector<16x128xf32> to vector<1x16x128xf32>
    tpu.vector_store %arg14[%c12_131, %c0_132, %c0_133], %241 {strides = array<i32>} : memref<16x16x128xf32, #tpu.memory_space<vmem>>, vector<1x16x128xf32>,
    %c13 = arith.constant 13 : index
    %c0_134 = arith.constant 0 : index
    %c0_135 = arith.constant 0 : index
    %242 = vector.load %arg4[%c13, %c0_134, %c0_135] : memref<16x16x128xf32, #tpu.memory_space<vmem>>, vector<1x16x128xf32>
    %243 = vector.shape_cast %242 : vector<1x16x128xf32> to vector<16x128xf32>
    %244 = arith.subf %243, %43 : vector<16x128xf32>
    %245 = arith.mulf %244, %244 : vector<16x128xf32>
    %246 = arith.minimumf %231, %245 : vector<16x128xf32>
    %247 = arith.subf %243, %44 : vector<16x128xf32>
    %248 = arith.mulf %247, %247 : vector<16x128xf32>
    %249 = arith.minimumf %234, %248 : vector<16x128xf32>
    %250 = arith.minimumf %245, %248 : vector<16x128xf32>
    %c13_136 = arith.constant 13 : index
    %c0_137 = arith.constant 0 : index
    %c0_138 = arith.constant 0 : index
    %251 = vector.load %arg14[%c13_136, %c0_137, %c0_138] : memref<16x16x128xf32, #tpu.memory_space<vmem>>, vector<1x16x128xf32>
    %252 = vector.shape_cast %251 : vector<1x16x128xf32> to vector<16x128xf32>
    %253 = arith.minimumf %252, %250 : vector<16x128xf32>
    %c13_139 = arith.constant 13 : index
    %c0_140 = arith.constant 0 : index
    %c0_141 = arith.constant 0 : index
    %254 = vector.load %arg14[%c13_139, %c0_140, %c0_141] : memref<16x16x128xf32, #tpu.memory_space<vmem>>, vector<1x16x128xf32>
    %255 = vector.shape_cast %254 : vector<1x16x128xf32> to vector<16x128xf32>
    %256 = vector.shape_cast %253 : vector<16x128xf32> to vector<1x16x128xf32>
    tpu.vector_store %arg14[%c13_139, %c0_140, %c0_141], %256 {strides = array<i32>} : memref<16x16x128xf32, #tpu.memory_space<vmem>>, vector<1x16x128xf32>,
    %c14 = arith.constant 14 : index
    %c0_142 = arith.constant 0 : index
    %c0_143 = arith.constant 0 : index
    %257 = vector.load %arg4[%c14, %c0_142, %c0_143] : memref<16x16x128xf32, #tpu.memory_space<vmem>>, vector<1x16x128xf32>
    %258 = vector.shape_cast %257 : vector<1x16x128xf32> to vector<16x128xf32>
    %259 = arith.subf %258, %43 : vector<16x128xf32>
    %260 = arith.mulf %259, %259 : vector<16x128xf32>
    %261 = arith.minimumf %246, %260 : vector<16x128xf32>
    %262 = arith.subf %258, %44 : vector<16x128xf32>
    %263 = arith.mulf %262, %262 : vector<16x128xf32>
    %264 = arith.minimumf %249, %263 : vector<16x128xf32>
    %265 = arith.minimumf %260, %263 : vector<16x128xf32>
    %c14_144 = arith.constant 14 : index
    %c0_145 = arith.constant 0 : index
    %c0_146 = arith.constant 0 : index
    %266 = vector.load %arg14[%c14_144, %c0_145, %c0_146] : memref<16x16x128xf32, #tpu.memory_space<vmem>>, vector<1x16x128xf32>
    %267 = vector.shape_cast %266 : vector<1x16x128xf32> to vector<16x128xf32>
    %268 = arith.minimumf %267, %265 : vector<16x128xf32>
    %c14_147 = arith.constant 14 : index
    %c0_148 = arith.constant 0 : index
    %c0_149 = arith.constant 0 : index
    %269 = vector.load %arg14[%c14_147, %c0_148, %c0_149] : memref<16x16x128xf32, #tpu.memory_space<vmem>>, vector<1x16x128xf32>
    %270 = vector.shape_cast %269 : vector<1x16x128xf32> to vector<16x128xf32>
    %271 = vector.shape_cast %268 : vector<16x128xf32> to vector<1x16x128xf32>
    tpu.vector_store %arg14[%c14_147, %c0_148, %c0_149], %271 {strides = array<i32>} : memref<16x16x128xf32, #tpu.memory_space<vmem>>, vector<1x16x128xf32>,
    %c15 = arith.constant 15 : index
    %c0_150 = arith.constant 0 : index
    %c0_151 = arith.constant 0 : index
    %272 = vector.load %arg4[%c15, %c0_150, %c0_151] : memref<16x16x128xf32, #tpu.memory_space<vmem>>, vector<1x16x128xf32>
    %273 = vector.shape_cast %272 : vector<1x16x128xf32> to vector<16x128xf32>
    %274 = arith.subf %273, %43 : vector<16x128xf32>
    %275 = arith.mulf %274, %274 : vector<16x128xf32>
    %276 = arith.minimumf %261, %275 : vector<16x128xf32>
    %277 = arith.subf %273, %44 : vector<16x128xf32>
    %278 = arith.mulf %277, %277 : vector<16x128xf32>
    %279 = arith.minimumf %264, %278 : vector<16x128xf32>
    %280 = arith.minimumf %275, %278 : vector<16x128xf32>
    %c15_152 = arith.constant 15 : index
    %c0_153 = arith.constant 0 : index
    %c0_154 = arith.constant 0 : index
    %281 = vector.load %arg14[%c15_152, %c0_153, %c0_154] : memref<16x16x128xf32, #tpu.memory_space<vmem>>, vector<1x16x128xf32>
    %282 = vector.shape_cast %281 : vector<1x16x128xf32> to vector<16x128xf32>
    %283 = arith.minimumf %282, %280 : vector<16x128xf32>
    %c15_155 = arith.constant 15 : index
    %c0_156 = arith.constant 0 : index
    %c0_157 = arith.constant 0 : index
    %284 = vector.load %arg14[%c15_155, %c0_156, %c0_157] : memref<16x16x128xf32, #tpu.memory_space<vmem>>, vector<1x16x128xf32>
    %285 = vector.shape_cast %284 : vector<1x16x128xf32> to vector<16x128xf32>
    %286 = vector.shape_cast %283 : vector<16x128xf32> to vector<1x16x128xf32>
    tpu.vector_store %arg14[%c15_155, %c0_156, %c0_157], %286 {strides = array<i32>} : memref<16x16x128xf32, #tpu.memory_space<vmem>>, vector<1x16x128xf32>,
    %c0_158 = arith.constant 0 : index
    %c0_159 = arith.constant 0 : index
    %287 = vector.load %arg10[%c0_158, %c0_159] : memref<16x512xf32, #tpu.memory_space<vmem>>, vector<16x128xf32>
    %288 = vector.extract_strided_slice %37 {offsets = [0, 0], sizes = [16, 128], strides = [1, 1]} : vector<16x512xf32> to vector<16x128xf32>
    %289 = arith.mulf %276, %288 : vector<16x128xf32>
    %290 = arith.addf %287, %289 : vector<16x128xf32>
    %c0_160 = arith.constant 0 : index
    %c0_161 = arith.constant 0 : index
    %291 = vector.load %arg10[%c0_160, %c0_161] : memref<16x512xf32, #tpu.memory_space<vmem>>, vector<16x128xf32>
    tpu.vector_store %arg10[%c0_160, %c0_161], %290 {strides = array<i32>} : memref<16x512xf32, #tpu.memory_space<vmem>>, vector<16x128xf32>,
    %c0_162 = arith.constant 0 : index
    %c128 = arith.constant 128 : index
    %292 = vector.load %arg10[%c0_162, %c128] : memref<16x512xf32, #tpu.memory_space<vmem>>, vector<16x128xf32>
    %293 = vector.extract_strided_slice %37 {offsets = [0, 128], sizes = [16, 128], strides = [1, 1]} : vector<16x512xf32> to vector<16x128xf32>
    %294 = arith.mulf %279, %293 : vector<16x128xf32>
    %295 = arith.addf %292, %294 : vector<16x128xf32>
    %c0_163 = arith.constant 0 : index
    %c128_164 = arith.constant 128 : index
    %296 = vector.load %arg10[%c0_163, %c128_164] : memref<16x512xf32, #tpu.memory_space<vmem>>, vector<16x128xf32>
    tpu.vector_store %arg10[%c0_163, %c128_164], %295 {strides = array<i32>} : memref<16x512xf32, #tpu.memory_space<vmem>>, vector<16x128xf32>,
    %297 = vector.extract_strided_slice %42 {offsets = [0, 256], sizes = [16, 128], strides = [1, 1]} : vector<16x512xf32> to vector<16x128xf32>
    %298 = vector.extract_strided_slice %42 {offsets = [0, 384], sizes = [16, 128], strides = [1, 1]} : vector<16x512xf32> to vector<16x128xf32>
    %cst_165 = arith.constant 1.000000e+30 : f32
    %299 = vector.broadcast %cst_165 : f32 to vector<16x128xf32>
    %cst_166 = arith.constant 1.000000e+30 : f32
    %300 = vector.broadcast %cst_166 : f32 to vector<16x128xf32>
    %c0_167 = arith.constant 0 : index
    %c0_168 = arith.constant 0 : index
    %c0_169 = arith.constant 0 : index
    %301 = vector.load %arg4[%c0_167, %c0_168, %c0_169] : memref<16x16x128xf32, #tpu.memory_space<vmem>>, vector<1x16x128xf32>
    %302 = vector.shape_cast %301 : vector<1x16x128xf32> to vector<16x128xf32>
    %303 = arith.subf %302, %297 : vector<16x128xf32>
    %304 = arith.mulf %303, %303 : vector<16x128xf32>
    %305 = arith.minimumf %299, %304 : vector<16x128xf32>
    %306 = arith.subf %302, %298 : vector<16x128xf32>
    %307 = arith.mulf %306, %306 : vector<16x128xf32>
    %308 = arith.minimumf %300, %307 : vector<16x128xf32>
    %309 = arith.minimumf %304, %307 : vector<16x128xf32>
    %c0_170 = arith.constant 0 : index
    %c0_171 = arith.constant 0 : index
    %c0_172 = arith.constant 0 : index
    %310 = vector.load %arg14[%c0_170, %c0_171, %c0_172] : memref<16x16x128xf32, #tpu.memory_space<vmem>>, vector<1x16x128xf32>
    %311 = vector.shape_cast %310 : vector<1x16x128xf32> to vector<16x128xf32>
    %312 = arith.minimumf %311, %309 : vector<16x128xf32>
    %c0_173 = arith.constant 0 : index
    %c0_174 = arith.constant 0 : index
    %c0_175 = arith.constant 0 : index
    %313 = vector.load %arg14[%c0_173, %c0_174, %c0_175] : memref<16x16x128xf32, #tpu.memory_space<vmem>>, vector<1x16x128xf32>
    %314 = vector.shape_cast %313 : vector<1x16x128xf32> to vector<16x128xf32>
    %315 = vector.shape_cast %312 : vector<16x128xf32> to vector<1x16x128xf32>
    tpu.vector_store %arg14[%c0_173, %c0_174, %c0_175], %315 {strides = array<i32>} : memref<16x16x128xf32, #tpu.memory_space<vmem>>, vector<1x16x128xf32>,
    %c1_176 = arith.constant 1 : index
    %c0_177 = arith.constant 0 : index
    %c0_178 = arith.constant 0 : index
    %316 = vector.load %arg4[%c1_176, %c0_177, %c0_178] : memref<16x16x128xf32, #tpu.memory_space<vmem>>, vector<1x16x128xf32>
    %317 = vector.shape_cast %316 : vector<1x16x128xf32> to vector<16x128xf32>
    %318 = arith.subf %317, %297 : vector<16x128xf32>
    %319 = arith.mulf %318, %318 : vector<16x128xf32>
    %320 = arith.minimumf %305, %319 : vector<16x128xf32>
    %321 = arith.subf %317, %298 : vector<16x128xf32>
    %322 = arith.mulf %321, %321 : vector<16x128xf32>
    %323 = arith.minimumf %308, %322 : vector<16x128xf32>
    %324 = arith.minimumf %319, %322 : vector<16x128xf32>
    %c1_179 = arith.constant 1 : index
    %c0_180 = arith.constant 0 : index
    %c0_181 = arith.constant 0 : index
    %325 = vector.load %arg14[%c1_179, %c0_180, %c0_181] : memref<16x16x128xf32, #tpu.memory_space<vmem>>, vector<1x16x128xf32>
    %326 = vector.shape_cast %325 : vector<1x16x128xf32> to vector<16x128xf32>
    %327 = arith.minimumf %326, %324 : vector<16x128xf32>
    %c1_182 = arith.constant 1 : index
    %c0_183 = arith.constant 0 : index
    %c0_184 = arith.constant 0 : index
    %328 = vector.load %arg14[%c1_182, %c0_183, %c0_184] : memref<16x16x128xf32, #tpu.memory_space<vmem>>, vector<1x16x128xf32>
    %329 = vector.shape_cast %328 : vector<1x16x128xf32> to vector<16x128xf32>
    %330 = vector.shape_cast %327 : vector<16x128xf32> to vector<1x16x128xf32>
    tpu.vector_store %arg14[%c1_182, %c0_183, %c0_184], %330 {strides = array<i32>} : memref<16x16x128xf32, #tpu.memory_space<vmem>>, vector<1x16x128xf32>,
    %c2_185 = arith.constant 2 : index
    %c0_186 = arith.constant 0 : index
    %c0_187 = arith.constant 0 : index
    %331 = vector.load %arg4[%c2_185, %c0_186, %c0_187] : memref<16x16x128xf32, #tpu.memory_space<vmem>>, vector<1x16x128xf32>
    %332 = vector.shape_cast %331 : vector<1x16x128xf32> to vector<16x128xf32>
    %333 = arith.subf %332, %297 : vector<16x128xf32>
    %334 = arith.mulf %333, %333 : vector<16x128xf32>
    %335 = arith.minimumf %320, %334 : vector<16x128xf32>
    %336 = arith.subf %332, %298 : vector<16x128xf32>
    %337 = arith.mulf %336, %336 : vector<16x128xf32>
    %338 = arith.minimumf %323, %337 : vector<16x128xf32>
    %339 = arith.minimumf %334, %337 : vector<16x128xf32>
    %c2_188 = arith.constant 2 : index
    %c0_189 = arith.constant 0 : index
    %c0_190 = arith.constant 0 : index
    %340 = vector.load %arg14[%c2_188, %c0_189, %c0_190] : memref<16x16x128xf32, #tpu.memory_space<vmem>>, vector<1x16x128xf32>
    %341 = vector.shape_cast %340 : vector<1x16x128xf32> to vector<16x128xf32>
    %342 = arith.minimumf %341, %339 : vector<16x128xf32>
    %c2_191 = arith.constant 2 : index
    %c0_192 = arith.constant 0 : index
    %c0_193 = arith.constant 0 : index
    %343 = vector.load %arg14[%c2_191, %c0_192, %c0_193] : memref<16x16x128xf32, #tpu.memory_space<vmem>>, vector<1x16x128xf32>
    %344 = vector.shape_cast %343 : vector<1x16x128xf32> to vector<16x128xf32>
    %345 = vector.shape_cast %342 : vector<16x128xf32> to vector<1x16x128xf32>
    tpu.vector_store %arg14[%c2_191, %c0_192, %c0_193], %345 {strides = array<i32>} : memref<16x16x128xf32, #tpu.memory_space<vmem>>, vector<1x16x128xf32>,
    %c3_194 = arith.constant 3 : index
    %c0_195 = arith.constant 0 : index
    %c0_196 = arith.constant 0 : index
    %346 = vector.load %arg4[%c3_194, %c0_195, %c0_196] : memref<16x16x128xf32, #tpu.memory_space<vmem>>, vector<1x16x128xf32>
    %347 = vector.shape_cast %346 : vector<1x16x128xf32> to vector<16x128xf32>
    %348 = arith.subf %347, %297 : vector<16x128xf32>
    %349 = arith.mulf %348, %348 : vector<16x128xf32>
    %350 = arith.minimumf %335, %349 : vector<16x128xf32>
    %351 = arith.subf %347, %298 : vector<16x128xf32>
    %352 = arith.mulf %351, %351 : vector<16x128xf32>
    %353 = arith.minimumf %338, %352 : vector<16x128xf32>
    %354 = arith.minimumf %349, %352 : vector<16x128xf32>
    %c3_197 = arith.constant 3 : index
    %c0_198 = arith.constant 0 : index
    %c0_199 = arith.constant 0 : index
    %355 = vector.load %arg14[%c3_197, %c0_198, %c0_199] : memref<16x16x128xf32, #tpu.memory_space<vmem>>, vector<1x16x128xf32>
    %356 = vector.shape_cast %355 : vector<1x16x128xf32> to vector<16x128xf32>
    %357 = arith.minimumf %356, %354 : vector<16x128xf32>
    %c3_200 = arith.constant 3 : index
    %c0_201 = arith.constant 0 : index
    %c0_202 = arith.constant 0 : index
    %358 = vector.load %arg14[%c3_200, %c0_201, %c0_202] : memref<16x16x128xf32, #tpu.memory_space<vmem>>, vector<1x16x128xf32>
    %359 = vector.shape_cast %358 : vector<1x16x128xf32> to vector<16x128xf32>
    %360 = vector.shape_cast %357 : vector<16x128xf32> to vector<1x16x128xf32>
    tpu.vector_store %arg14[%c3_200, %c0_201, %c0_202], %360 {strides = array<i32>} : memref<16x16x128xf32, #tpu.memory_space<vmem>>, vector<1x16x128xf32>,
    %c4_203 = arith.constant 4 : index
    %c0_204 = arith.constant 0 : index
    %c0_205 = arith.constant 0 : index
    %361 = vector.load %arg4[%c4_203, %c0_204, %c0_205] : memref<16x16x128xf32, #tpu.memory_space<vmem>>, vector<1x16x128xf32>
    %362 = vector.shape_cast %361 : vector<1x16x128xf32> to vector<16x128xf32>
    %363 = arith.subf %362, %297 : vector<16x128xf32>
    %364 = arith.mulf %363, %363 : vector<16x128xf32>
    %365 = arith.minimumf %350, %364 : vector<16x128xf32>
    %366 = arith.subf %362, %298 : vector<16x128xf32>
    %367 = arith.mulf %366, %366 : vector<16x128xf32>
    %368 = arith.minimumf %353, %367 : vector<16x128xf32>
    %369 = arith.minimumf %364, %367 : vector<16x128xf32>
    %c4_206 = arith.constant 4 : index
    %c0_207 = arith.constant 0 : index
    %c0_208 = arith.constant 0 : index
    %370 = vector.load %arg14[%c4_206, %c0_207, %c0_208] : memref<16x16x128xf32, #tpu.memory_space<vmem>>, vector<1x16x128xf32>
    %371 = vector.shape_cast %370 : vector<1x16x128xf32> to vector<16x128xf32>
    %372 = arith.minimumf %371, %369 : vector<16x128xf32>
    %c4_209 = arith.constant 4 : index
    %c0_210 = arith.constant 0 : index
    %c0_211 = arith.constant 0 : index
    %373 = vector.load %arg14[%c4_209, %c0_210, %c0_211] : memref<16x16x128xf32, #tpu.memory_space<vmem>>, vector<1x16x128xf32>
    %374 = vector.shape_cast %373 : vector<1x16x128xf32> to vector<16x128xf32>
    %375 = vector.shape_cast %372 : vector<16x128xf32> to vector<1x16x128xf32>
    tpu.vector_store %arg14[%c4_209, %c0_210, %c0_211], %375 {strides = array<i32>} : memref<16x16x128xf32, #tpu.memory_space<vmem>>, vector<1x16x128xf32>,
    %c5_212 = arith.constant 5 : index
    %c0_213 = arith.constant 0 : index
    %c0_214 = arith.constant 0 : index
    %376 = vector.load %arg4[%c5_212, %c0_213, %c0_214] : memref<16x16x128xf32, #tpu.memory_space<vmem>>, vector<1x16x128xf32>
    %377 = vector.shape_cast %376 : vector<1x16x128xf32> to vector<16x128xf32>
    %378 = arith.subf %377, %297 : vector<16x128xf32>
    %379 = arith.mulf %378, %378 : vector<16x128xf32>
    %380 = arith.minimumf %365, %379 : vector<16x128xf32>
    %381 = arith.subf %377, %298 : vector<16x128xf32>
    %382 = arith.mulf %381, %381 : vector<16x128xf32>
    %383 = arith.minimumf %368, %382 : vector<16x128xf32>
    %384 = arith.minimumf %379, %382 : vector<16x128xf32>
    %c5_215 = arith.constant 5 : index
    %c0_216 = arith.constant 0 : index
    %c0_217 = arith.constant 0 : index
    %385 = vector.load %arg14[%c5_215, %c0_216, %c0_217] : memref<16x16x128xf32, #tpu.memory_space<vmem>>, vector<1x16x128xf32>
    %386 = vector.shape_cast %385 : vector<1x16x128xf32> to vector<16x128xf32>
    %387 = arith.minimumf %386, %384 : vector<16x128xf32>
    %c5_218 = arith.constant 5 : index
    %c0_219 = arith.constant 0 : index
    %c0_220 = arith.constant 0 : index
    %388 = vector.load %arg14[%c5_218, %c0_219, %c0_220] : memref<16x16x128xf32, #tpu.memory_space<vmem>>, vector<1x16x128xf32>
    %389 = vector.shape_cast %388 : vector<1x16x128xf32> to vector<16x128xf32>
    %390 = vector.shape_cast %387 : vector<16x128xf32> to vector<1x16x128xf32>
    tpu.vector_store %arg14[%c5_218, %c0_219, %c0_220], %390 {strides = array<i32>} : memref<16x16x128xf32, #tpu.memory_space<vmem>>, vector<1x16x128xf32>,
    %c6_221 = arith.constant 6 : index
    %c0_222 = arith.constant 0 : index
    %c0_223 = arith.constant 0 : index
    %391 = vector.load %arg4[%c6_221, %c0_222, %c0_223] : memref<16x16x128xf32, #tpu.memory_space<vmem>>, vector<1x16x128xf32>
    %392 = vector.shape_cast %391 : vector<1x16x128xf32> to vector<16x128xf32>
    %393 = arith.subf %392, %297 : vector<16x128xf32>
    %394 = arith.mulf %393, %393 : vector<16x128xf32>
    %395 = arith.minimumf %380, %394 : vector<16x128xf32>
    %396 = arith.subf %392, %298 : vector<16x128xf32>
    %397 = arith.mulf %396, %396 : vector<16x128xf32>
    %398 = arith.minimumf %383, %397 : vector<16x128xf32>
    %399 = arith.minimumf %394, %397 : vector<16x128xf32>
    %c6_224 = arith.constant 6 : index
    %c0_225 = arith.constant 0 : index
    %c0_226 = arith.constant 0 : index
    %400 = vector.load %arg14[%c6_224, %c0_225, %c0_226] : memref<16x16x128xf32, #tpu.memory_space<vmem>>, vector<1x16x128xf32>
    %401 = vector.shape_cast %400 : vector<1x16x128xf32> to vector<16x128xf32>
    %402 = arith.minimumf %401, %399 : vector<16x128xf32>
    %c6_227 = arith.constant 6 : index
    %c0_228 = arith.constant 0 : index
    %c0_229 = arith.constant 0 : index
    %403 = vector.load %arg14[%c6_227, %c0_228, %c0_229] : memref<16x16x128xf32, #tpu.memory_space<vmem>>, vector<1x16x128xf32>
    %404 = vector.shape_cast %403 : vector<1x16x128xf32> to vector<16x128xf32>
    %405 = vector.shape_cast %402 : vector<16x128xf32> to vector<1x16x128xf32>
    tpu.vector_store %arg14[%c6_227, %c0_228, %c0_229], %405 {strides = array<i32>} : memref<16x16x128xf32, #tpu.memory_space<vmem>>, vector<1x16x128xf32>,
    %c7_230 = arith.constant 7 : index
    %c0_231 = arith.constant 0 : index
    %c0_232 = arith.constant 0 : index
    %406 = vector.load %arg4[%c7_230, %c0_231, %c0_232] : memref<16x16x128xf32, #tpu.memory_space<vmem>>, vector<1x16x128xf32>
    %407 = vector.shape_cast %406 : vector<1x16x128xf32> to vector<16x128xf32>
    %408 = arith.subf %407, %297 : vector<16x128xf32>
    %409 = arith.mulf %408, %408 : vector<16x128xf32>
    %410 = arith.minimumf %395, %409 : vector<16x128xf32>
    %411 = arith.subf %407, %298 : vector<16x128xf32>
    %412 = arith.mulf %411, %411 : vector<16x128xf32>
    %413 = arith.minimumf %398, %412 : vector<16x128xf32>
    %414 = arith.minimumf %409, %412 : vector<16x128xf32>
    %c7_233 = arith.constant 7 : index
    %c0_234 = arith.constant 0 : index
    %c0_235 = arith.constant 0 : index
    %415 = vector.load %arg14[%c7_233, %c0_234, %c0_235] : memref<16x16x128xf32, #tpu.memory_space<vmem>>, vector<1x16x128xf32>
    %416 = vector.shape_cast %415 : vector<1x16x128xf32> to vector<16x128xf32>
    %417 = arith.minimumf %416, %414 : vector<16x128xf32>
    %c7_236 = arith.constant 7 : index
    %c0_237 = arith.constant 0 : index
    %c0_238 = arith.constant 0 : index
    %418 = vector.load %arg14[%c7_236, %c0_237, %c0_238] : memref<16x16x128xf32, #tpu.memory_space<vmem>>, vector<1x16x128xf32>
    %419 = vector.shape_cast %418 : vector<1x16x128xf32> to vector<16x128xf32>
    %420 = vector.shape_cast %417 : vector<16x128xf32> to vector<1x16x128xf32>
    tpu.vector_store %arg14[%c7_236, %c0_237, %c0_238], %420 {strides = array<i32>} : memref<16x16x128xf32, #tpu.memory_space<vmem>>, vector<1x16x128xf32>,
    %c8_239 = arith.constant 8 : index
    %c0_240 = arith.constant 0 : index
    %c0_241 = arith.constant 0 : index
    %421 = vector.load %arg4[%c8_239, %c0_240, %c0_241] : memref<16x16x128xf32, #tpu.memory_space<vmem>>, vector<1x16x128xf32>
    %422 = vector.shape_cast %421 : vector<1x16x128xf32> to vector<16x128xf32>
    %423 = arith.subf %422, %297 : vector<16x128xf32>
    %424 = arith.mulf %423, %423 : vector<16x128xf32>
    %425 = arith.minimumf %410, %424 : vector<16x128xf32>
    %426 = arith.subf %422, %298 : vector<16x128xf32>
    %427 = arith.mulf %426, %426 : vector<16x128xf32>
    %428 = arith.minimumf %413, %427 : vector<16x128xf32>
    %429 = arith.minimumf %424, %427 : vector<16x128xf32>
    %c8_242 = arith.constant 8 : index
    %c0_243 = arith.constant 0 : index
    %c0_244 = arith.constant 0 : index
    %430 = vector.load %arg14[%c8_242, %c0_243, %c0_244] : memref<16x16x128xf32, #tpu.memory_space<vmem>>, vector<1x16x128xf32>
    %431 = vector.shape_cast %430 : vector<1x16x128xf32> to vector<16x128xf32>
    %432 = arith.minimumf %431, %429 : vector<16x128xf32>
    %c8_245 = arith.constant 8 : index
    %c0_246 = arith.constant 0 : index
    %c0_247 = arith.constant 0 : index
    %433 = vector.load %arg14[%c8_245, %c0_246, %c0_247] : memref<16x16x128xf32, #tpu.memory_space<vmem>>, vector<1x16x128xf32>
    %434 = vector.shape_cast %433 : vector<1x16x128xf32> to vector<16x128xf32>
    %435 = vector.shape_cast %432 : vector<16x128xf32> to vector<1x16x128xf32>
    tpu.vector_store %arg14[%c8_245, %c0_246, %c0_247], %435 {strides = array<i32>} : memref<16x16x128xf32, #tpu.memory_space<vmem>>, vector<1x16x128xf32>,
    %c9_248 = arith.constant 9 : index
    %c0_249 = arith.constant 0 : index
    %c0_250 = arith.constant 0 : index
    %436 = vector.load %arg4[%c9_248, %c0_249, %c0_250] : memref<16x16x128xf32, #tpu.memory_space<vmem>>, vector<1x16x128xf32>
    %437 = vector.shape_cast %436 : vector<1x16x128xf32> to vector<16x128xf32>
    %438 = arith.subf %437, %297 : vector<16x128xf32>
    %439 = arith.mulf %438, %438 : vector<16x128xf32>
    %440 = arith.minimumf %425, %439 : vector<16x128xf32>
    %441 = arith.subf %437, %298 : vector<16x128xf32>
    %442 = arith.mulf %441, %441 : vector<16x128xf32>
    %443 = arith.minimumf %428, %442 : vector<16x128xf32>
    %444 = arith.minimumf %439, %442 : vector<16x128xf32>
    %c9_251 = arith.constant 9 : index
    %c0_252 = arith.constant 0 : index
    %c0_253 = arith.constant 0 : index
    %445 = vector.load %arg14[%c9_251, %c0_252, %c0_253] : memref<16x16x128xf32, #tpu.memory_space<vmem>>, vector<1x16x128xf32>
    %446 = vector.shape_cast %445 : vector<1x16x128xf32> to vector<16x128xf32>
    %447 = arith.minimumf %446, %444 : vector<16x128xf32>
    %c9_254 = arith.constant 9 : index
    %c0_255 = arith.constant 0 : index
    %c0_256 = arith.constant 0 : index
    %448 = vector.load %arg14[%c9_254, %c0_255, %c0_256] : memref<16x16x128xf32, #tpu.memory_space<vmem>>, vector<1x16x128xf32>
    %449 = vector.shape_cast %448 : vector<1x16x128xf32> to vector<16x128xf32>
    %450 = vector.shape_cast %447 : vector<16x128xf32> to vector<1x16x128xf32>
    tpu.vector_store %arg14[%c9_254, %c0_255, %c0_256], %450 {strides = array<i32>} : memref<16x16x128xf32, #tpu.memory_space<vmem>>, vector<1x16x128xf32>,
    %c10_257 = arith.constant 10 : index
    %c0_258 = arith.constant 0 : index
    %c0_259 = arith.constant 0 : index
    %451 = vector.load %arg4[%c10_257, %c0_258, %c0_259] : memref<16x16x128xf32, #tpu.memory_space<vmem>>, vector<1x16x128xf32>
    %452 = vector.shape_cast %451 : vector<1x16x128xf32> to vector<16x128xf32>
    %453 = arith.subf %452, %297 : vector<16x128xf32>
    %454 = arith.mulf %453, %453 : vector<16x128xf32>
    %455 = arith.minimumf %440, %454 : vector<16x128xf32>
    %456 = arith.subf %452, %298 : vector<16x128xf32>
    %457 = arith.mulf %456, %456 : vector<16x128xf32>
    %458 = arith.minimumf %443, %457 : vector<16x128xf32>
    %459 = arith.minimumf %454, %457 : vector<16x128xf32>
    %c10_260 = arith.constant 10 : index
    %c0_261 = arith.constant 0 : index
    %c0_262 = arith.constant 0 : index
    %460 = vector.load %arg14[%c10_260, %c0_261, %c0_262] : memref<16x16x128xf32, #tpu.memory_space<vmem>>, vector<1x16x128xf32>
    %461 = vector.shape_cast %460 : vector<1x16x128xf32> to vector<16x128xf32>
    %462 = arith.minimumf %461, %459 : vector<16x128xf32>
    %c10_263 = arith.constant 10 : index
    %c0_264 = arith.constant 0 : index
    %c0_265 = arith.constant 0 : index
    %463 = vector.load %arg14[%c10_263, %c0_264, %c0_265] : memref<16x16x128xf32, #tpu.memory_space<vmem>>, vector<1x16x128xf32>
    %464 = vector.shape_cast %463 : vector<1x16x128xf32> to vector<16x128xf32>
    %465 = vector.shape_cast %462 : vector<16x128xf32> to vector<1x16x128xf32>
    tpu.vector_store %arg14[%c10_263, %c0_264, %c0_265], %465 {strides = array<i32>} : memref<16x16x128xf32, #tpu.memory_space<vmem>>, vector<1x16x128xf32>,
    %c11_266 = arith.constant 11 : index
    %c0_267 = arith.constant 0 : index
    %c0_268 = arith.constant 0 : index
    %466 = vector.load %arg4[%c11_266, %c0_267, %c0_268] : memref<16x16x128xf32, #tpu.memory_space<vmem>>, vector<1x16x128xf32>
    %467 = vector.shape_cast %466 : vector<1x16x128xf32> to vector<16x128xf32>
    %468 = arith.subf %467, %297 : vector<16x128xf32>
    %469 = arith.mulf %468, %468 : vector<16x128xf32>
    %470 = arith.minimumf %455, %469 : vector<16x128xf32>
    %471 = arith.subf %467, %298 : vector<16x128xf32>
    %472 = arith.mulf %471, %471 : vector<16x128xf32>
    %473 = arith.minimumf %458, %472 : vector<16x128xf32>
    %474 = arith.minimumf %469, %472 : vector<16x128xf32>
    %c11_269 = arith.constant 11 : index
    %c0_270 = arith.constant 0 : index
    %c0_271 = arith.constant 0 : index
    %475 = vector.load %arg14[%c11_269, %c0_270, %c0_271] : memref<16x16x128xf32, #tpu.memory_space<vmem>>, vector<1x16x128xf32>
    %476 = vector.shape_cast %475 : vector<1x16x128xf32> to vector<16x128xf32>
    %477 = arith.minimumf %476, %474 : vector<16x128xf32>
    %c11_272 = arith.constant 11 : index
    %c0_273 = arith.constant 0 : index
    %c0_274 = arith.constant 0 : index
    %478 = vector.load %arg14[%c11_272, %c0_273, %c0_274] : memref<16x16x128xf32, #tpu.memory_space<vmem>>, vector<1x16x128xf32>
    %479 = vector.shape_cast %478 : vector<1x16x128xf32> to vector<16x128xf32>
    %480 = vector.shape_cast %477 : vector<16x128xf32> to vector<1x16x128xf32>
    tpu.vector_store %arg14[%c11_272, %c0_273, %c0_274], %480 {strides = array<i32>} : memref<16x16x128xf32, #tpu.memory_space<vmem>>, vector<1x16x128xf32>,
    %c12_275 = arith.constant 12 : index
    %c0_276 = arith.constant 0 : index
    %c0_277 = arith.constant 0 : index
    %481 = vector.load %arg4[%c12_275, %c0_276, %c0_277] : memref<16x16x128xf32, #tpu.memory_space<vmem>>, vector<1x16x128xf32>
    %482 = vector.shape_cast %481 : vector<1x16x128xf32> to vector<16x128xf32>
    %483 = arith.subf %482, %297 : vector<16x128xf32>
    %484 = arith.mulf %483, %483 : vector<16x128xf32>
    %485 = arith.minimumf %470, %484 : vector<16x128xf32>
    %486 = arith.subf %482, %298 : vector<16x128xf32>
    %487 = arith.mulf %486, %486 : vector<16x128xf32>
    %488 = arith.minimumf %473, %487 : vector<16x128xf32>
    %489 = arith.minimumf %484, %487 : vector<16x128xf32>
    %c12_278 = arith.constant 12 : index
    %c0_279 = arith.constant 0 : index
    %c0_280 = arith.constant 0 : index
    %490 = vector.load %arg14[%c12_278, %c0_279, %c0_280] : memref<16x16x128xf32, #tpu.memory_space<vmem>>, vector<1x16x128xf32>
    %491 = vector.shape_cast %490 : vector<1x16x128xf32> to vector<16x128xf32>
    %492 = arith.minimumf %491, %489 : vector<16x128xf32>
    %c12_281 = arith.constant 12 : index
    %c0_282 = arith.constant 0 : index
    %c0_283 = arith.constant 0 : index
    %493 = vector.load %arg14[%c12_281, %c0_282, %c0_283] : memref<16x16x128xf32, #tpu.memory_space<vmem>>, vector<1x16x128xf32>
    %494 = vector.shape_cast %493 : vector<1x16x128xf32> to vector<16x128xf32>
    %495 = vector.shape_cast %492 : vector<16x128xf32> to vector<1x16x128xf32>
    tpu.vector_store %arg14[%c12_281, %c0_282, %c0_283], %495 {strides = array<i32>} : memref<16x16x128xf32, #tpu.memory_space<vmem>>, vector<1x16x128xf32>,
    %c13_284 = arith.constant 13 : index
    %c0_285 = arith.constant 0 : index
    %c0_286 = arith.constant 0 : index
    %496 = vector.load %arg4[%c13_284, %c0_285, %c0_286] : memref<16x16x128xf32, #tpu.memory_space<vmem>>, vector<1x16x128xf32>
    %497 = vector.shape_cast %496 : vector<1x16x128xf32> to vector<16x128xf32>
    %498 = arith.subf %497, %297 : vector<16x128xf32>
    %499 = arith.mulf %498, %498 : vector<16x128xf32>
    %500 = arith.minimumf %485, %499 : vector<16x128xf32>
    %501 = arith.subf %497, %298 : vector<16x128xf32>
    %502 = arith.mulf %501, %501 : vector<16x128xf32>
    %503 = arith.minimumf %488, %502 : vector<16x128xf32>
    %504 = arith.minimumf %499, %502 : vector<16x128xf32>
    %c13_287 = arith.constant 13 : index
    %c0_288 = arith.constant 0 : index
    %c0_289 = arith.constant 0 : index
    %505 = vector.load %arg14[%c13_287, %c0_288, %c0_289] : memref<16x16x128xf32, #tpu.memory_space<vmem>>, vector<1x16x128xf32>
    %506 = vector.shape_cast %505 : vector<1x16x128xf32> to vector<16x128xf32>
    %507 = arith.minimumf %506, %504 : vector<16x128xf32>
    %c13_290 = arith.constant 13 : index
    %c0_291 = arith.constant 0 : index
    %c0_292 = arith.constant 0 : index
    %508 = vector.load %arg14[%c13_290, %c0_291, %c0_292] : memref<16x16x128xf32, #tpu.memory_space<vmem>>, vector<1x16x128xf32>
    %509 = vector.shape_cast %508 : vector<1x16x128xf32> to vector<16x128xf32>
    %510 = vector.shape_cast %507 : vector<16x128xf32> to vector<1x16x128xf32>
    tpu.vector_store %arg14[%c13_290, %c0_291, %c0_292], %510 {strides = array<i32>} : memref<16x16x128xf32, #tpu.memory_space<vmem>>, vector<1x16x128xf32>,
    %c14_293 = arith.constant 14 : index
    %c0_294 = arith.constant 0 : index
    %c0_295 = arith.constant 0 : index
    %511 = vector.load %arg4[%c14_293, %c0_294, %c0_295] : memref<16x16x128xf32, #tpu.memory_space<vmem>>, vector<1x16x128xf32>
    %512 = vector.shape_cast %511 : vector<1x16x128xf32> to vector<16x128xf32>
    %513 = arith.subf %512, %297 : vector<16x128xf32>
    %514 = arith.mulf %513, %513 : vector<16x128xf32>
    %515 = arith.minimumf %500, %514 : vector<16x128xf32>
    %516 = arith.subf %512, %298 : vector<16x128xf32>
    %517 = arith.mulf %516, %516 : vector<16x128xf32>
    %518 = arith.minimumf %503, %517 : vector<16x128xf32>
    %519 = arith.minimumf %514, %517 : vector<16x128xf32>
    %c14_296 = arith.constant 14 : index
    %c0_297 = arith.constant 0 : index
    %c0_298 = arith.constant 0 : index
    %520 = vector.load %arg14[%c14_296, %c0_297, %c0_298] : memref<16x16x128xf32, #tpu.memory_space<vmem>>, vector<1x16x128xf32>
    %521 = vector.shape_cast %520 : vector<1x16x128xf32> to vector<16x128xf32>
    %522 = arith.minimumf %521, %519 : vector<16x128xf32>
    %c14_299 = arith.constant 14 : index
    %c0_300 = arith.constant 0 : index
    %c0_301 = arith.constant 0 : index
    %523 = vector.load %arg14[%c14_299, %c0_300, %c0_301] : memref<16x16x128xf32, #tpu.memory_space<vmem>>, vector<1x16x128xf32>
    %524 = vector.shape_cast %523 : vector<1x16x128xf32> to vector<16x128xf32>
    %525 = vector.shape_cast %522 : vector<16x128xf32> to vector<1x16x128xf32>
    tpu.vector_store %arg14[%c14_299, %c0_300, %c0_301], %525 {strides = array<i32>} : memref<16x16x128xf32, #tpu.memory_space<vmem>>, vector<1x16x128xf32>,
    %c15_302 = arith.constant 15 : index
    %c0_303 = arith.constant 0 : index
    %c0_304 = arith.constant 0 : index
    %526 = vector.load %arg4[%c15_302, %c0_303, %c0_304] : memref<16x16x128xf32, #tpu.memory_space<vmem>>, vector<1x16x128xf32>
    %527 = vector.shape_cast %526 : vector<1x16x128xf32> to vector<16x128xf32>
    %528 = arith.subf %527, %297 : vector<16x128xf32>
    %529 = arith.mulf %528, %528 : vector<16x128xf32>
    %530 = arith.minimumf %515, %529 : vector<16x128xf32>
    %531 = arith.subf %527, %298 : vector<16x128xf32>
    %532 = arith.mulf %531, %531 : vector<16x128xf32>
    %533 = arith.minimumf %518, %532 : vector<16x128xf32>
    %534 = arith.minimumf %529, %532 : vector<16x128xf32>
    %c15_305 = arith.constant 15 : index
    %c0_306 = arith.constant 0 : index
    %c0_307 = arith.constant 0 : index
    %535 = vector.load %arg14[%c15_305, %c0_306, %c0_307] : memref<16x16x128xf32, #tpu.memory_space<vmem>>, vector<1x16x128xf32>
    %536 = vector.shape_cast %535 : vector<1x16x128xf32> to vector<16x128xf32>
    %537 = arith.minimumf %536, %534 : vector<16x128xf32>
    %c15_308 = arith.constant 15 : index
    %c0_309 = arith.constant 0 : index
    %c0_310 = arith.constant 0 : index
    %538 = vector.load %arg14[%c15_308, %c0_309, %c0_310] : memref<16x16x128xf32, #tpu.memory_space<vmem>>, vector<1x16x128xf32>
    %539 = vector.shape_cast %538 : vector<1x16x128xf32> to vector<16x128xf32>
    %540 = vector.shape_cast %537 : vector<16x128xf32> to vector<1x16x128xf32>
    tpu.vector_store %arg14[%c15_308, %c0_309, %c0_310], %540 {strides = array<i32>} : memref<16x16x128xf32, #tpu.memory_space<vmem>>, vector<1x16x128xf32>,
    %c0_311 = arith.constant 0 : index
    %c256 = arith.constant 256 : index
    %541 = vector.load %arg10[%c0_311, %c256] : memref<16x512xf32, #tpu.memory_space<vmem>>, vector<16x128xf32>
    %542 = vector.extract_strided_slice %37 {offsets = [0, 256], sizes = [16, 128], strides = [1, 1]} : vector<16x512xf32> to vector<16x128xf32>
    %543 = arith.mulf %530, %542 : vector<16x128xf32>
    %544 = arith.addf %541, %543 : vector<16x128xf32>
    %c0_312 = arith.constant 0 : index
    %c256_313 = arith.constant 256 : index
    %545 = vector.load %arg10[%c0_312, %c256_313] : memref<16x512xf32, #tpu.memory_space<vmem>>, vector<16x128xf32>
    tpu.vector_store %arg10[%c0_312, %c256_313], %544 {strides = array<i32>} : memref<16x512xf32, #tpu.memory_space<vmem>>, vector<16x128xf32>,
    %c0_314 = arith.constant 0 : index
    %c384 = arith.constant 384 : index
    %546 = vector.load %arg10[%c0_314, %c384] : memref<16x512xf32, #tpu.memory_space<vmem>>, vector<16x128xf32>
    %547 = vector.extract_strided_slice %37 {offsets = [0, 384], sizes = [16, 128], strides = [1, 1]} : vector<16x512xf32> to vector<16x128xf32>
    %548 = arith.mulf %533, %547 : vector<16x128xf32>
    %549 = arith.addf %546, %548 : vector<16x128xf32>
    %c0_315 = arith.constant 0 : index
    %c384_316 = arith.constant 384 : index
    %550 = vector.load %arg10[%c0_315, %c384_316] : memref<16x512xf32, #tpu.memory_space<vmem>>, vector<16x128xf32>
    tpu.vector_store %arg10[%c0_315, %c384_316], %549 {strides = array<i32>} : memref<16x512xf32, #tpu.memory_space<vmem>>, vector<16x128xf32>,
    %c0_i32_317 = arith.constant 0 : i32
    %551 = arith.cmpi sge, %1, %c0_i32_317 : i32
    %552 = arith.extui %551 : i1 to i32
    %c0_i32_318 = arith.constant 0 : i32
    %553 = arith.cmpi ne, %552, %c0_i32_318 : i32
    scf.if %553 {
      %557 = tpu.iota {dimensions = array<i32: 0>} : vector<16x512xi32>
      %558 = tpu.iota {dimensions = array<i32: 1>} : vector<16x512xi32>
      %c7_i32 = arith.constant 7 : i32
      %559 = vector.broadcast %c7_i32 : i32 to vector<16x512xi32>
      %560 = arith.andi %557, %559 : vector<16x512xi32>
      %c1024_i32 = arith.constant 1024 : i32
      %561 = vector.broadcast %c1024_i32 : i32 to vector<16x512xi32>
      %562 = arith.muli %560, %561 : vector<16x512xi32>
      %c512_i32 = arith.constant 512 : i32
      %563 = arith.muli %1, %c512_i32 : i32
      %564 = vector.broadcast %563 : i32 to vector<16x512xi32>
      %565 = arith.addi %562, %564 : vector<16x512xi32>
      %566 = arith.addi %565, %558 : vector<16x512xi32>
      %c4332_i32 = arith.constant 4332 : i32
      %567 = vector.broadcast %c4332_i32 : i32 to vector<16x512xi32>
      %568 = arith.cmpi slt, %566, %567 : vector<16x512xi32>
      %c0_321 = arith.constant 0 : index
      %c0_322 = arith.constant 0 : index
      %569 = vector.load %arg12[%c0_321, %c0_322] : memref<16x512xf32, #tpu.memory_space<vmem>>, vector<16x512xf32>
      %cst_323 = arith.constant -1.000000e+30 : f32
      %570 = vector.broadcast %cst_323 : f32 to vector<16x512xf32>
      %571 = arith.select %568, %6, %570 : vector<16x512xi1>, vector<16x512xf32>
      %572 = arith.maximumf %569, %571 : vector<16x512xf32>
      %c0_324 = arith.constant 0 : index
      %c0_325 = arith.constant 0 : index
      %573 = vector.load %arg12[%c0_324, %c0_325] : memref<16x512xf32, #tpu.memory_space<vmem>>, vector<16x512xf32>
      tpu.vector_store %arg12[%c0_324, %c0_325], %572 {strides = array<i32>} : memref<16x512xf32, #tpu.memory_space<vmem>>, vector<16x512xf32>,
      %c0_326 = arith.constant 0 : index
      %c0_327 = arith.constant 0 : index
      %574 = vector.load %arg13[%c0_326, %c0_327] : memref<16x512xf32, #tpu.memory_space<vmem>>, vector<16x512xf32>
      %cst_328 = arith.constant 1.000000e+30 : f32
      %575 = vector.broadcast %cst_328 : f32 to vector<16x512xf32>
      %576 = arith.select %568, %6, %575 : vector<16x512xi1>, vector<16x512xf32>
      %577 = arith.minimumf %574, %576 : vector<16x512xf32>
      %c0_329 = arith.constant 0 : index
      %c0_330 = arith.constant 0 : index
      %578 = vector.load %arg13[%c0_329, %c0_330] : memref<16x512xf32, #tpu.memory_space<vmem>>, vector<16x512xf32>
      tpu.vector_store %arg13[%c0_329, %c0_330], %577 {strides = array<i32>} : memref<16x512xf32, #tpu.memory_space<vmem>>, vector<16x512xf32>,
    } else {
    }
    %c0_i32_319 = arith.constant 0 : i32
    %554 = arith.cmpi eq, %arg1, %c0_i32_319 : i32
    %555 = arith.extui %554 : i1 to i32
    %c0_i32_320 = arith.constant 0 : i32
    %556 = arith.cmpi ne, %555, %c0_i32_320 : i32
    scf.if %556 {
      %c0_321 = arith.constant 0 : index
      %c0_322 = arith.constant 0 : index
      %557 = vector.load %arg7[%c0_321, %c0_322] : memref<16x512xf32, #tpu.memory_space<vmem>>, vector<16x512xf32>
      %cst_323 = arith.constant dense<0.000000e+00> : vector<16xf32>
      %558 = vector.multi_reduction <add>, %557, %cst_323 [1] : vector<16x512xf32> to vector<16xf32>
      %559 = vector.shape_cast %558 : vector<16xf32> to vector<16x1xf32>
      %c0_324 = arith.constant 0 : index
      %c0_325 = arith.constant 0 : index
      %c0_326 = arith.constant 0 : index
      %560 = vector.load %arg5[%c0_324, %c0_325, %c0_326] : memref<1x16x8xf32, #tpu.memory_space<vmem>>, vector<1x16x1xf32>
      %561 = vector.shape_cast %560 : vector<1x16x1xf32> to vector<16x1xf32>
      %562 = vector.shape_cast %559 : vector<16x1xf32> to vector<1x16x1xf32>
      tpu.vector_store %arg5[%c0_324, %c0_325, %c0_326], %562 {strides = array<i32>} : memref<1x16x8xf32, #tpu.memory_space<vmem>>, vector<1x16x1xf32>,
      %c0_327 = arith.constant 0 : index
      %c0_328 = arith.constant 0 : index
      %563 = vector.load %arg8[%c0_327, %c0_328] : memref<16x512xf32, #tpu.memory_space<vmem>>, vector<16x512xf32>
      %cst_329 = arith.constant dense<0.000000e+00> : vector<16xf32>
      %564 = vector.multi_reduction <add>, %563, %cst_329 [1] : vector<16x512xf32> to vector<16xf32>
      %565 = vector.shape_cast %564 : vector<16xf32> to vector<16x1xf32>
      %c0_330 = arith.constant 0 : index
      %c0_331 = arith.constant 0 : index
      %c1_332 = arith.constant 1 : index
      %566 = vector.load %arg5[%c0_330, %c0_331, %c1_332] : memref<1x16x8xf32, #tpu.memory_space<vmem>>, vector<1x16x1xf32>
      %567 = vector.shape_cast %566 : vector<1x16x1xf32> to vector<16x1xf32>
      %568 = vector.shape_cast %565 : vector<16x1xf32> to vector<1x16x1xf32>
      tpu.vector_store %arg5[%c0_330, %c0_331, %c1_332], %568 {strides = array<i32>} : memref<1x16x8xf32, #tpu.memory_space<vmem>>, vector<1x16x1xf32>,
      %c0_333 = arith.constant 0 : index
      %c0_334 = arith.constant 0 : index
      %569 = vector.load %arg9[%c0_333, %c0_334] : memref<16x512xf32, #tpu.memory_space<vmem>>, vector<16x512xf32>
      %cst_335 = arith.constant dense<0.000000e+00> : vector<16xf32>
      %570 = vector.multi_reduction <add>, %569, %cst_335 [1] : vector<16x512xf32> to vector<16xf32>
      %571 = vector.shape_cast %570 : vector<16xf32> to vector<16x1xf32>
      %c0_336 = arith.constant 0 : index
      %c0_337 = arith.constant 0 : index
      %c2_338 = arith.constant 2 : index
      %572 = vector.load %arg5[%c0_336, %c0_337, %c2_338] : memref<1x16x8xf32, #tpu.memory_space<vmem>>, vector<1x16x1xf32>
      %573 = vector.shape_cast %572 : vector<1x16x1xf32> to vector<16x1xf32>
      %574 = vector.shape_cast %571 : vector<16x1xf32> to vector<1x16x1xf32>
      tpu.vector_store %arg5[%c0_336, %c0_337, %c2_338], %574 {strides = array<i32>} : memref<1x16x8xf32, #tpu.memory_space<vmem>>, vector<1x16x1xf32>,
      %c0_339 = arith.constant 0 : index
      %c0_340 = arith.constant 0 : index
      %575 = vector.load %arg11[%c0_339, %c0_340] : memref<16x512xf32, #tpu.memory_space<vmem>>, vector<16x512xf32>
      %cst_341 = arith.constant dense<0.000000e+00> : vector<16xf32>
      %576 = vector.multi_reduction <add>, %575, %cst_341 [1] : vector<16x512xf32> to vector<16xf32>
      %577 = vector.shape_cast %576 : vector<16xf32> to vector<16x1xf32>
      %c0_342 = arith.constant 0 : index
      %c0_343 = arith.constant 0 : index
      %c3_344 = arith.constant 3 : index
      %578 = vector.load %arg5[%c0_342, %c0_343, %c3_344] : memref<1x16x8xf32, #tpu.memory_space<vmem>>, vector<1x16x1xf32>
      %579 = vector.shape_cast %578 : vector<1x16x1xf32> to vector<16x1xf32>
      %580 = vector.shape_cast %577 : vector<16x1xf32> to vector<1x16x1xf32>
      tpu.vector_store %arg5[%c0_342, %c0_343, %c3_344], %580 {strides = array<i32>} : memref<1x16x8xf32, #tpu.memory_space<vmem>>, vector<1x16x1xf32>,
      %c0_345 = arith.constant 0 : index
      %c0_346 = arith.constant 0 : index
      %581 = vector.load %arg10[%c0_345, %c0_346] : memref<16x512xf32, #tpu.memory_space<vmem>>, vector<16x512xf32>
      %cst_347 = arith.constant dense<0.000000e+00> : vector<16xf32>
      %582 = vector.multi_reduction <add>, %581, %cst_347 [1] : vector<16x512xf32> to vector<16xf32>
      %583 = vector.shape_cast %582 : vector<16xf32> to vector<16x1xf32>
      %c0_348 = arith.constant 0 : index
      %c0_349 = arith.constant 0 : index
      %c4_350 = arith.constant 4 : index
      %584 = vector.load %arg5[%c0_348, %c0_349, %c4_350] : memref<1x16x8xf32, #tpu.memory_space<vmem>>, vector<1x16x1xf32>
      %585 = vector.shape_cast %584 : vector<1x16x1xf32> to vector<16x1xf32>
      %586 = vector.shape_cast %583 : vector<16x1xf32> to vector<1x16x1xf32>
      tpu.vector_store %arg5[%c0_348, %c0_349, %c4_350], %586 {strides = array<i32>} : memref<1x16x8xf32, #tpu.memory_space<vmem>>, vector<1x16x1xf32>,
      %c0_351 = arith.constant 0 : index
      %c0_352 = arith.constant 0 : index
      %587 = vector.load %arg12[%c0_351, %c0_352] : memref<16x512xf32, #tpu.memory_space<vmem>>, vector<16x512xf32>
      %cst_353 = arith.constant dense<0xFF800000> : vector<16xf32>
      %588 = vector.multi_reduction <maximumf>, %587, %cst_353 [1] : vector<16x512xf32> to vector<16xf32>
      %589 = vector.shape_cast %588 : vector<16xf32> to vector<16x1xf32>
      %c0_354 = arith.constant 0 : index
      %c0_355 = arith.constant 0 : index
      %c5_356 = arith.constant 5 : index
      %590 = vector.load %arg5[%c0_354, %c0_355, %c5_356] : memref<1x16x8xf32, #tpu.memory_space<vmem>>, vector<1x16x1xf32>
      %591 = vector.shape_cast %590 : vector<1x16x1xf32> to vector<16x1xf32>
      %592 = vector.shape_cast %589 : vector<16x1xf32> to vector<1x16x1xf32>
      tpu.vector_store %arg5[%c0_354, %c0_355, %c5_356], %592 {strides = array<i32>} : memref<1x16x8xf32, #tpu.memory_space<vmem>>, vector<1x16x1xf32>,
      %c0_357 = arith.constant 0 : index
      %c0_358 = arith.constant 0 : index
      %593 = vector.load %arg13[%c0_357, %c0_358] : memref<16x512xf32, #tpu.memory_space<vmem>>, vector<16x512xf32>
      %cst_359 = arith.constant dense<0x7F800000> : vector<16xf32>
      %594 = vector.multi_reduction <minimumf>, %593, %cst_359 [1] : vector<16x512xf32> to vector<16xf32>
      %595 = vector.shape_cast %594 : vector<16xf32> to vector<16x1xf32>
      %c0_360 = arith.constant 0 : index
      %c0_361 = arith.constant 0 : index
      %c6_362 = arith.constant 6 : index
      %596 = vector.load %arg5[%c0_360, %c0_361, %c6_362] : memref<1x16x8xf32, #tpu.memory_space<vmem>>, vector<1x16x1xf32>
      %597 = vector.shape_cast %596 : vector<1x16x1xf32> to vector<16x1xf32>
      %598 = vector.shape_cast %595 : vector<16x1xf32> to vector<1x16x1xf32>
      tpu.vector_store %arg5[%c0_360, %c0_361, %c6_362], %598 {strides = array<i32>} : memref<1x16x8xf32, #tpu.memory_space<vmem>>, vector<1x16x1xf32>,
      %cst_363 = arith.constant 0.000000e+00 : f32
      %599 = vector.broadcast %cst_363 : f32 to vector<16x1xf32>
      %c0_364 = arith.constant 0 : index
      %c0_365 = arith.constant 0 : index
      %c7_366 = arith.constant 7 : index
      %600 = vector.load %arg5[%c0_364, %c0_365, %c7_366] : memref<1x16x8xf32, #tpu.memory_space<vmem>>, vector<1x16x1xf32>
      %601 = vector.shape_cast %600 : vector<1x16x1xf32> to vector<16x1xf32>
      %602 = vector.shape_cast %599 : vector<16x1xf32> to vector<1x16x1xf32>
      tpu.vector_store %arg5[%c0_364, %c0_365, %c7_366], %602 {strides = array<i32>} : memref<1x16x8xf32, #tpu.memory_space<vmem>>, vector<1x16x1xf32>,
      %c0_367 = arith.constant 0 : index
      %c0_368 = arith.constant 0 : index
      %c0_369 = arith.constant 0 : index
      %603 = vector.load %arg14[%c0_367, %c0_368, %c0_369] : memref<16x16x128xf32, #tpu.memory_space<vmem>>, vector<1x16x128xf32>
      %604 = vector.shape_cast %603 : vector<1x16x128xf32> to vector<16x128xf32>
      %cst_370 = arith.constant dense<0x7F800000> : vector<16xf32>
      %605 = vector.multi_reduction <minimumf>, %604, %cst_370 [1] : vector<16x128xf32> to vector<16xf32>
      %606 = vector.shape_cast %605 : vector<16xf32> to vector<16x1xf32>
      %c0_371 = arith.constant 0 : index
      %c0_372 = arith.constant 0 : index
      %c0_373 = arith.constant 0 : index
      %607 = vector.load %arg6[%c0_371, %c0_372, %c0_373] : memref<1x16x16xf32, #tpu.memory_space<vmem>>, vector<1x16x1xf32>
      %608 = vector.shape_cast %607 : vector<1x16x1xf32> to vector<16x1xf32>
      %609 = vector.shape_cast %606 : vector<16x1xf32> to vector<1x16x1xf32>
      tpu.vector_store %arg6[%c0_371, %c0_372, %c0_373], %609 {strides = array<i32>} : memref<1x16x16xf32, #tpu.memory_space<vmem>>, vector<1x16x1xf32>,
      %c1_374 = arith.constant 1 : index
      %c0_375 = arith.constant 0 : index
      %c0_376 = arith.constant 0 : index
      %610 = vector.load %arg14[%c1_374, %c0_375, %c0_376] : memref<16x16x128xf32, #tpu.memory_space<vmem>>, vector<1x16x128xf32>
      %611 = vector.shape_cast %610 : vector<1x16x128xf32> to vector<16x128xf32>
      %cst_377 = arith.constant dense<0x7F800000> : vector<16xf32>
      %612 = vector.multi_reduction <minimumf>, %611, %cst_377 [1] : vector<16x128xf32> to vector<16xf32>
      %613 = vector.shape_cast %612 : vector<16xf32> to vector<16x1xf32>
      %c0_378 = arith.constant 0 : index
      %c0_379 = arith.constant 0 : index
      %c1_380 = arith.constant 1 : index
      %614 = vector.load %arg6[%c0_378, %c0_379, %c1_380] : memref<1x16x16xf32, #tpu.memory_space<vmem>>, vector<1x16x1xf32>
      %615 = vector.shape_cast %614 : vector<1x16x1xf32> to vector<16x1xf32>
      %616 = vector.shape_cast %613 : vector<16x1xf32> to vector<1x16x1xf32>
      tpu.vector_store %arg6[%c0_378, %c0_379, %c1_380], %616 {strides = array<i32>} : memref<1x16x16xf32, #tpu.memory_space<vmem>>, vector<1x16x1xf32>,
      %c2_381 = arith.constant 2 : index
      %c0_382 = arith.constant 0 : index
      %c0_383 = arith.constant 0 : index
      %617 = vector.load %arg14[%c2_381, %c0_382, %c0_383] : memref<16x16x128xf32, #tpu.memory_space<vmem>>, vector<1x16x128xf32>
      %618 = vector.shape_cast %617 : vector<1x16x128xf32> to vector<16x128xf32>
      %cst_384 = arith.constant dense<0x7F800000> : vector<16xf32>
      %619 = vector.multi_reduction <minimumf>, %618, %cst_384 [1] : vector<16x128xf32> to vector<16xf32>
      %620 = vector.shape_cast %619 : vector<16xf32> to vector<16x1xf32>
      %c0_385 = arith.constant 0 : index
      %c0_386 = arith.constant 0 : index
      %c2_387 = arith.constant 2 : index
      %621 = vector.load %arg6[%c0_385, %c0_386, %c2_387] : memref<1x16x16xf32, #tpu.memory_space<vmem>>, vector<1x16x1xf32>
      %622 = vector.shape_cast %621 : vector<1x16x1xf32> to vector<16x1xf32>
      %623 = vector.shape_cast %620 : vector<16x1xf32> to vector<1x16x1xf32>
      tpu.vector_store %arg6[%c0_385, %c0_386, %c2_387], %623 {strides = array<i32>} : memref<1x16x16xf32, #tpu.memory_space<vmem>>, vector<1x16x1xf32>,
      %c3_388 = arith.constant 3 : index
      %c0_389 = arith.constant 0 : index
      %c0_390 = arith.constant 0 : index
      %624 = vector.load %arg14[%c3_388, %c0_389, %c0_390] : memref<16x16x128xf32, #tpu.memory_space<vmem>>, vector<1x16x128xf32>
      %625 = vector.shape_cast %624 : vector<1x16x128xf32> to vector<16x128xf32>
      %cst_391 = arith.constant dense<0x7F800000> : vector<16xf32>
      %626 = vector.multi_reduction <minimumf>, %625, %cst_391 [1] : vector<16x128xf32> to vector<16xf32>
      %627 = vector.shape_cast %626 : vector<16xf32> to vector<16x1xf32>
      %c0_392 = arith.constant 0 : index
      %c0_393 = arith.constant 0 : index
      %c3_394 = arith.constant 3 : index
      %628 = vector.load %arg6[%c0_392, %c0_393, %c3_394] : memref<1x16x16xf32, #tpu.memory_space<vmem>>, vector<1x16x1xf32>
      %629 = vector.shape_cast %628 : vector<1x16x1xf32> to vector<16x1xf32>
      %630 = vector.shape_cast %627 : vector<16x1xf32> to vector<1x16x1xf32>
      tpu.vector_store %arg6[%c0_392, %c0_393, %c3_394], %630 {strides = array<i32>} : memref<1x16x16xf32, #tpu.memory_space<vmem>>, vector<1x16x1xf32>,
      %c4_395 = arith.constant 4 : index
      %c0_396 = arith.constant 0 : index
      %c0_397 = arith.constant 0 : index
      %631 = vector.load %arg14[%c4_395, %c0_396, %c0_397] : memref<16x16x128xf32, #tpu.memory_space<vmem>>, vector<1x16x128xf32>
      %632 = vector.shape_cast %631 : vector<1x16x128xf32> to vector<16x128xf32>
      %cst_398 = arith.constant dense<0x7F800000> : vector<16xf32>
      %633 = vector.multi_reduction <minimumf>, %632, %cst_398 [1] : vector<16x128xf32> to vector<16xf32>
      %634 = vector.shape_cast %633 : vector<16xf32> to vector<16x1xf32>
      %c0_399 = arith.constant 0 : index
      %c0_400 = arith.constant 0 : index
      %c4_401 = arith.constant 4 : index
      %635 = vector.load %arg6[%c0_399, %c0_400, %c4_401] : memref<1x16x16xf32, #tpu.memory_space<vmem>>, vector<1x16x1xf32>
      %636 = vector.shape_cast %635 : vector<1x16x1xf32> to vector<16x1xf32>
      %637 = vector.shape_cast %634 : vector<16x1xf32> to vector<1x16x1xf32>
      tpu.vector_store %arg6[%c0_399, %c0_400, %c4_401], %637 {strides = array<i32>} : memref<1x16x16xf32, #tpu.memory_space<vmem>>, vector<1x16x1xf32>,
      %c5_402 = arith.constant 5 : index
      %c0_403 = arith.constant 0 : index
      %c0_404 = arith.constant 0 : index
      %638 = vector.load %arg14[%c5_402, %c0_403, %c0_404] : memref<16x16x128xf32, #tpu.memory_space<vmem>>, vector<1x16x128xf32>
      %639 = vector.shape_cast %638 : vector<1x16x128xf32> to vector<16x128xf32>
      %cst_405 = arith.constant dense<0x7F800000> : vector<16xf32>
      %640 = vector.multi_reduction <minimumf>, %639, %cst_405 [1] : vector<16x128xf32> to vector<16xf32>
      %641 = vector.shape_cast %640 : vector<16xf32> to vector<16x1xf32>
      %c0_406 = arith.constant 0 : index
      %c0_407 = arith.constant 0 : index
      %c5_408 = arith.constant 5 : index
      %642 = vector.load %arg6[%c0_406, %c0_407, %c5_408] : memref<1x16x16xf32, #tpu.memory_space<vmem>>, vector<1x16x1xf32>
      %643 = vector.shape_cast %642 : vector<1x16x1xf32> to vector<16x1xf32>
      %644 = vector.shape_cast %641 : vector<16x1xf32> to vector<1x16x1xf32>
      tpu.vector_store %arg6[%c0_406, %c0_407, %c5_408], %644 {strides = array<i32>} : memref<1x16x16xf32, #tpu.memory_space<vmem>>, vector<1x16x1xf32>,
      %c6_409 = arith.constant 6 : index
      %c0_410 = arith.constant 0 : index
      %c0_411 = arith.constant 0 : index
      %645 = vector.load %arg14[%c6_409, %c0_410, %c0_411] : memref<16x16x128xf32, #tpu.memory_space<vmem>>, vector<1x16x128xf32>
      %646 = vector.shape_cast %645 : vector<1x16x128xf32> to vector<16x128xf32>
      %cst_412 = arith.constant dense<0x7F800000> : vector<16xf32>
      %647 = vector.multi_reduction <minimumf>, %646, %cst_412 [1] : vector<16x128xf32> to vector<16xf32>
      %648 = vector.shape_cast %647 : vector<16xf32> to vector<16x1xf32>
      %c0_413 = arith.constant 0 : index
      %c0_414 = arith.constant 0 : index
      %c6_415 = arith.constant 6 : index
      %649 = vector.load %arg6[%c0_413, %c0_414, %c6_415] : memref<1x16x16xf32, #tpu.memory_space<vmem>>, vector<1x16x1xf32>
      %650 = vector.shape_cast %649 : vector<1x16x1xf32> to vector<16x1xf32>
      %651 = vector.shape_cast %648 : vector<16x1xf32> to vector<1x16x1xf32>
      tpu.vector_store %arg6[%c0_413, %c0_414, %c6_415], %651 {strides = array<i32>} : memref<1x16x16xf32, #tpu.memory_space<vmem>>, vector<1x16x1xf32>,
      %c7_416 = arith.constant 7 : index
      %c0_417 = arith.constant 0 : index
      %c0_418 = arith.constant 0 : index
      %652 = vector.load %arg14[%c7_416, %c0_417, %c0_418] : memref<16x16x128xf32, #tpu.memory_space<vmem>>, vector<1x16x128xf32>
      %653 = vector.shape_cast %652 : vector<1x16x128xf32> to vector<16x128xf32>
      %cst_419 = arith.constant dense<0x7F800000> : vector<16xf32>
      %654 = vector.multi_reduction <minimumf>, %653, %cst_419 [1] : vector<16x128xf32> to vector<16xf32>
      %655 = vector.shape_cast %654 : vector<16xf32> to vector<16x1xf32>
      %c0_420 = arith.constant 0 : index
      %c0_421 = arith.constant 0 : index
      %c7_422 = arith.constant 7 : index
      %656 = vector.load %arg6[%c0_420, %c0_421, %c7_422] : memref<1x16x16xf32, #tpu.memory_space<vmem>>, vector<1x16x1xf32>
      %657 = vector.shape_cast %656 : vector<1x16x1xf32> to vector<16x1xf32>
      %658 = vector.shape_cast %655 : vector<16x1xf32> to vector<1x16x1xf32>
      tpu.vector_store %arg6[%c0_420, %c0_421, %c7_422], %658 {strides = array<i32>} : memref<1x16x16xf32, #tpu.memory_space<vmem>>, vector<1x16x1xf32>,
      %c8_423 = arith.constant 8 : index
      %c0_424 = arith.constant 0 : index
      %c0_425 = arith.constant 0 : index
      %659 = vector.load %arg14[%c8_423, %c0_424, %c0_425] : memref<16x16x128xf32, #tpu.memory_space<vmem>>, vector<1x16x128xf32>
      %660 = vector.shape_cast %659 : vector<1x16x128xf32> to vector<16x128xf32>
      %cst_426 = arith.constant dense<0x7F800000> : vector<16xf32>
      %661 = vector.multi_reduction <minimumf>, %660, %cst_426 [1] : vector<16x128xf32> to vector<16xf32>
      %662 = vector.shape_cast %661 : vector<16xf32> to vector<16x1xf32>
      %c0_427 = arith.constant 0 : index
      %c0_428 = arith.constant 0 : index
      %c8_429 = arith.constant 8 : index
      %663 = vector.load %arg6[%c0_427, %c0_428, %c8_429] : memref<1x16x16xf32, #tpu.memory_space<vmem>>, vector<1x16x1xf32>
      %664 = vector.shape_cast %663 : vector<1x16x1xf32> to vector<16x1xf32>
      %665 = vector.shape_cast %662 : vector<16x1xf32> to vector<1x16x1xf32>
      tpu.vector_store %arg6[%c0_427, %c0_428, %c8_429], %665 {strides = array<i32>} : memref<1x16x16xf32, #tpu.memory_space<vmem>>, vector<1x16x1xf32>,
      %c9_430 = arith.constant 9 : index
      %c0_431 = arith.constant 0 : index
      %c0_432 = arith.constant 0 : index
      %666 = vector.load %arg14[%c9_430, %c0_431, %c0_432] : memref<16x16x128xf32, #tpu.memory_space<vmem>>, vector<1x16x128xf32>
      %667 = vector.shape_cast %666 : vector<1x16x128xf32> to vector<16x128xf32>
      %cst_433 = arith.constant dense<0x7F800000> : vector<16xf32>
      %668 = vector.multi_reduction <minimumf>, %667, %cst_433 [1] : vector<16x128xf32> to vector<16xf32>
      %669 = vector.shape_cast %668 : vector<16xf32> to vector<16x1xf32>
      %c0_434 = arith.constant 0 : index
      %c0_435 = arith.constant 0 : index
      %c9_436 = arith.constant 9 : index
      %670 = vector.load %arg6[%c0_434, %c0_435, %c9_436] : memref<1x16x16xf32, #tpu.memory_space<vmem>>, vector<1x16x1xf32>
      %671 = vector.shape_cast %670 : vector<1x16x1xf32> to vector<16x1xf32>
      %672 = vector.shape_cast %669 : vector<16x1xf32> to vector<1x16x1xf32>
      tpu.vector_store %arg6[%c0_434, %c0_435, %c9_436], %672 {strides = array<i32>} : memref<1x16x16xf32, #tpu.memory_space<vmem>>, vector<1x16x1xf32>,
      %c10_437 = arith.constant 10 : index
      %c0_438 = arith.constant 0 : index
      %c0_439 = arith.constant 0 : index
      %673 = vector.load %arg14[%c10_437, %c0_438, %c0_439] : memref<16x16x128xf32, #tpu.memory_space<vmem>>, vector<1x16x128xf32>
      %674 = vector.shape_cast %673 : vector<1x16x128xf32> to vector<16x128xf32>
      %cst_440 = arith.constant dense<0x7F800000> : vector<16xf32>
      %675 = vector.multi_reduction <minimumf>, %674, %cst_440 [1] : vector<16x128xf32> to vector<16xf32>
      %676 = vector.shape_cast %675 : vector<16xf32> to vector<16x1xf32>
      %c0_441 = arith.constant 0 : index
      %c0_442 = arith.constant 0 : index
      %c10_443 = arith.constant 10 : index
      %677 = vector.load %arg6[%c0_441, %c0_442, %c10_443] : memref<1x16x16xf32, #tpu.memory_space<vmem>>, vector<1x16x1xf32>
      %678 = vector.shape_cast %677 : vector<1x16x1xf32> to vector<16x1xf32>
      %679 = vector.shape_cast %676 : vector<16x1xf32> to vector<1x16x1xf32>
      tpu.vector_store %arg6[%c0_441, %c0_442, %c10_443], %679 {strides = array<i32>} : memref<1x16x16xf32, #tpu.memory_space<vmem>>, vector<1x16x1xf32>,
      %c11_444 = arith.constant 11 : index
      %c0_445 = arith.constant 0 : index
      %c0_446 = arith.constant 0 : index
      %680 = vector.load %arg14[%c11_444, %c0_445, %c0_446] : memref<16x16x128xf32, #tpu.memory_space<vmem>>, vector<1x16x128xf32>
      %681 = vector.shape_cast %680 : vector<1x16x128xf32> to vector<16x128xf32>
      %cst_447 = arith.constant dense<0x7F800000> : vector<16xf32>
      %682 = vector.multi_reduction <minimumf>, %681, %cst_447 [1] : vector<16x128xf32> to vector<16xf32>
      %683 = vector.shape_cast %682 : vector<16xf32> to vector<16x1xf32>
      %c0_448 = arith.constant 0 : index
      %c0_449 = arith.constant 0 : index
      %c11_450 = arith.constant 11 : index
      %684 = vector.load %arg6[%c0_448, %c0_449, %c11_450] : memref<1x16x16xf32, #tpu.memory_space<vmem>>, vector<1x16x1xf32>
      %685 = vector.shape_cast %684 : vector<1x16x1xf32> to vector<16x1xf32>
      %686 = vector.shape_cast %683 : vector<16x1xf32> to vector<1x16x1xf32>
      tpu.vector_store %arg6[%c0_448, %c0_449, %c11_450], %686 {strides = array<i32>} : memref<1x16x16xf32, #tpu.memory_space<vmem>>, vector<1x16x1xf32>,
      %c12_451 = arith.constant 12 : index
      %c0_452 = arith.constant 0 : index
      %c0_453 = arith.constant 0 : index
      %687 = vector.load %arg14[%c12_451, %c0_452, %c0_453] : memref<16x16x128xf32, #tpu.memory_space<vmem>>, vector<1x16x128xf32>
      %688 = vector.shape_cast %687 : vector<1x16x128xf32> to vector<16x128xf32>
      %cst_454 = arith.constant dense<0x7F800000> : vector<16xf32>
      %689 = vector.multi_reduction <minimumf>, %688, %cst_454 [1] : vector<16x128xf32> to vector<16xf32>
      %690 = vector.shape_cast %689 : vector<16xf32> to vector<16x1xf32>
      %c0_455 = arith.constant 0 : index
      %c0_456 = arith.constant 0 : index
      %c12_457 = arith.constant 12 : index
      %691 = vector.load %arg6[%c0_455, %c0_456, %c12_457] : memref<1x16x16xf32, #tpu.memory_space<vmem>>, vector<1x16x1xf32>
      %692 = vector.shape_cast %691 : vector<1x16x1xf32> to vector<16x1xf32>
      %693 = vector.shape_cast %690 : vector<16x1xf32> to vector<1x16x1xf32>
      tpu.vector_store %arg6[%c0_455, %c0_456, %c12_457], %693 {strides = array<i32>} : memref<1x16x16xf32, #tpu.memory_space<vmem>>, vector<1x16x1xf32>,
      %c13_458 = arith.constant 13 : index
      %c0_459 = arith.constant 0 : index
      %c0_460 = arith.constant 0 : index
      %694 = vector.load %arg14[%c13_458, %c0_459, %c0_460] : memref<16x16x128xf32, #tpu.memory_space<vmem>>, vector<1x16x128xf32>
      %695 = vector.shape_cast %694 : vector<1x16x128xf32> to vector<16x128xf32>
      %cst_461 = arith.constant dense<0x7F800000> : vector<16xf32>
      %696 = vector.multi_reduction <minimumf>, %695, %cst_461 [1] : vector<16x128xf32> to vector<16xf32>
      %697 = vector.shape_cast %696 : vector<16xf32> to vector<16x1xf32>
      %c0_462 = arith.constant 0 : index
      %c0_463 = arith.constant 0 : index
      %c13_464 = arith.constant 13 : index
      %698 = vector.load %arg6[%c0_462, %c0_463, %c13_464] : memref<1x16x16xf32, #tpu.memory_space<vmem>>, vector<1x16x1xf32>
      %699 = vector.shape_cast %698 : vector<1x16x1xf32> to vector<16x1xf32>
      %700 = vector.shape_cast %697 : vector<16x1xf32> to vector<1x16x1xf32>
      tpu.vector_store %arg6[%c0_462, %c0_463, %c13_464], %700 {strides = array<i32>} : memref<1x16x16xf32, #tpu.memory_space<vmem>>, vector<1x16x1xf32>,
      %c14_465 = arith.constant 14 : index
      %c0_466 = arith.constant 0 : index
      %c0_467 = arith.constant 0 : index
      %701 = vector.load %arg14[%c14_465, %c0_466, %c0_467] : memref<16x16x128xf32, #tpu.memory_space<vmem>>, vector<1x16x128xf32>
      %702 = vector.shape_cast %701 : vector<1x16x128xf32> to vector<16x128xf32>
      %cst_468 = arith.constant dense<0x7F800000> : vector<16xf32>
      %703 = vector.multi_reduction <minimumf>, %702, %cst_468 [1] : vector<16x128xf32> to vector<16xf32>
      %704 = vector.shape_cast %703 : vector<16xf32> to vector<16x1xf32>
      %c0_469 = arith.constant 0 : index
      %c0_470 = arith.constant 0 : index
      %c14_471 = arith.constant 14 : index
      %705 = vector.load %arg6[%c0_469, %c0_470, %c14_471] : memref<1x16x16xf32, #tpu.memory_space<vmem>>, vector<1x16x1xf32>
      %706 = vector.shape_cast %705 : vector<1x16x1xf32> to vector<16x1xf32>
      %707 = vector.shape_cast %704 : vector<16x1xf32> to vector<1x16x1xf32>
      tpu.vector_store %arg6[%c0_469, %c0_470, %c14_471], %707 {strides = array<i32>} : memref<1x16x16xf32, #tpu.memory_space<vmem>>, vector<1x16x1xf32>,
      %c15_472 = arith.constant 15 : index
      %c0_473 = arith.constant 0 : index
      %c0_474 = arith.constant 0 : index
      %708 = vector.load %arg14[%c15_472, %c0_473, %c0_474] : memref<16x16x128xf32, #tpu.memory_space<vmem>>, vector<1x16x128xf32>
      %709 = vector.shape_cast %708 : vector<1x16x128xf32> to vector<16x128xf32>
      %cst_475 = arith.constant dense<0x7F800000> : vector<16xf32>
      %710 = vector.multi_reduction <minimumf>, %709, %cst_475 [1] : vector<16x128xf32> to vector<16xf32>
      %711 = vector.shape_cast %710 : vector<16xf32> to vector<16x1xf32>
      %c0_476 = arith.constant 0 : index
      %c0_477 = arith.constant 0 : index
      %c15_478 = arith.constant 15 : index
      %712 = vector.load %arg6[%c0_476, %c0_477, %c15_478] : memref<1x16x16xf32, #tpu.memory_space<vmem>>, vector<1x16x1xf32>
      %713 = vector.shape_cast %712 : vector<1x16x1xf32> to vector<16x1xf32>
      %714 = vector.shape_cast %711 : vector<16x1xf32> to vector<1x16x1xf32>
      tpu.vector_store %arg6[%c0_476, %c0_477, %c15_478], %714 {strides = array<i32>} : memref<1x16x16xf32, #tpu.memory_space<vmem>>, vector<1x16x1xf32>,
    } else {
    }
    return
  }
  func.func @transform_0(%arg0: i32, %arg1: i32) -> (i32, i32) {
    %c1_i32 = arith.constant 1 : i32
    %0 = arith.muli %arg0, %c1_i32 : i32
    %1 = arith.addi %0, %arg1 : i32
    %c0_i32 = arith.constant 0 : i32
    %c0_i32_0 = arith.constant 0 : i32
    return %c0_i32, %1 : i32, i32
  }
  func.func @transform_1(%arg0: i32, %arg1: i32) -> (i32, i32) {
    %c1_i32 = arith.constant 1 : i32
    %0 = arith.muli %arg0, %c1_i32 : i32
    %1 = arith.addi %0, %arg1 : i32
    %c0_i32 = arith.constant 0 : i32
    %c0_i32_0 = arith.constant 0 : i32
    return %c0_i32, %1 : i32, i32
  }
  func.func @transform_2(%arg0: i32, %arg1: i32) -> (i32, i32, i32) {
    %c0_i32 = arith.constant 0 : i32
    %c0_i32_0 = arith.constant 0 : i32
    %c0_i32_1 = arith.constant 0 : i32
    %c0_i32_2 = arith.constant 0 : i32
    return %c0_i32, %c0_i32_0, %c0_i32_1 : i32, i32, i32
  }
  func.func @transform_3(%arg0: i32, %arg1: i32) -> (i32, i32, i32) {
    %c0_i32 = arith.constant 0 : i32
    %c0_i32_0 = arith.constant 0 : i32
    %c0_i32_1 = arith.constant 0 : i32
    return %arg0, %c0_i32, %c0_i32_0 : i32, i32, i32
  }
  func.func @transform_4(%arg0: i32, %arg1: i32) -> (i32, i32, i32) {
    %c0_i32 = arith.constant 0 : i32
    %c0_i32_0 = arith.constant 0 : i32
    %c0_i32_1 = arith.constant 0 : i32
    return %arg0, %c0_i32, %c0_i32_0 : i32, i32, i32
  }
}

</mosaic_0001>

<llo_original>
// kernel: tpu_custom_call.1
$region0: #{tpu_custom_call.1}
  #allocation0 [shape = 'u32[]', space=smem, size = 0x4, offset = 0x4, fixed_abs, tag = 'smem constant byte address 0x4 - core index']
  #allocation1 [shape = 'u32[72,128]{1,0:T(1,128)}', space=vmem, size = 0x9000, scoped, tag = 'internal scratch']
  #allocation2 [shape = 'f32[16,512]{1,0:T(8,128)}', space=vmem, size = 0x8000, scoped, tag = 'scratch operand']
  #allocation3 [shape = 'f32[16,512]{1,0:T(8,128)}', space=vmem, size = 0x8000, scoped, tag = 'scratch operand']
  #allocation4 [shape = 'f32[16,512]{1,0:T(8,128)}', space=vmem, size = 0x8000, scoped, tag = 'scratch operand']
  #allocation5 [shape = 'f32[16,512]{1,0:T(8,128)}', space=vmem, size = 0x8000, scoped, tag = 'scratch operand']
  #allocation6 [shape = 'f32[16,512]{1,0:T(8,128)}', space=vmem, size = 0x8000, scoped, tag = 'scratch operand']
  #allocation7 [shape = 'f32[16,512]{1,0:T(8,128)}', space=vmem, size = 0x8000, scoped, tag = 'scratch operand']
  #allocation8 [shape = 'f32[16,512]{1,0:T(8,128)}', space=vmem, size = 0x8000, scoped, tag = 'scratch operand']
  #allocation9 [shape = 'f32[16,16,128]{2,1,0:T(8,128)}', space=vmem, size = 0x20000, scoped, tag = 'scratch operand']
  %s0 = inlined_call_operand.hbm [shape: f32[16,1024], index: 0, kind: input, shape index: {}]
  %s1 = inlined_call_operand.hbm [shape: f32[16,1024], index: 1, kind: input, shape index: {}]
  %s2 = inlined_call_operand.hbm [shape: f32[16,16,128], index: 2, kind: input, shape index: {}]
  %s3 = inlined_call_operand.vmem [shape: f32[2,16,8], index: 3, kind: output, shape index: {0}]
  %s4 = inlined_call_operand.hbm [shape: f32[2,16,16], index: 4, kind: output, shape index: {1}]
  %5 = xla_tuple %s3, %s4
  %s6 = sld [smem:[#allocation0]]
  $region77: #{tpu_custom_call.1} parent=0
    _
  %s8 = ssub.s32 1, %s6
  %s9 = scalar_select 0, %s8, %s6
  $region1: #{tpu_custom_call.1} parent=0
    #allocation10 [shape = 'u8[65536]{0}', space=vmem, size = 0x10000, scoped, tag = 'input window, operand 0']
    #allocation11 [shape = 's32[2]{0}', space=sflag, size = 0x8, scoped, tag = 'scoped memory for tpu_custom_call.1']
    #allocation12 [shape = 's32[2]{0}', space=sflag, size = 0x8, scoped, tag = 'scoped memory for tpu_custom_call.1']
    #allocation13 [shape = 'u8[65536]{0}', space=vmem, size = 0x10000, scoped, tag = 'input window, operand 1']
    #allocation14 [shape = 's32[2]{0}', space=sflag, size = 0x8, scoped, tag = 'scoped memory for tpu_custom_call.1']
    #allocation15 [shape = 'u8[131072]{0}', space=vmem, size = 0x20000, scoped, tag = 'input window, operand 2, single buffered']
    #allocation16 [shape = 'u8[16384]{0}', space=vmem, size = 0x4000, scoped, tag = 'output window, operand 1']
    %10 = vsyncpa [#allocation11], 0
    %s11 = scalar_lea.sflag [#allocation11], 1
    %12 = vsyncpa %s11, 0
    %13 = vsyncpa [#allocation14], 0
    %s14 = scalar_lea.sflag [#allocation14], 1
    %15 = vsyncpa %s14, 0
    %16 = vsyncpa [#allocation12], 0
    %s17 = scalar_lea.sflag [#allocation12], 1
    %18 = vsyncpa %s17, 0
    loop: start=0, step=1, limit=4
    $region2: #{tpu_custom_call.1} parent=1 // loop_pre_header
      _
    $region3: #{tpu_custom_call.1} parent=1 // loop_header
      %s20 = sphi 0, %s24
      %p21 = scmp.ge.s32.totalorder %s20, 4
      %s27 = sphi 0, %s39
      %s28 = sphi 0, %s35
      %s29 = sphi 0, %s27
      %s30 = sphi 0, %s28
      %s31 = sphi 0, %s29
      %s32 = sphi 0, %s30
      %s44 = sphi 0, %s46
      %s47 = sphi 0, %s44
      %s48 = sphi 0, %s47
      %s64 = sphi 0, %s48
      %s72 = sphi 0, %s74
      %s75 = sphi 0, %s72
      %s76 = sphi 0, %s75
      %s92 = sphi 0, %s76
      %s96 = sphi 0, %s96
      %s98 = sphi 0, %s96
      %s99 = sphi 0, %s98
      %s113 = sphi 0, %s99
      %s119 = sphi 0, %s121
      %s122 = sphi 0, %s119
      %s123 = sphi 0, %s122
      %s139 = sphi 0, %s123
      %s145 = sphi 0, %s147
      %s148 = sphi 0, %s145
      %s149 = sphi 0, %s148
      %s165 = sphi 0, %s149
    $region4: #{tpu_custom_call.1} parent=1 // loop_header_branch
      %23 = sbr.rel (%p21) target = $region8
    $region5: #{tpu_custom_call.1} parent=1 // loop_body
      %s25 = ssub.s32 %s20, 1
      %s26 = ssub.s32 %s20, 2
      %s33 = sadd.s32 1, %s28
      %p34 = scmp.ge.s32.totalorder %s33, 1
      %s35 = scalar_select %p34, 0, %s33
      %s36 = sadd.s32 1, %s27
      %s37 = scalar_select %p34, %s36, %s27
      %p38 = scmp.ge.s32.totalorder %s37, 2
      %s39 = scalar_select %p38, 0, %s37
      %s40 = sadd.s32 %s27, %s28
      %s41 = sadd.s32 %s39, %s35
      %s42 = ssub.s32 %s40, %s41
      %p43 = scmp.eq.s32.totalorder %s42, 0
      %s45 = sadd.s32 %s44, 1
      %s46 = scalar_select %p43, %s44, %s45
      %p49 = pneg %p43
      %p50 = scmp.eq.s32.totalorder %s20, 1
      %p51 = por %p49, %p50
      %p52 = scmp.ne.s32.totalorder %s44, %s47
      %p53 = scmp.eq.s32.totalorder %s20, 0
      %p54 = por %p52, %p53
      %p55 = scmp.ne.s32.totalorder %s44, %s47
      %p56 = scmp.eq.s32.totalorder %s25, 1
      %p57 = por %p55, %p56
      %p58 = scmp.ne.s32.totalorder %s47, %s48
      %p59 = scmp.eq.s32.totalorder %s25, 0
      %p60 = por %p58, %p59
      %p61 = scmp.ne.s32.totalorder %s47, %s48
      %p62 = scmp.eq.s32.totalorder %s26, 1
      %p63 = por %p61, %p62
      %p65 = scmp.ne.s32.totalorder %s48, %s64
      %p66 = scmp.eq.s32.totalorder %s26, 0
      %p67 = por %p65, %p66
      %s68 = sadd.s32 %s27, %s28
      %s69 = sadd.s32 %s39, %s35
      %s70 = ssub.s32 %s68, %s69
      %p71 = scmp.eq.s32.totalorder %s70, 0
      %s73 = sadd.s32 %s72, 1
      %s74 = scalar_select %p71, %s72, %s73
      %p77 = pneg %p71
      %p78 = scmp.eq.s32.totalorder %s20, 1
      %p79 = por %p77, %p78
      %p80 = scmp.ne.s32.totalorder %s72, %s75
      %p81 = scmp.eq.s32.totalorder %s20, 0
      %p82 = por %p80, %p81
      %p83 = scmp.ne.s32.totalorder %s72, %s75
      %p84 = scmp.eq.s32.totalorder %s25, 1
      %p85 = por %p83, %p84
      %p86 = scmp.ne.s32.totalorder %s75, %s76
      %p87 = scmp.eq.s32.totalorder %s25, 0
      %p88 = por %p86, %p87
      %p89 = scmp.ne.s32.totalorder %s75, %s76
      %p90 = scmp.eq.s32.totalorder %s26, 1
      %p91 = por %p89, %p90
      %p93 = scmp.ne.s32.totalorder %s76, %s92
      %p94 = scmp.eq.s32.totalorder %s26, 0
      %p95 = por %p93, %p94
      %s97 = sadd.s32 %s96, 1
      %p100 = scmp.eq.s32.totalorder %s20, 1
      %p101 = scmp.ne.s32.totalorder %s96, %s98
      %p102 = scmp.eq.s32.totalorder %s20, 0
      %p103 = por %p101, %p102
      %p104 = scmp.ne.s32.totalorder %s96, %s98
      %p105 = scmp.eq.s32.totalorder %s25, 1
      %p106 = por %p104, %p105
      %p107 = scmp.ne.s32.totalorder %s98, %s99
      %p108 = scmp.eq.s32.totalorder %s25, 0
      %p109 = por %p107, %p108
      %p110 = scmp.ne.s32.totalorder %s98, %s99
      %p111 = scmp.eq.s32.totalorder %s26, 1
      %p112 = por %p110, %p111
      %p114 = scmp.ne.s32.totalorder %s99, %s113
      %p115 = scmp.eq.s32.totalorder %s26, 0
      %p116 = por %p114, %p115
      %s117 = ssub.s32 %s27, %s39
      %p118 = scmp.eq.s32.totalorder %s117, 0
      %s120 = sadd.s32 %s119, 1
      %s121 = scalar_select %p118, %s119, %s120
      %p124 = pneg %p118
      %p125 = scmp.eq.s32.totalorder %s20, 1
      %p126 = por %p124, %p125
      %p127 = scmp.ne.s32.totalorder %s119, %s122
      %p128 = scmp.eq.s32.totalorder %s20, 0
      %p129 = por %p127, %p128
      %p130 = scmp.ne.s32.totalorder %s119, %s122
      %p131 = scmp.eq.s32.totalorder %s25, 1
      %p132 = por %p130, %p131
      %p133 = scmp.ne.s32.totalorder %s122, %s123
      %p134 = scmp.eq.s32.totalorder %s25, 0
      %p135 = por %p133, %p134
      %p136 = scmp.ne.s32.totalorder %s122, %s123
      %p137 = scmp.eq.s32.totalorder %s26, 1
      %p138 = por %p136, %p137
      %p140 = scmp.ne.s32.totalorder %s123, %s139
      %p141 = scmp.eq.s32.totalorder %s26, 0
      %p142 = por %p140, %p141
      %s143 = ssub.s32 %s27, %s39
      %p144 = scmp.eq.s32.totalorder %s143, 0
      %s146 = sadd.s32 %s145, 1
      %s147 = scalar_select %p144, %s145, %s146
      %p150 = pneg %p144
      %p151 = scmp.eq.s32.totalorder %s20, 1
      %p152 = por %p150, %p151
      %p153 = scmp.ne.s32.totalorder %s145, %s148
      %p154 = scmp.eq.s32.totalorder %s20, 0
      %p155 = por %p153, %p154
      %p156 = scmp.ne.s32.totalorder %s145, %s148
      %p157 = scmp.eq.s32.totalorder %s25, 1
      %p158 = por %p156, %p157
      %p159 = scmp.ne.s32.totalorder %s148, %s149
      %p160 = scmp.eq.s32.totalorder %s25, 0
      %p161 = por %p159, %p160
      %p162 = scmp.ne.s32.totalorder %s148, %s149
      %p163 = scmp.eq.s32.totalorder %s26, 1
      %p164 = por %p162, %p163
      %p166 = scmp.ne.s32.totalorder %s149, %s165
      %p167 = scmp.eq.s32.totalorder %s26, 0
      %p168 = por %p166, %p167
      %p169 = scmp.le.s32.totalorder 1, %s20
      %p170 = scmp.lt.s32.totalorder %s20, 3
      %p171 = pnand %p169, %p170
      %p172 = pneg %p171
      // Predicated region
      $region9: #{tpu_custom_call.1} parent=5 // pred_check
        _
      $region10: #{tpu_custom_call.1} parent=5 // pred_check_branch
        %174 = sbr.rel (%p171) target = $region12
      $region11: #{tpu_custom_call.1} parent=5 // pred_region
        %s175 = ssub.s32 %s20, 1
        // Predicated region
        $region13: #{tpu_custom_call.1} parent=11 // pred_check
          %p176 = pneg %p109
        $region14: #{tpu_custom_call.1} parent=11 // pred_check_branch
          %178 = sbr.rel (%p176) target = $region16
        $region15: #{tpu_custom_call.1} parent=11 // pred_region
          %180 = vsyncadd [#allocation14], 0
          %s181 = sshll.u32 %s2, 4
          %s182 = int_to_ptr.hbm [resolvable:$true] %s181
          %s183 = sshll.u32 [#allocation15], 4
          %s184 = int_to_ptr.vmem [resolvable:$true] %s183
          %189 = dma.hbm_to_vmem [thread:$0]  %s182, 4096, %s184, [#allocation14], 128, 128, 8
        $region16: #{tpu_custom_call.1} parent=11 // pred_fallthru
          _
      $region12: #{tpu_custom_call.1} parent=5 // pred_fallthru
        _
      %p190 = scmp.lt.s32.totalorder %s20, 2
      // Predicated region
      $region17: #{tpu_custom_call.1} parent=5 // pred_check
        %p191 = pneg %p190
      $region18: #{tpu_custom_call.1} parent=5 // pred_check_branch
        %193 = sbr.rel (%p191) target = $region20
      $region19: #{tpu_custom_call.1} parent=5 // pred_region
        // Predicated region
        $region21: #{tpu_custom_call.1} parent=19 // pred_check
          %p194 = pneg %p54
        $region22: #{tpu_custom_call.1} parent=19 // pred_check_branch
          %196 = sbr.rel (%p194) target = $region24
        $region23: #{tpu_custom_call.1} parent=19 // pred_region
          %s197 = sand.u32 %s44, 1
          %s198 = scalar_lea.sflag [#allocation11], %s197
          %s199 = sand.u32 %s44, 1
          %s200 = smul.addr %s199, 64
          %s201 = scalar_lea.vmem [#allocation10], %s200
          %s202 = sadd.s32 %s27, %s28
          %s203 = smul.u32 4, %s202
          %205 = vsyncadd %s198, 0
          %s206 = smul.addr %s203, 8
          %s207 = scalar_lea.hbm %s0, %s206
          %s208 = sshll.u32 %s207, 4
          %s209 = int_to_ptr.hbm [resolvable:$true] %s208
          %s210 = sshll.u32 %s201, 4
          %s211 = int_to_ptr.vmem [resolvable:$true] %s210
          %216 = dma.hbm_to_vmem [thread:$0]  %s209, 1024, %s211, %s198, 1024, 512, 32
        $region24: #{tpu_custom_call.1} parent=19 // pred_fallthru
          _
        // Predicated region
        $region25: #{tpu_custom_call.1} parent=19 // pred_check
          %p217 = pneg %p82
        $region26: #{tpu_custom_call.1} parent=19 // pred_check_branch
          %219 = sbr.rel (%p217) target = $region28
        $region27: #{tpu_custom_call.1} parent=19 // pred_region
          %s220 = sand.u32 %s20, 1
          %s221 = scalar_lea.sflag [#allocation14], %s220
          %s222 = sand.u32 %s72, 1
          %s223 = smul.addr %s222, 64
          %s224 = scalar_lea.vmem [#allocation13], %s223
          %s225 = sadd.s32 %s27, %s28
          %s226 = smul.u32 4, %s225
          %228 = vsyncadd %s221, 0
          %s229 = smul.addr %s226, 8
          %s230 = scalar_lea.hbm %s1, %s229
          %s231 = sshll.u32 %s230, 4
          %s232 = int_to_ptr.hbm [resolvable:$true] %s231
          %s233 = sshll.u32 %s224, 4
          %s234 = int_to_ptr.vmem [resolvable:$true] %s233
          %239 = dma.hbm_to_vmem [thread:$0]  %s232, 1024, %s234, %s221, 1024, 512, 32
        $region28: #{tpu_custom_call.1} parent=19 // pred_fallthru
          _
      $region20: #{tpu_custom_call.1} parent=5 // pred_fallthru
        _
      %p240 = scmp.le.s32.totalorder 1, %s20
      %p241 = scmp.lt.s32.totalorder %s20, 3
      %p242 = pnand %p240, %p241
      %p243 = pneg %p242
      // Predicated region
      $region29: #{tpu_custom_call.1} parent=5 // pred_check
        _
      $region30: #{tpu_custom_call.1} parent=5 // pred_check_branch
        %245 = sbr.rel (%p242) target = $region32
      $region31: #{tpu_custom_call.1} parent=5 // pred_region
        %s246 = ssub.s32 %s20, 1
        %s247 = sand.u32 %s47, 1
        %s248 = scalar_lea.sflag [#allocation11], %s247
        %s249 = sand.u32 %s47, 1
        %s250 = smul.addr %s249, 64
        %s251 = scalar_lea.vmem [#allocation10], %s250
        // Predicated region
        $region33: #{tpu_custom_call.1} parent=31 // pred_check
          %p252 = pneg %p60
        $region34: #{tpu_custom_call.1} parent=31 // pred_check_branch
          %254 = sbr.rel (%p252) target = $region36
        $region35: #{tpu_custom_call.1} parent=31 // pred_region
          %256 = dma.done %s248, 1024
        $region36: #{tpu_custom_call.1} parent=31 // pred_fallthru
          _
        %s257 = sand.u32 %s25, 1
        %s258 = scalar_lea.sflag [#allocation14], %s257
        %s259 = sand.u32 %s75, 1
        %s260 = smul.addr %s259, 64
        %s261 = scalar_lea.vmem [#allocation13], %s260
        // Predicated region
        $region37: #{tpu_custom_call.1} parent=31 // pred_check
          %p262 = pneg %p88
        $region38: #{tpu_custom_call.1} parent=31 // pred_check_branch
          %264 = sbr.rel (%p262) target = $region40
        $region39: #{tpu_custom_call.1} parent=31 // pred_region
          %266 = dma.done %s258, 1024
        $region40: #{tpu_custom_call.1} parent=31 // pred_fallthru
          _
        // Predicated region
        $region41: #{tpu_custom_call.1} parent=31 // pred_check
          %p267 = pneg %p109
        $region42: #{tpu_custom_call.1} parent=31 // pred_check_branch
          %269 = sbr.rel (%p267) target = $region44
        $region43: #{tpu_custom_call.1} parent=31 // pred_region
          %271 = dma.done [#allocation14], 4096
        $region44: #{tpu_custom_call.1} parent=31 // pred_fallthru
          _
        %s272 = sand.u32 %s47, 1
        %s273 = scalar_lea.sflag [#allocation11], %s272
        %s274 = sand.u32 %s47, 1
        %s275 = smul.addr %s274, 64
        %s276 = scalar_lea.vmem [#allocation10], %s275
        %p277 = pneg %p60
        %p278 = pneg %p57
        %s279 = sand.u32 %s25, 1
        %s280 = scalar_lea.sflag [#allocation14], %s279
        %s281 = sand.u32 %s75, 1
        %s282 = smul.addr %s281, 64
        %s283 = scalar_lea.vmem [#allocation13], %s282
        %p284 = pneg %p88
        %p285 = pneg %p85
        %p286 = pneg %p109
        %p287 = pneg %p106
        %p288 = pneg %p135
        %p289 = pneg %p132
        %p290 = scmp.lt.s32.totalorder %s29, 1
        %s291 = scalar_select %p290, %s29, 1
        %s292 = smul.addr %s291, 2
        %s293 = smul.addr %s292, 8
        %s294 = scalar_lea.vmem %s3, %s293
        %p295 = pneg %p161
        %p296 = pneg %p158
        %s297 = sand.u32 %s148, 1
        %s298 = scalar_lea.sflag [#allocation12], %s297
        %s299 = sand.u32 %s148, 1
        %s300 = smul.addr %s299, 16
        %s301 = scalar_lea.vmem [#allocation16], %s300
        %s302 = sadd.s32 %s29, %s30
        %s303 = smul.u32 4, %s302
        %s304 = sadd.s32 %s29, %s30
        %s305 = smul.u32 4, %s304
        %p306 = scmp.lt.s32.totalorder %s29, 1
        %s307 = scalar_select %p306, %s29, 1
        %s308 = smul.addr %s307, 2
        %s309 = smul.addr %s308, 8
        %s310 = scalar_lea.vmem %s3, %s309
        %s311 = sadd.s32 %s29, %s30
        %p312 = scmp.eq.s32.totalorder %s30, 0
        // Predicated region
        $region45: #{tpu_custom_call.1} parent=31 // pred_check
          %p313 = pneg %p312
        $region46: #{tpu_custom_call.1} parent=31 // pred_check_branch
          %315 = sbr.rel (%p313) target = $region48
        $region47: #{tpu_custom_call.1} parent=31 // pred_region
          %316 = vst [vmem:[#allocation2] sm:$0xff] 0.0
          %317 = vst [vmem:[#allocation2 + $0x8] sm:$0xff] 0.0
          %318 = vst [vmem:[#allocation2 + $0x10] sm:$0xff] 0.0
          %319 = vst [vmem:[#allocation2 + $0x18] sm:$0xff] 0.0
          %320 = vst [vmem:[#allocation2 + $0x20] sm:$0xff] 0.0
          %321 = vst [vmem:[#allocation2 + $0x28] sm:$0xff] 0.0
          %322 = vst [vmem:[#allocation2 + $0x30] sm:$0xff] 0.0
          %323 = vst [vmem:[#allocation2 + $0x38] sm:$0xff] 0.0
          %324 = vst [vmem:[#allocation3] sm:$0xff] 0.0
          %325 = vst [vmem:[#allocation3 + $0x8] sm:$0xff] 0.0
          %326 = vst [vmem:[#allocation3 + $0x10] sm:$0xff] 0.0
          %327 = vst [vmem:[#allocation3 + $0x18] sm:$0xff] 0.0
          %328 = vst [vmem:[#allocation3 + $0x20] sm:$0xff] 0.0
          %329 = vst [vmem:[#allocation3 + $0x28] sm:$0xff] 0.0
          %330 = vst [vmem:[#allocation3 + $0x30] sm:$0xff] 0.0
          %331 = vst [vmem:[#allocation3 + $0x38] sm:$0xff] 0.0
          %332 = vst [vmem:[#allocation4] sm:$0xff] 0.0
          %333 = vst [vmem:[#allocation4 + $0x8] sm:$0xff] 0.0
          %334 = vst [vmem:[#allocation4 + $0x10] sm:$0xff] 0.0
          %335 = vst [vmem:[#allocation4 + $0x18] sm:$0xff] 0.0
          %336 = vst [vmem:[#allocation4 + $0x20] sm:$0xff] 0.0
          %337 = vst [vmem:[#allocation4 + $0x28] sm:$0xff] 0.0
          %338 = vst [vmem:[#allocation4 + $0x30] sm:$0xff] 0.0
          %339 = vst [vmem:[#allocation4 + $0x38] sm:$0xff] 0.0
          %340 = vst [vmem:[#allocation5] sm:$0xff] 0.0
          %341 = vst [vmem:[#allocation5 + $0x8] sm:$0xff] 0.0
          %342 = vst [vmem:[#allocation5 + $0x10] sm:$0xff] 0.0
          %343 = vst [vmem:[#allocation5 + $0x18] sm:$0xff] 0.0
          %344 = vst [vmem:[#allocation5 + $0x20] sm:$0xff] 0.0
          %345 = vst [vmem:[#allocation5 + $0x28] sm:$0xff] 0.0
          %346 = vst [vmem:[#allocation5 + $0x30] sm:$0xff] 0.0
          %347 = vst [vmem:[#allocation5 + $0x38] sm:$0xff] 0.0
          %348 = vst [vmem:[#allocation6] sm:$0xff] 0.0
          %349 = vst [vmem:[#allocation6 + $0x8] sm:$0xff] 0.0
          %350 = vst [vmem:[#allocation6 + $0x10] sm:$0xff] 0.0
          %351 = vst [vmem:[#allocation6 + $0x18] sm:$0xff] 0.0
          %352 = vst [vmem:[#allocation6 + $0x20] sm:$0xff] 0.0
          %353 = vst [vmem:[#allocation6 + $0x28] sm:$0xff] 0.0
          %354 = vst [vmem:[#allocation6 + $0x30] sm:$0xff] 0.0
          %355 = vst [vmem:[#allocation6 + $0x38] sm:$0xff] 0.0
          %356 = vst [vmem:[#allocation7] sm:$0xff] -1e+30
          %357 = vst [vmem:[#allocation7 + $0x8] sm:$0xff] -1e+30
          %358 = vst [vmem:[#allocation7 + $0x10] sm:$0xff] -1e+30
          %359 = vst [vmem:[#allocation7 + $0x18] sm:$0xff] -1e+30
          %360 = vst [vmem:[#allocation7 + $0x20] sm:$0xff] -1e+30
          %361 = vst [vmem:[#allocation7 + $0x28] sm:$0xff] -1e+30
          %362 = vst [vmem:[#allocation7 + $0x30] sm:$0xff] -1e+30
          %363 = vst [vmem:[#allocation7 + $0x38] sm:$0xff] -1e+30
          %364 = vst [vmem:[#allocation8] sm:$0xff] 1e+30
          %365 = vst [vmem:[#allocation8 + $0x8] sm:$0xff] 1e+30
          %366 = vst [vmem:[#allocation8 + $0x10] sm:$0xff] 1e+30
          %367 = vst [vmem:[#allocation8 + $0x18] sm:$0xff] 1e+30
          %368 = vst [vmem:[#allocation8 + $0x20] sm:$0xff] 1e+30
          %369 = vst [vmem:[#allocation8 + $0x28] sm:$0xff] 1e+30
          %370 = vst [vmem:[#allocation8 + $0x30] sm:$0xff] 1e+30
          %371 = vst [vmem:[#allocation8 + $0x38] sm:$0xff] 1e+30
          %372 = vst [vmem:[#allocation9] sm:$0xff] 1e+30
          %373 = vst [vmem:[#allocation9 + $0x8] sm:$0xff] 1e+30
          %374 = vst [vmem:[#allocation9 + $0x10] sm:$0xff] 1e+30
          %375 = vst [vmem:[#allocation9 + $0x18] sm:$0xff] 1e+30
          %376 = vst [vmem:[#allocation9 + $0x20] sm:$0xff] 1e+30
          %377 = vst [vmem:[#allocation9 + $0x28] sm:$0xff] 1e+30
          %378 = vst [vmem:[#allocation9 + $0x30] sm:$0xff] 1e+30
          %379 = vst [vmem:[#allocation9 + $0x38] sm:$0xff] 1e+30
          %380 = vst [vmem:[#allocation9 + $0x40] sm:$0xff] 1e+30
          %381 = vst [vmem:[#allocation9 + $0x48] sm:$0xff] 1e+30
          %382 = vst [vmem:[#allocation9 + $0x50] sm:$0xff] 1e+30
          %383 = vst [vmem:[#allocation9 + $0x58] sm:$0xff] 1e+30
          %384 = vst [vmem:[#allocation9 + $0x60] sm:$0xff] 1e+30
          %385 = vst [vmem:[#allocation9 + $0x68] sm:$0xff] 1e+30
          %386 = vst [vmem:[#allocation9 + $0x70] sm:$0xff] 1e+30
          %387 = vst [vmem:[#allocation9 + $0x78] sm:$0xff] 1e+30
          %388 = vst [vmem:[#allocation9 + $0x80] sm:$0xff] 1e+30
          %389 = vst [vmem:[#allocation9 + $0x88] sm:$0xff] 1e+30
          %390 = vst [vmem:[#allocation9 + $0x90] sm:$0xff] 1e+30
          %391 = vst [vmem:[#allocation9 + $0x98] sm:$0xff] 1e+30
          %392 = vst [vmem:[#allocation9 + $0xa0] sm:$0xff] 1e+30
          %393 = vst [vmem:[#allocation9 + $0xa8] sm:$0xff] 1e+30
          %394 = vst [vmem:[#allocation9 + $0xb0] sm:$0xff] 1e+30
          %395 = vst [vmem:[#allocation9 + $0xb8] sm:$0xff] 1e+30
          %396 = vst [vmem:[#allocation9 + $0xc0] sm:$0xff] 1e+30
          %397 = vst [vmem:[#allocation9 + $0xc8] sm:$0xff] 1e+30
          %398 = vst [vmem:[#allocation9 + $0xd0] sm:$0xff] 1e+30
          %399 = vst [vmem:[#allocation9 + $0xd8] sm:$0xff] 1e+30
          %400 = vst [vmem:[#allocation9 + $0xe0] sm:$0xff] 1e+30
          %401 = vst [vmem:[#allocation9 + $0xe8] sm:$0xff] 1e+30
          %402 = vst [vmem:[#allocation9 + $0xf0] sm:$0xff] 1e+30
          %403 = vst [vmem:[#allocation9 + $0xf8] sm:$0xff] 1e+30
        $region48: #{tpu_custom_call.1} parent=31 // pred_fallthru
          _
        %v404 = vld [vmem:[%s251] sm:$0xff]
        %v405 = vld [vmem:[%s251 + $0x8] sm:$0xff]
        %v406 = vld [vmem:[%s251 + $0x10] sm:$0xff]
        %v407 = vld [vmem:[%s251 + $0x18] sm:$0xff]
        %v408 = vld [vmem:[%s251 + $0x20] sm:$0xff]
        %v409 = vld [vmem:[%s251 + $0x28] sm:$0xff]
        %v410 = vld [vmem:[%s251 + $0x30] sm:$0xff]
        %v411 = vld [vmem:[%s251 + $0x38] sm:$0xff]
        %v412 = vld [vmem:[%s261] sm:$0xff]
        %v413 = vld [vmem:[%s261 + $0x8] sm:$0xff]
        %v414 = vld [vmem:[%s261 + $0x10] sm:$0xff]
        %v415 = vld [vmem:[%s261 + $0x18] sm:$0xff]
        %v416 = vld [vmem:[%s261 + $0x20] sm:$0xff]
        %v417 = vld [vmem:[%s261 + $0x28] sm:$0xff]
        %v418 = vld [vmem:[%s261 + $0x30] sm:$0xff]
        %v419 = vld [vmem:[%s261 + $0x38] sm:$0xff]
        %vm420 = vcmp.ge.f32.partialorder %v404, 0.01
        %vm421 = vcmp.ge.f32.partialorder %v405, 0.01
        %vm422 = vcmp.ge.f32.partialorder %v406, 0.01
        %vm423 = vcmp.ge.f32.partialorder %v407, 0.01
        %vm424 = vcmp.ge.f32.partialorder %v408, 0.01
        %vm425 = vcmp.ge.f32.partialorder %v409, 0.01
        %vm426 = vcmp.ge.f32.partialorder %v410, 0.01
        %vm427 = vcmp.ge.f32.partialorder %v411, 0.01
        %vm428 = vcmp.ge.f32.partialorder %v412, 0.01
        %vm429 = vcmp.ge.f32.partialorder %v413, 0.01
        %vm430 = vcmp.ge.f32.partialorder %v414, 0.01
        %vm431 = vcmp.ge.f32.partialorder %v415, 0.01
        %vm432 = vcmp.ge.f32.partialorder %v416, 0.01
        %vm433 = vcmp.ge.f32.partialorder %v417, 0.01
        %vm434 = vcmp.ge.f32.partialorder %v418, 0.01
        %vm435 = vcmp.ge.f32.partialorder %v419, 0.01
        %vm436 = vmand %vm420, %vm428
        %vm437 = vmand %vm421, %vm429
        %vm438 = vmand %vm422, %vm430
        %vm439 = vmand %vm423, %vm431
        %vm440 = vmand %vm424, %vm432
        %vm441 = vmand %vm425, %vm433
        %vm442 = vmand %vm426, %vm434
        %vm443 = vmand %vm427, %vm435
        %v444 = vsel %vm436, 1, 0
        %v445 = vsel %vm437, 1, 0
        %v446 = vsel %vm438, 1, 0
        %v447 = vsel %vm439, 1, 0
        %v448 = vsel %vm440, 1, 0
        %v449 = vsel %vm441, 1, 0
        %v450 = vsel %vm442, 1, 0
        %v451 = vsel %vm443, 1, 0
        %v452 = vcvt.s32.f32 %v444
        %v453 = vcvt.s32.f32 %v445
        %v454 = vcvt.s32.f32 %v446
        %v455 = vcvt.s32.f32 %v447
        %v456 = vcvt.s32.f32 %v448
        %v457 = vcvt.s32.f32 %v449
        %v458 = vcvt.s32.f32 %v450
        %v459 = vcvt.s32.f32 %v451
        %v460 = vadd.f32 %v404, 0.01
        %v461 = vadd.f32 %v405, 0.01
        %v462 = vadd.f32 %v406, 0.01
        %v463 = vadd.f32 %v407, 0.01
        %v464 = vadd.f32 %v408, 0.01
        %v465 = vadd.f32 %v409, 0.01
        %v466 = vadd.f32 %v410, 0.01
        %v467 = vadd.f32 %v411, 0.01
        %v468 = vsel %vm436, %v460, 1.0
        %v469 = vsel %vm437, %v461, 1.0
        %v470 = vsel %vm438, %v462, 1.0
        %v471 = vsel %vm439, %v463, 1.0
        %v472 = vsel %vm440, %v464, 1.0
        %v473 = vsel %vm441, %v465, 1.0
        %v474 = vsel %vm442, %v466, 1.0
        %v475 = vsel %vm443, %v467, 1.0
        %v476 = vadd.f32 %v412, 0.01
        %v477 = vadd.f32 %v413, 0.01
        %v478 = vadd.f32 %v414, 0.01
        %v479 = vadd.f32 %v415, 0.01
        %v480 = vadd.f32 %v416, 0.01
        %v481 = vadd.f32 %v417, 0.01
        %v482 = vadd.f32 %v418, 0.01
        %v483 = vadd.f32 %v419, 0.01
        %v484 = vsel %vm436, %v476, 1.0
        %v485 = vsel %vm437, %v477, 1.0
        %v486 = vsel %vm438, %v478, 1.0
        %v487 = vsel %vm439, %v479, 1.0
        %v488 = vsel %vm440, %v480, 1.0
        %v489 = vsel %vm441, %v481, 1.0
        %v490 = vsel %vm442, %v482, 1.0
        %v491 = vsel %vm443, %v483, 1.0
        %v492 = vrcp.pop %v484
        %v493 = vmul.f32 %v484, %v492
        %v494 = vsub.f32 1.0, %v493
        %v495 = vmul.f32 %v492, %v494
        %v496 = vadd.f32 %v492, %v495
        %vm497 = vweird.f32 %v484
        %vm498 = vweird.f32 %v492
        %vm499 = vmor %vm497, %vm498
        %v500 = vsel %vm499, %v492, %v496
        %v501 = vand.u32 2147483647, %v484
        %vm502 = vcmp.eq.f32.partialorder %v501, 8.507059e+37
        %v503 = vand.u32 %v484, 2147483648
        %v504 = vor.u32 1.1754944e-38, %v503
        %v505 = vsel %vm502, %v504, %v500
        %v506 = vmul.f32 %v468, %v505
        %v507 = vrcp.pop %v485
        %v508 = vmul.f32 %v485, %v507
        %v509 = vsub.f32 1.0, %v508
        %v510 = vmul.f32 %v507, %v509
        %v511 = vadd.f32 %v507, %v510
        %vm512 = vweird.f32 %v485
        %vm513 = vweird.f32 %v507
        %vm514 = vmor %vm512, %vm513
        %v515 = vsel %vm514, %v507, %v511
        %v516 = vand.u32 2147483647, %v485
        %vm517 = vcmp.eq.f32.partialorder %v516, 8.507059e+37
        %v518 = vand.u32 %v485, 2147483648
        %v519 = vor.u32 1.1754944e-38, %v518
        %v520 = vsel %vm517, %v519, %v515
        %v521 = vmul.f32 %v469, %v520
        %v522 = vrcp.pop %v486
        %v523 = vmul.f32 %v486, %v522
        %v524 = vsub.f32 1.0, %v523
        %v525 = vmul.f32 %v522, %v524
        %v526 = vadd.f32 %v522, %v525
        %vm527 = vweird.f32 %v486
        %vm528 = vweird.f32 %v522
        %vm529 = vmor %vm527, %vm528
        %v530 = vsel %vm529, %v522, %v526
        %v531 = vand.u32 2147483647, %v486
        %vm532 = vcmp.eq.f32.partialorder %v531, 8.507059e+37
        %v533 = vand.u32 %v486, 2147483648
        %v534 = vor.u32 1.1754944e-38, %v533
        %v535 = vsel %vm532, %v534, %v530
        %v536 = vmul.f32 %v470, %v535
        %v537 = vrcp.pop %v487
        %v538 = vmul.f32 %v487, %v537
        %v539 = vsub.f32 1.0, %v538
        %v540 = vmul.f32 %v537, %v539
        %v541 = vadd.f32 %v537, %v540
        %vm542 = vweird.f32 %v487
        %vm543 = vweird.f32 %v537
        %vm544 = vmor %vm542, %vm543
        %v545 = vsel %vm544, %v537, %v541
        %v546 = vand.u32 2147483647, %v487
        %vm547 = vcmp.eq.f32.partialorder %v546, 8.507059e+37
        %v548 = vand.u32 %v487, 2147483648
        %v549 = vor.u32 1.1754944e-38, %v548
        %v550 = vsel %vm547, %v549, %v545
        %v551 = vmul.f32 %v471, %v550
        %v552 = vrcp.pop %v488
        %v553 = vmul.f32 %v488, %v552
        %v554 = vsub.f32 1.0, %v553
        %v555 = vmul.f32 %v552, %v554
        %v556 = vadd.f32 %v552, %v555
        %vm557 = vweird.f32 %v488
        %vm558 = vweird.f32 %v552
        %vm559 = vmor %vm557, %vm558
        %v560 = vsel %vm559, %v552, %v556
        %v561 = vand.u32 2147483647, %v488
        %vm562 = vcmp.eq.f32.partialorder %v561, 8.507059e+37
        %v563 = vand.u32 %v488, 2147483648
        %v564 = vor.u32 1.1754944e-38, %v563
        %v565 = vsel %vm562, %v564, %v560
        %v566 = vmul.f32 %v472, %v565
        %v567 = vrcp.pop %v489
        %v568 = vmul.f32 %v489, %v567
        %v569 = vsub.f32 1.0, %v568
        %v570 = vmul.f32 %v567, %v569
        %v571 = vadd.f32 %v567, %v570
        %vm572 = vweird.f32 %v489
        %vm573 = vweird.f32 %v567
        %vm574 = vmor %vm572, %vm573
        %v575 = vsel %vm574, %v567, %v571
        %v576 = vand.u32 2147483647, %v489
        %vm577 = vcmp.eq.f32.partialorder %v576, 8.507059e+37
        %v578 = vand.u32 %v489, 2147483648
        %v579 = vor.u32 1.1754944e-38, %v578
        %v580 = vsel %vm577, %v579, %v575
        %v581 = vmul.f32 %v473, %v580
        %v582 = vrcp.pop %v490
        %v583 = vmul.f32 %v490, %v582
        %v584 = vsub.f32 1.0, %v583
        %v585 = vmul.f32 %v582, %v584
        %v586 = vadd.f32 %v582, %v585
        %vm587 = vweird.f32 %v490
        %vm588 = vweird.f32 %v582
        %vm589 = vmor %vm587, %vm588
        %v590 = vsel %vm589, %v582, %v586
        %v591 = vand.u32 2147483647, %v490
        %vm592 = vcmp.eq.f32.partialorder %v591, 8.507059e+37
        %v593 = vand.u32 %v490, 2147483648
        %v594 = vor.u32 1.1754944e-38, %v593
        %v595 = vsel %vm592, %v594, %v590
        %v596 = vmul.f32 %v474, %v595
        %v597 = vrcp.pop %v491
        %v598 = vmul.f32 %v491, %v597
        %v599 = vsub.f32 1.0, %v598
        %v600 = vmul.f32 %v597, %v599
        %v601 = vadd.f32 %v597, %v600
        %vm602 = vweird.f32 %v491
        %vm603 = vweird.f32 %v597
        %vm604 = vmor %vm602, %vm603
        %v605 = vsel %vm604, %v597, %v601
        %v606 = vand.u32 2147483647, %v491
        %vm607 = vcmp.eq.f32.partialorder %v606, 8.507059e+37
        %v608 = vand.u32 %v491, 2147483648
        %v609 = vor.u32 1.1754944e-38, %v608
        %v610 = vsel %vm607, %v609, %v605
        %v611 = vmul.f32 %v475, %v610
        %v612 = vlog2.pop %v506
        %v613 = vmul.f32 %v612, 0.6931472
        %v614 = vlog2.pop %v521
        %v615 = vmul.f32 %v614, 0.6931472
        %v616 = vlog2.pop %v536
        %v617 = vmul.f32 %v616, 0.6931472
        %v618 = vlog2.pop %v551
        %v619 = vmul.f32 %v618, 0.6931472
        %v620 = vlog2.pop %v566
        %v621 = vmul.f32 %v620, 0.6931472
        %v622 = vlog2.pop %v581
        %v623 = vmul.f32 %v622, 0.6931472
        %v624 = vlog2.pop %v596
        %v625 = vmul.f32 %v624, 0.6931472
        %v626 = vlog2.pop %v611
        %v627 = vmul.f32 %v626, 0.6931472
        %v628 = vld [vmem:[#allocation2] sm:$0xff]
        %v629 = vld [vmem:[#allocation2 + $0x8] sm:$0xff]
        %v630 = vld [vmem:[#allocation2 + $0x10] sm:$0xff]
        %v631 = vld [vmem:[#allocation2 + $0x18] sm:$0xff]
        %v632 = vld [vmem:[#allocation2 + $0x20] sm:$0xff]
        %v633 = vld [vmem:[#allocation2 + $0x28] sm:$0xff]
        %v634 = vld [vmem:[#allocation2 + $0x30] sm:$0xff]
        %v635 = vld [vmem:[#allocation2 + $0x38] sm:$0xff]
        %v636 = vadd.f32 %v628, %v613
        %v637 = vadd.f32 %v629, %v615
        %v638 = vadd.f32 %v630, %v617
        %v639 = vadd.f32 %v631, %v619
        %v640 = vadd.f32 %v632, %v621
        %v641 = vadd.f32 %v633, %v623
        %v642 = vadd.f32 %v634, %v625
        %v643 = vadd.f32 %v635, %v627
        %644 = vst [vmem:[#allocation2] sm:$0xff] %v636
        %645 = vst [vmem:[#allocation2 + $0x8] sm:$0xff] %v637
        %646 = vst [vmem:[#allocation2 + $0x10] sm:$0xff] %v638
        %647 = vst [vmem:[#allocation2 + $0x18] sm:$0xff] %v639
        %648 = vst [vmem:[#allocation2 + $0x20] sm:$0xff] %v640
        %649 = vst [vmem:[#allocation2 + $0x28] sm:$0xff] %v641
        %650 = vst [vmem:[#allocation2 + $0x30] sm:$0xff] %v642
        %651 = vst [vmem:[#allocation2 + $0x38] sm:$0xff] %v643
        %v652 = vld [vmem:[#allocation3] sm:$0xff]
        %v653 = vld [vmem:[#allocation3 + $0x8] sm:$0xff]
        %v654 = vld [vmem:[#allocation3 + $0x10] sm:$0xff]
        %v655 = vld [vmem:[#allocation3 + $0x18] sm:$0xff]
        %v656 = vld [vmem:[#allocation3 + $0x20] sm:$0xff]
        %v657 = vld [vmem:[#allocation3 + $0x28] sm:$0xff]
        %v658 = vld [vmem:[#allocation3 + $0x30] sm:$0xff]
        %v659 = vld [vmem:[#allocation3 + $0x38] sm:$0xff]
        %v660 = vmul.f32 %v613, %v613
        %v661 = vmul.f32 %v615, %v615
        %v662 = vmul.f32 %v617, %v617
        %v663 = vmul.f32 %v619, %v619
        %v664 = vmul.f32 %v621, %v621
        %v665 = vmul.f32 %v623, %v623
        %v666 = vmul.f32 %v625, %v625
        %v667 = vmul.f32 %v627, %v627
        %v668 = vadd.f32 %v652, %v660
        %v669 = vadd.f32 %v653, %v661
        %v670 = vadd.f32 %v654, %v662
        %v671 = vadd.f32 %v655, %v663
        %v672 = vadd.f32 %v656, %v664
        %v673 = vadd.f32 %v657, %v665
        %v674 = vadd.f32 %v658, %v666
        %v675 = vadd.f32 %v659, %v667
        %676 = vst [vmem:[#allocation3] sm:$0xff] %v668
        %677 = vst [vmem:[#allocation3 + $0x8] sm:$0xff] %v669
        %678 = vst [vmem:[#allocation3 + $0x10] sm:$0xff] %v670
        %679 = vst [vmem:[#allocation3 + $0x18] sm:$0xff] %v671
        %680 = vst [vmem:[#allocation3 + $0x20] sm:$0xff] %v672
        %681 = vst [vmem:[#allocation3 + $0x28] sm:$0xff] %v673
        %682 = vst [vmem:[#allocation3 + $0x30] sm:$0xff] %v674
        %683 = vst [vmem:[#allocation3 + $0x38] sm:$0xff] %v675
        %v684 = vld [vmem:[#allocation4] sm:$0xff]
        %v685 = vld [vmem:[#allocation4 + $0x8] sm:$0xff]
        %v686 = vld [vmem:[#allocation4 + $0x10] sm:$0xff]
        %v687 = vld [vmem:[#allocation4 + $0x18] sm:$0xff]
        %v688 = vld [vmem:[#allocation4 + $0x20] sm:$0xff]
        %v689 = vld [vmem:[#allocation4 + $0x28] sm:$0xff]
        %v690 = vld [vmem:[#allocation4 + $0x30] sm:$0xff]
        %v691 = vld [vmem:[#allocation4 + $0x38] sm:$0xff]
        %v692 = vadd.f32 %v684, %v452
        %v693 = vadd.f32 %v685, %v453
        %v694 = vadd.f32 %v686, %v454
        %v695 = vadd.f32 %v687, %v455
        %v696 = vadd.f32 %v688, %v456
        %v697 = vadd.f32 %v689, %v457
        %v698 = vadd.f32 %v690, %v458
        %v699 = vadd.f32 %v691, %v459
        %700 = vst [vmem:[#allocation4] sm:$0xff] %v692
        %701 = vst [vmem:[#allocation4 + $0x8] sm:$0xff] %v693
        %702 = vst [vmem:[#allocation4 + $0x10] sm:$0xff] %v694
        %703 = vst [vmem:[#allocation4 + $0x18] sm:$0xff] %v695
        %704 = vst [vmem:[#allocation4 + $0x20] sm:$0xff] %v696
        %705 = vst [vmem:[#allocation4 + $0x28] sm:$0xff] %v697
        %706 = vst [vmem:[#allocation4 + $0x30] sm:$0xff] %v698
        %707 = vst [vmem:[#allocation4 + $0x38] sm:$0xff] %v699
        %v708 = vsel %vm428, 1, 0
        %v709 = vsel %vm429, 1, 0
        %v710 = vsel %vm430, 1, 0
        %v711 = vsel %vm431, 1, 0
        %v712 = vsel %vm432, 1, 0
        %v713 = vsel %vm433, 1, 0
        %v714 = vsel %vm434, 1, 0
        %v715 = vsel %vm435, 1, 0
        %v716 = vcvt.s32.f32 %v708
        %v717 = vcvt.s32.f32 %v709
        %v718 = vcvt.s32.f32 %v710
        %v719 = vcvt.s32.f32 %v711
        %v720 = vcvt.s32.f32 %v712
        %v721 = vcvt.s32.f32 %v713
        %v722 = vcvt.s32.f32 %v714
        %v723 = vcvt.s32.f32 %v715
        %v724 = vld [vmem:[#allocation6] sm:$0xff]
        %v725 = vld [vmem:[#allocation6 + $0x8] sm:$0xff]
        %v726 = vld [vmem:[#allocation6 + $0x10] sm:$0xff]
        %v727 = vld [vmem:[#allocation6 + $0x18] sm:$0xff]
        %v728 = vld [vmem:[#allocation6 + $0x20] sm:$0xff]
        %v729 = vld [vmem:[#allocation6 + $0x28] sm:$0xff]
        %v730 = vld [vmem:[#allocation6 + $0x30] sm:$0xff]
        %v731 = vld [vmem:[#allocation6 + $0x38] sm:$0xff]
        %v732 = vadd.f32 %v724, %v716
        %v733 = vadd.f32 %v725, %v717
        %v734 = vadd.f32 %v726, %v718
        %v735 = vadd.f32 %v727, %v719
        %v736 = vadd.f32 %v728, %v720
        %v737 = vadd.f32 %v729, %v721
        %v738 = vadd.f32 %v730, %v722
        %v739 = vadd.f32 %v731, %v723
        %740 = vst [vmem:[#allocation6] sm:$0xff] %v732
        %741 = vst [vmem:[#allocation6 + $0x8] sm:$0xff] %v733
        %742 = vst [vmem:[#allocation6 + $0x10] sm:$0xff] %v734
        %743 = vst [vmem:[#allocation6 + $0x18] sm:$0xff] %v735
        %744 = vst [vmem:[#allocation6 + $0x20] sm:$0xff] %v736
        %745 = vst [vmem:[#allocation6 + $0x28] sm:$0xff] %v737
        %746 = vst [vmem:[#allocation6 + $0x30] sm:$0xff] %v738
        %747 = vst [vmem:[#allocation6 + $0x38] sm:$0xff] %v739
        %v748 = vsel %vm428, %v412, 1e+18
        %v749 = vsel %vm429, %v413, 1e+18
        %v750 = vsel %vm430, %v414, 1e+18
        %v751 = vsel %vm431, %v415, 1e+18
        %v752 = vsel %vm432, %v416, 1e+18
        %v753 = vsel %vm433, %v417, 1e+18
        %v754 = vsel %vm434, %v418, 1e+18
        %v755 = vsel %vm435, %v419, 1e+18
        %v756 = vld [vmem:[#allocation15] sm:$0xff]
        %v757 = vld [vmem:[#allocation15 + $0x8] sm:$0xff]
        %v758 = vsub.f32 %v756, %v748
        %v759 = vsub.f32 %v757, %v752
        %v760 = vmul.f32 %v758, %v758
        %v761 = vmul.f32 %v759, %v759
        %v762 = vmin.f32 %v760, 1e+30
        %v763 = vmin.f32 %v761, 1e+30
        %v764 = vsub.f32 %v756, %v749
        %v765 = vsub.f32 %v757, %v753
        %v766 = vmul.f32 %v764, %v764
        %v767 = vmul.f32 %v765, %v765
        %v768 = vmin.f32 %v766, 1e+30
        %v769 = vmin.f32 %v767, 1e+30
        %v770 = vmin.f32 %v760, %v766
        %v771 = vmin.f32 %v761, %v767
        %v772 = vld [vmem:[#allocation9] sm:$0xff]
        %v773 = vld [vmem:[#allocation9 + $0x8] sm:$0xff]
        %v774 = vmin.f32 %v772, %v770
        %v775 = vmin.f32 %v773, %v771
        %776 = vst [vmem:[#allocation9] sm:$0xff] %v774
        %777 = vst [vmem:[#allocation9 + $0x8] sm:$0xff] %v775
        %s778 = scalar_lea.vmem [#allocation15], 16
        %v779 = vld [vmem:[%s778] sm:$0xff]
        %v780 = vld [vmem:[%s778 + $0x8] sm:$0xff]
        %v781 = vsub.f32 %v779, %v748
        %v782 = vsub.f32 %v780, %v752
        %v783 = vmul.f32 %v781, %v781
        %v784 = vmul.f32 %v782, %v782
        %v785 = vmin.f32 %v762, %v783
        %v786 = vmin.f32 %v763, %v784
        %v787 = vsub.f32 %v779, %v749
        %v788 = vsub.f32 %v780, %v753
        %v789 = vmul.f32 %v787, %v787
        %v790 = vmul.f32 %v788, %v788
        %v791 = vmin.f32 %v768, %v789
        %v792 = vmin.f32 %v769, %v790
        %v793 = vmin.f32 %v783, %v789
        %v794 = vmin.f32 %v784, %v790
        %s795 = scalar_lea.vmem [#allocation9], 16
        %v796 = vld [vmem:[%s795] sm:$0xff]
        %v797 = vld [vmem:[%s795 + $0x8] sm:$0xff]
        %v798 = vmin.f32 %v796, %v793
        %v799 = vmin.f32 %v797, %v794
        %800 = vst [vmem:[%s795] sm:$0xff] %v798
        %801 = vst [vmem:[%s795 + $0x8] sm:$0xff] %v799
        %s802 = scalar_lea.vmem [#allocation15], 32
        %v803 = vld [vmem:[%s802] sm:$0xff]
        %v804 = vld [vmem:[%s802 + $0x8] sm:$0xff]
        %v805 = vsub.f32 %v803, %v748
        %v806 = vsub.f32 %v804, %v752
        %v807 = vmul.f32 %v805, %v805
        %v808 = vmul.f32 %v806, %v806
        %v809 = vmin.f32 %v785, %v807
        %v810 = vmin.f32 %v786, %v808
        %v811 = vsub.f32 %v803, %v749
        %v812 = vsub.f32 %v804, %v753
        %v813 = vmul.f32 %v811, %v811
        %v814 = vmul.f32 %v812, %v812
        %v815 = vmin.f32 %v791, %v813
        %v816 = vmin.f32 %v792, %v814
        %v817 = vmin.f32 %v807, %v813
        %v818 = vmin.f32 %v808, %v814
        %s819 = scalar_lea.vmem [#allocation9], 32
        %v820 = vld [vmem:[%s819] sm:$0xff]
        %v821 = vld [vmem:[%s819 + $0x8] sm:$0xff]
        %v822 = vmin.f32 %v820, %v817
        %v823 = vmin.f32 %v821, %v818
        %824 = vst [vmem:[%s819] sm:$0xff] %v822
        %825 = vst [vmem:[%s819 + $0x8] sm:$0xff] %v823
        %s826 = scalar_lea.vmem [#allocation15], 48
        %v827 = vld [vmem:[%s826] sm:$0xff]
        %v828 = vld [vmem:[%s826 + $0x8] sm:$0xff]
        %v829 = vsub.f32 %v827, %v748
        %v830 = vsub.f32 %v828, %v752
        %v831 = vmul.f32 %v829, %v829
        %v832 = vmul.f32 %v830, %v830
        %v833 = vmin.f32 %v809, %v831
        %v834 = vmin.f32 %v810, %v832
        %v835 = vsub.f32 %v827, %v749
        %v836 = vsub.f32 %v828, %v753
        %v837 = vmul.f32 %v835, %v835
        %v838 = vmul.f32 %v836, %v836
        %v839 = vmin.f32 %v815, %v837
        %v840 = vmin.f32 %v816, %v838
        %v841 = vmin.f32 %v831, %v837
        %v842 = vmin.f32 %v832, %v838
        %s843 = scalar_lea.vmem [#allocation9], 48
        %v844 = vld [vmem:[%s843] sm:$0xff]
        %v845 = vld [vmem:[%s843 + $0x8] sm:$0xff]
        %v846 = vmin.f32 %v844, %v841
        %v847 = vmin.f32 %v845, %v842
        %848 = vst [vmem:[%s843] sm:$0xff] %v846
        %849 = vst [vmem:[%s843 + $0x8] sm:$0xff] %v847
        %s850 = scalar_lea.vmem [#allocation15], 64
        %v851 = vld [vmem:[%s850] sm:$0xff]
        %v852 = vld [vmem:[%s850 + $0x8] sm:$0xff]
        %v853 = vsub.f32 %v851, %v748
        %v854 = vsub.f32 %v852, %v752
        %v855 = vmul.f32 %v853, %v853
        %v856 = vmul.f32 %v854, %v854
        %v857 = vmin.f32 %v833, %v855
        %v858 = vmin.f32 %v834, %v856
        %v859 = vsub.f32 %v851, %v749
        %v860 = vsub.f32 %v852, %v753
        %v861 = vmul.f32 %v859, %v859
        %v862 = vmul.f32 %v860, %v860
        %v863 = vmin.f32 %v839, %v861
        %v864 = vmin.f32 %v840, %v862
        %v865 = vmin.f32 %v855, %v861
        %v866 = vmin.f32 %v856, %v862
        %s867 = scalar_lea.vmem [#allocation9], 64
        %v868 = vld [vmem:[%s867] sm:$0xff]
        %v869 = vld [vmem:[%s867 + $0x8] sm:$0xff]
        %v870 = vmin.f32 %v868, %v865
        %v871 = vmin.f32 %v869, %v866
        %872 = vst [vmem:[%s867] sm:$0xff] %v870
        %873 = vst [vmem:[%s867 + $0x8] sm:$0xff] %v871
        %s874 = scalar_lea.vmem [#allocation15], 80
        %v875 = vld [vmem:[%s874] sm:$0xff]
        %v876 = vld [vmem:[%s874 + $0x8] sm:$0xff]
        %v877 = vsub.f32 %v875, %v748
        %v878 = vsub.f32 %v876, %v752
        %v879 = vmul.f32 %v877, %v877
        %v880 = vmul.f32 %v878, %v878
        %v881 = vmin.f32 %v857, %v879
        %v882 = vmin.f32 %v858, %v880
        %v883 = vsub.f32 %v875, %v749
        %v884 = vsub.f32 %v876, %v753
        %v885 = vmul.f32 %v883, %v883
        %v886 = vmul.f32 %v884, %v884
        %v887 = vmin.f32 %v863, %v885
        %v888 = vmin.f32 %v864, %v886
        %v889 = vmin.f32 %v879, %v885
        %v890 = vmin.f32 %v880, %v886
        %s891 = scalar_lea.vmem [#allocation9], 80
        %v892 = vld [vmem:[%s891] sm:$0xff]
        %v893 = vld [vmem:[%s891 + $0x8] sm:$0xff]
        %v894 = vmin.f32 %v892, %v889
        %v895 = vmin.f32 %v893, %v890
        %896 = vst [vmem:[%s891] sm:$0xff] %v894
        %897 = vst [vmem:[%s891 + $0x8] sm:$0xff] %v895
        %s898 = scalar_lea.vmem [#allocation15], 96
        %v899 = vld [vmem:[%s898] sm:$0xff]
        %v900 = vld [vmem:[%s898 + $0x8] sm:$0xff]
        %v901 = vsub.f32 %v899, %v748
        %v902 = vsub.f32 %v900, %v752
        %v903 = vmul.f32 %v901, %v901
        %v904 = vmul.f32 %v902, %v902
        %v905 = vmin.f32 %v881, %v903
        %v906 = vmin.f32 %v882, %v904
        %v907 = vsub.f32 %v899, %v749
        %v908 = vsub.f32 %v900, %v753
        %v909 = vmul.f32 %v907, %v907
        %v910 = vmul.f32 %v908, %v908
        %v911 = vmin.f32 %v887, %v909
        %v912 = vmin.f32 %v888, %v910
        %v913 = vmin.f32 %v903, %v909
        %v914 = vmin.f32 %v904, %v910
        %s915 = scalar_lea.vmem [#allocation9], 96
        %v916 = vld [vmem:[%s915] sm:$0xff]
        %v917 = vld [vmem:[%s915 + $0x8] sm:$0xff]
        %v918 = vmin.f32 %v916, %v913
        %v919 = vmin.f32 %v917, %v914
        %920 = vst [vmem:[%s915] sm:$0xff] %v918
        %921 = vst [vmem:[%s915 + $0x8] sm:$0xff] %v919
        %s922 = scalar_lea.vmem [#allocation15], 112
        %v923 = vld [vmem:[%s922] sm:$0xff]
        %v924 = vld [vmem:[%s922 + $0x8] sm:$0xff]
        %v925 = vsub.f32 %v923, %v748
        %v926 = vsub.f32 %v924, %v752
        %v927 = vmul.f32 %v925, %v925
        %v928 = vmul.f32 %v926, %v926
        %v929 = vmin.f32 %v905, %v927
        %v930 = vmin.f32 %v906, %v928
        %v931 = vsub.f32 %v923, %v749
        %v932 = vsub.f32 %v924, %v753
        %v933 = vmul.f32 %v931, %v931
        %v934 = vmul.f32 %v932, %v932
        %v935 = vmin.f32 %v911, %v933
        %v936 = vmin.f32 %v912, %v934
        %v937 = vmin.f32 %v927, %v933
        %v938 = vmin.f32 %v928, %v934
        %s939 = scalar_lea.vmem [#allocation9], 112
        %v940 = vld [vmem:[%s939] sm:$0xff]
        %v941 = vld [vmem:[%s939 + $0x8] sm:$0xff]
        %v942 = vmin.f32 %v940, %v937
        %v943 = vmin.f32 %v941, %v938
        %944 = vst [vmem:[%s939] sm:$0xff] %v942
        %945 = vst [vmem:[%s939 + $0x8] sm:$0xff] %v943
        %s946 = scalar_lea.vmem [#allocation15], 128
        %v947 = vld [vmem:[%s946] sm:$0xff]
        %v948 = vld [vmem:[%s946 + $0x8] sm:$0xff]
        %v949 = vsub.f32 %v947, %v748
        %v950 = vsub.f32 %v948, %v752
        %v951 = vmul.f32 %v949, %v949
        %v952 = vmul.f32 %v950, %v950
        %v953 = vmin.f32 %v929, %v951
        %v954 = vmin.f32 %v930, %v952
        %v955 = vsub.f32 %v947, %v749
        %v956 = vsub.f32 %v948, %v753
        %v957 = vmul.f32 %v955, %v955
        %v958 = vmul.f32 %v956, %v956
        %v959 = vmin.f32 %v935, %v957
        %v960 = vmin.f32 %v936, %v958
        %v961 = vmin.f32 %v951, %v957
        %v962 = vmin.f32 %v952, %v958
        %s963 = scalar_lea.vmem [#allocation9], 128
        %v964 = vld [vmem:[%s963] sm:$0xff]
        %v965 = vld [vmem:[%s963 + $0x8] sm:$0xff]
        %v966 = vmin.f32 %v964, %v961
        %v967 = vmin.f32 %v965, %v962
        %968 = vst [vmem:[%s963] sm:$0xff] %v966
        %969 = vst [vmem:[%s963 + $0x8] sm:$0xff] %v967
        %s970 = scalar_lea.vmem [#allocation15], 144
        %v971 = vld [vmem:[%s970] sm:$0xff]
        %v972 = vld [vmem:[%s970 + $0x8] sm:$0xff]
        %v973 = vsub.f32 %v971, %v748
        %v974 = vsub.f32 %v972, %v752
        %v975 = vmul.f32 %v973, %v973
        %v976 = vmul.f32 %v974, %v974
        %v977 = vmin.f32 %v953, %v975
        %v978 = vmin.f32 %v954, %v976
        %v979 = vsub.f32 %v971, %v749
        %v980 = vsub.f32 %v972, %v753
        %v981 = vmul.f32 %v979, %v979
        %v982 = vmul.f32 %v980, %v980
        %v983 = vmin.f32 %v959, %v981
        %v984 = vmin.f32 %v960, %v982
        %v985 = vmin.f32 %v975, %v981
        %v986 = vmin.f32 %v976, %v982
        %s987 = scalar_lea.vmem [#allocation9], 144
        %v988 = vld [vmem:[%s987] sm:$0xff]
        %v989 = vld [vmem:[%s987 + $0x8] sm:$0xff]
        %v990 = vmin.f32 %v988, %v985
        %v991 = vmin.f32 %v989, %v986
        %992 = vst [vmem:[%s987] sm:$0xff] %v990
        %993 = vst [vmem:[%s987 + $0x8] sm:$0xff] %v991
        %s994 = scalar_lea.vmem [#allocation15], 160
        %v995 = vld [vmem:[%s994] sm:$0xff]
        %v996 = vld [vmem:[%s994 + $0x8] sm:$0xff]
        %v997 = vsub.f32 %v995, %v748
        %v998 = vsub.f32 %v996, %v752
        %v999 = vmul.f32 %v997, %v997
        %v1000 = vmul.f32 %v998, %v998
        %v1001 = vmin.f32 %v977, %v999
        %v1002 = vmin.f32 %v978, %v1000
        %v1003 = vsub.f32 %v995, %v749
        %v1004 = vsub.f32 %v996, %v753
        %v1005 = vmul.f32 %v1003, %v1003
        %v1006 = vmul.f32 %v1004, %v1004
        %v1007 = vmin.f32 %v983, %v1005
        %v1008 = vmin.f32 %v984, %v1006
        %v1009 = vmin.f32 %v999, %v1005
        %v1010 = vmin.f32 %v1000, %v1006
        %s1011 = scalar_lea.vmem [#allocation9], 160
        %v1012 = vld [vmem:[%s1011] sm:$0xff]
        %v1013 = vld [vmem:[%s1011 + $0x8] sm:$0xff]
        %v1014 = vmin.f32 %v1012, %v1009
        %v1015 = vmin.f32 %v1013, %v1010
        %1016 = vst [vmem:[%s1011] sm:$0xff] %v1014
        %1017 = vst [vmem:[%s1011 + $0x8] sm:$0xff] %v1015
        %s1018 = scalar_lea.vmem [#allocation15], 176
        %v1019 = vld [vmem:[%s1018] sm:$0xff]
        %v1020 = vld [vmem:[%s1018 + $0x8] sm:$0xff]
        %v1021 = vsub.f32 %v1019, %v748
        %v1022 = vsub.f32 %v1020, %v752
        %v1023 = vmul.f32 %v1021, %v1021
        %v1024 = vmul.f32 %v1022, %v1022
        %v1025 = vmin.f32 %v1001, %v1023
        %v1026 = vmin.f32 %v1002, %v1024
        %v1027 = vsub.f32 %v1019, %v749
        %v1028 = vsub.f32 %v1020, %v753
        %v1029 = vmul.f32 %v1027, %v1027
        %v1030 = vmul.f32 %v1028, %v1028
        %v1031 = vmin.f32 %v1007, %v1029
        %v1032 = vmin.f32 %v1008, %v1030
        %v1033 = vmin.f32 %v1023, %v1029
        %v1034 = vmin.f32 %v1024, %v1030
        %s1035 = scalar_lea.vmem [#allocation9], 176
        %v1036 = vld [vmem:[%s1035] sm:$0xff]
        %v1037 = vld [vmem:[%s1035 + $0x8] sm:$0xff]
        %v1038 = vmin.f32 %v1036, %v1033
        %v1039 = vmin.f32 %v1037, %v1034
        %1040 = vst [vmem:[%s1035] sm:$0xff] %v1038
        %1041 = vst [vmem:[%s1035 + $0x8] sm:$0xff] %v1039
        %s1042 = scalar_lea.vmem [#allocation15], 192
        %v1043 = vld [vmem:[%s1042] sm:$0xff]
        %v1044 = vld [vmem:[%s1042 + $0x8] sm:$0xff]
        %v1045 = vsub.f32 %v1043, %v748
        %v1046 = vsub.f32 %v1044, %v752
        %v1047 = vmul.f32 %v1045, %v1045
        %v1048 = vmul.f32 %v1046, %v1046
        %v1049 = vmin.f32 %v1025, %v1047
        %v1050 = vmin.f32 %v1026, %v1048
        %v1051 = vsub.f32 %v1043, %v749
        %v1052 = vsub.f32 %v1044, %v753
        %v1053 = vmul.f32 %v1051, %v1051
        %v1054 = vmul.f32 %v1052, %v1052
        %v1055 = vmin.f32 %v1031, %v1053
        %v1056 = vmin.f32 %v1032, %v1054
        %v1057 = vmin.f32 %v1047, %v1053
        %v1058 = vmin.f32 %v1048, %v1054
        %s1059 = scalar_lea.vmem [#allocation9], 192
        %v1060 = vld [vmem:[%s1059] sm:$0xff]
        %v1061 = vld [vmem:[%s1059 + $0x8] sm:$0xff]
        %v1062 = vmin.f32 %v1060, %v1057
        %v1063 = vmin.f32 %v1061, %v1058
        %1064 = vst [vmem:[%s1059] sm:$0xff] %v1062
        %1065 = vst [vmem:[%s1059 + $0x8] sm:$0xff] %v1063
        %s1066 = scalar_lea.vmem [#allocation15], 208
        %v1067 = vld [vmem:[%s1066] sm:$0xff]
        %v1068 = vld [vmem:[%s1066 + $0x8] sm:$0xff]
        %v1069 = vsub.f32 %v1067, %v748
        %v1070 = vsub.f32 %v1068, %v752
        %v1071 = vmul.f32 %v1069, %v1069
        %v1072 = vmul.f32 %v1070, %v1070
        %v1073 = vmin.f32 %v1049, %v1071
        %v1074 = vmin.f32 %v1050, %v1072
        %v1075 = vsub.f32 %v1067, %v749
        %v1076 = vsub.f32 %v1068, %v753
        %v1077 = vmul.f32 %v1075, %v1075
        %v1078 = vmul.f32 %v1076, %v1076
        %v1079 = vmin.f32 %v1055, %v1077
        %v1080 = vmin.f32 %v1056, %v1078
        %v1081 = vmin.f32 %v1071, %v1077
        %v1082 = vmin.f32 %v1072, %v1078
        %s1083 = scalar_lea.vmem [#allocation9], 208
        %v1084 = vld [vmem:[%s1083] sm:$0xff]
        %v1085 = vld [vmem:[%s1083 + $0x8] sm:$0xff]
        %v1086 = vmin.f32 %v1084, %v1081
        %v1087 = vmin.f32 %v1085, %v1082
        %1088 = vst [vmem:[%s1083] sm:$0xff] %v1086
        %1089 = vst [vmem:[%s1083 + $0x8] sm:$0xff] %v1087
        %s1090 = scalar_lea.vmem [#allocation15], 224
        %v1091 = vld [vmem:[%s1090] sm:$0xff]
        %v1092 = vld [vmem:[%s1090 + $0x8] sm:$0xff]
        %v1093 = vsub.f32 %v1091, %v748
        %v1094 = vsub.f32 %v1092, %v752
        %v1095 = vmul.f32 %v1093, %v1093
        %v1096 = vmul.f32 %v1094, %v1094
        %v1097 = vmin.f32 %v1073, %v1095
        %v1098 = vmin.f32 %v1074, %v1096
        %v1099 = vsub.f32 %v1091, %v749
        %v1100 = vsub.f32 %v1092, %v753
        %v1101 = vmul.f32 %v1099, %v1099
        %v1102 = vmul.f32 %v1100, %v1100
        %v1103 = vmin.f32 %v1079, %v1101
        %v1104 = vmin.f32 %v1080, %v1102
        %v1105 = vmin.f32 %v1095, %v1101
        %v1106 = vmin.f32 %v1096, %v1102
        %s1107 = scalar_lea.vmem [#allocation9], 224
        %v1108 = vld [vmem:[%s1107] sm:$0xff]
        %v1109 = vld [vmem:[%s1107 + $0x8] sm:$0xff]
        %v1110 = vmin.f32 %v1108, %v1105
        %v1111 = vmin.f32 %v1109, %v1106
        %1112 = vst [vmem:[%s1107] sm:$0xff] %v1110
        %1113 = vst [vmem:[%s1107 + $0x8] sm:$0xff] %v1111
        %s1114 = scalar_lea.vmem [#allocation15], 240
        %v1115 = vld [vmem:[%s1114] sm:$0xff]
        %v1116 = vld [vmem:[%s1114 + $0x8] sm:$0xff]
        %v1117 = vsub.f32 %v1115, %v748
        %v1118 = vsub.f32 %v1116, %v752
        %v1119 = vmul.f32 %v1117, %v1117
        %v1120 = vmul.f32 %v1118, %v1118
        %v1121 = vmin.f32 %v1097, %v1119
        %v1122 = vmin.f32 %v1098, %v1120
        %v1123 = vsub.f32 %v1115, %v749
        %v1124 = vsub.f32 %v1116, %v753
        %v1125 = vmul.f32 %v1123, %v1123
        %v1126 = vmul.f32 %v1124, %v1124
        %v1127 = vmin.f32 %v1103, %v1125
        %v1128 = vmin.f32 %v1104, %v1126
        %v1129 = vmin.f32 %v1119, %v1125
        %v1130 = vmin.f32 %v1120, %v1126
        %s1131 = scalar_lea.vmem [#allocation9], 240
        %v1132 = vld [vmem:[%s1131] sm:$0xff]
        %v1133 = vld [vmem:[%s1131 + $0x8] sm:$0xff]
        %v1134 = vmin.f32 %v1132, %v1129
        %v1135 = vmin.f32 %v1133, %v1130
        %1136 = vst [vmem:[%s1131] sm:$0xff] %v1134
        %1137 = vst [vmem:[%s1131 + $0x8] sm:$0xff] %v1135
        %v1138 = vld [vmem:[#allocation5] sm:$0xff]
        %v1139 = vld [vmem:[#allocation5 + $0x20] sm:$0xff]
        %v1140 = vmul.f32 %v1121, %v716
        %v1141 = vmul.f32 %v1122, %v720
        %v1142 = vadd.f32 %v1138, %v1140
        %v1143 = vadd.f32 %v1139, %v1141
        %1144 = vst [vmem:[#allocation5] sm:$0xff] %v1142
        %1145 = vst [vmem:[#allocation5 + $0x20] sm:$0xff] %v1143
        %v1146 = vld [vmem:[#allocation5 + $0x8] sm:$0xff]
        %v1147 = vld [vmem:[#allocation5 + $0x28] sm:$0xff]
        %v1148 = vmul.f32 %v1127, %v717
        %v1149 = vmul.f32 %v1128, %v721
        %v1150 = vadd.f32 %v1146, %v1148
        %v1151 = vadd.f32 %v1147, %v1149
        %1152 = vst [vmem:[#allocation5 + $0x8] sm:$0xff] %v1150
        %1153 = vst [vmem:[#allocation5 + $0x28] sm:$0xff] %v1151
        %v1154 = vld [vmem:[#allocation15] sm:$0xff]
        %v1155 = vld [vmem:[#allocation15 + $0x8] sm:$0xff]
        %v1156 = vsub.f32 %v1154, %v750
        %v1157 = vsub.f32 %v1155, %v754
        %v1158 = vmul.f32 %v1156, %v1156
        %v1159 = vmul.f32 %v1157, %v1157
        %v1160 = vmin.f32 %v1158, 1e+30
        %v1161 = vmin.f32 %v1159, 1e+30
        %v1162 = vsub.f32 %v1154, %v751
        %v1163 = vsub.f32 %v1155, %v755
        %v1164 = vmul.f32 %v1162, %v1162
        %v1165 = vmul.f32 %v1163, %v1163
        %v1166 = vmin.f32 %v1164, 1e+30
        %v1167 = vmin.f32 %v1165, 1e+30
        %v1168 = vmin.f32 %v1158, %v1164
        %v1169 = vmin.f32 %v1159, %v1165
        %v1170 = vld [vmem:[#allocation9] sm:$0xff]
        %v1171 = vld [vmem:[#allocation9 + $0x8] sm:$0xff]
        %v1172 = vmin.f32 %v1170, %v1168
        %v1173 = vmin.f32 %v1171, %v1169
        %1174 = vst [vmem:[#allocation9] sm:$0xff] %v1172
        %1175 = vst [vmem:[#allocation9 + $0x8] sm:$0xff] %v1173
        %v1176 = vld [vmem:[%s778] sm:$0xff]
        %v1177 = vld [vmem:[%s778 + $0x8] sm:$0xff]
        %v1178 = vsub.f32 %v1176, %v750
        %v1179 = vsub.f32 %v1177, %v754
        %v1180 = vmul.f32 %v1178, %v1178
        %v1181 = vmul.f32 %v1179, %v1179
        %v1182 = vmin.f32 %v1160, %v1180
        %v1183 = vmin.f32 %v1161, %v1181
        %v1184 = vsub.f32 %v1176, %v751
        %v1185 = vsub.f32 %v1177, %v755
        %v1186 = vmul.f32 %v1184, %v1184
        %v1187 = vmul.f32 %v1185, %v1185
        %v1188 = vmin.f32 %v1166, %v1186
        %v1189 = vmin.f32 %v1167, %v1187
        %v1190 = vmin.f32 %v1180, %v1186
        %v1191 = vmin.f32 %v1181, %v1187
        %v1192 = vld [vmem:[%s795] sm:$0xff]
        %v1193 = vld [vmem:[%s795 + $0x8] sm:$0xff]
        %v1194 = vmin.f32 %v1192, %v1190
        %v1195 = vmin.f32 %v1193, %v1191
        %1196 = vst [vmem:[%s795] sm:$0xff] %v1194
        %1197 = vst [vmem:[%s795 + $0x8] sm:$0xff] %v1195
        %v1198 = vld [vmem:[%s802] sm:$0xff]
        %v1199 = vld [vmem:[%s802 + $0x8] sm:$0xff]
        %v1200 = vsub.f32 %v1198, %v750
        %v1201 = vsub.f32 %v1199, %v754
        %v1202 = vmul.f32 %v1200, %v1200
        %v1203 = vmul.f32 %v1201, %v1201
        %v1204 = vmin.f32 %v1182, %v1202
        %v1205 = vmin.f32 %v1183, %v1203
        %v1206 = vsub.f32 %v1198, %v751
        %v1207 = vsub.f32 %v1199, %v755
        %v1208 = vmul.f32 %v1206, %v1206
        %v1209 = vmul.f32 %v1207, %v1207
        %v1210 = vmin.f32 %v1188, %v1208
        %v1211 = vmin.f32 %v1189, %v1209
        %v1212 = vmin.f32 %v1202, %v1208
        %v1213 = vmin.f32 %v1203, %v1209
        %v1214 = vld [vmem:[%s819] sm:$0xff]
        %v1215 = vld [vmem:[%s819 + $0x8] sm:$0xff]
        %v1216 = vmin.f32 %v1214, %v1212
        %v1217 = vmin.f32 %v1215, %v1213
        %1218 = vst [vmem:[%s819] sm:$0xff] %v1216
        %1219 = vst [vmem:[%s819 + $0x8] sm:$0xff] %v1217
        %v1220 = vld [vmem:[%s826] sm:$0xff]
        %v1221 = vld [vmem:[%s826 + $0x8] sm:$0xff]
        %v1222 = vsub.f32 %v1220, %v750
        %v1223 = vsub.f32 %v1221, %v754
        %v1224 = vmul.f32 %v1222, %v1222
        %v1225 = vmul.f32 %v1223, %v1223
        %v1226 = vmin.f32 %v1204, %v1224
        %v1227 = vmin.f32 %v1205, %v1225
        %v1228 = vsub.f32 %v1220, %v751
        %v1229 = vsub.f32 %v1221, %v755
        %v1230 = vmul.f32 %v1228, %v1228
        %v1231 = vmul.f32 %v1229, %v1229
        %v1232 = vmin.f32 %v1210, %v1230
        %v1233 = vmin.f32 %v1211, %v1231
        %v1234 = vmin.f32 %v1224, %v1230
        %v1235 = vmin.f32 %v1225, %v1231
        %v1236 = vld [vmem:[%s843] sm:$0xff]
        %v1237 = vld [vmem:[%s843 + $0x8] sm:$0xff]
        %v1238 = vmin.f32 %v1236, %v1234
        %v1239 = vmin.f32 %v1237, %v1235
        %1240 = vst [vmem:[%s843] sm:$0xff] %v1238
        %1241 = vst [vmem:[%s843 + $0x8] sm:$0xff] %v1239
        %v1242 = vld [vmem:[%s850] sm:$0xff]
        %v1243 = vld [vmem:[%s850 + $0x8] sm:$0xff]
        %v1244 = vsub.f32 %v1242, %v750
        %v1245 = vsub.f32 %v1243, %v754
        %v1246 = vmul.f32 %v1244, %v1244
        %v1247 = vmul.f32 %v1245, %v1245
        %v1248 = vmin.f32 %v1226, %v1246
        %v1249 = vmin.f32 %v1227, %v1247
        %v1250 = vsub.f32 %v1242, %v751
        %v1251 = vsub.f32 %v1243, %v755
        %v1252 = vmul.f32 %v1250, %v1250
        %v1253 = vmul.f32 %v1251, %v1251
        %v1254 = vmin.f32 %v1232, %v1252
        %v1255 = vmin.f32 %v1233, %v1253
        %v1256 = vmin.f32 %v1246, %v1252
        %v1257 = vmin.f32 %v1247, %v1253
        %v1258 = vld [vmem:[%s867] sm:$0xff]
        %v1259 = vld [vmem:[%s867 + $0x8] sm:$0xff]
        %v1260 = vmin.f32 %v1258, %v1256
        %v1261 = vmin.f32 %v1259, %v1257
        %1262 = vst [vmem:[%s867] sm:$0xff] %v1260
        %1263 = vst [vmem:[%s867 + $0x8] sm:$0xff] %v1261
        %v1264 = vld [vmem:[%s874] sm:$0xff]
        %v1265 = vld [vmem:[%s874 + $0x8] sm:$0xff]
        %v1266 = vsub.f32 %v1264, %v750
        %v1267 = vsub.f32 %v1265, %v754
        %v1268 = vmul.f32 %v1266, %v1266
        %v1269 = vmul.f32 %v1267, %v1267
        %v1270 = vmin.f32 %v1248, %v1268
        %v1271 = vmin.f32 %v1249, %v1269
        %v1272 = vsub.f32 %v1264, %v751
        %v1273 = vsub.f32 %v1265, %v755
        %v1274 = vmul.f32 %v1272, %v1272
        %v1275 = vmul.f32 %v1273, %v1273
        %v1276 = vmin.f32 %v1254, %v1274
        %v1277 = vmin.f32 %v1255, %v1275
        %v1278 = vmin.f32 %v1268, %v1274
        %v1279 = vmin.f32 %v1269, %v1275
        %v1280 = vld [vmem:[%s891] sm:$0xff]
        %v1281 = vld [vmem:[%s891 + $0x8] sm:$0xff]
        %v1282 = vmin.f32 %v1280, %v1278
        %v1283 = vmin.f32 %v1281, %v1279
        %1284 = vst [vmem:[%s891] sm:$0xff] %v1282
        %1285 = vst [vmem:[%s891 + $0x8] sm:$0xff] %v1283
        %v1286 = vld [vmem:[%s898] sm:$0xff]
        %v1287 = vld [vmem:[%s898 + $0x8] sm:$0xff]
        %v1288 = vsub.f32 %v1286, %v750
        %v1289 = vsub.f32 %v1287, %v754
        %v1290 = vmul.f32 %v1288, %v1288
        %v1291 = vmul.f32 %v1289, %v1289
        %v1292 = vmin.f32 %v1270, %v1290
        %v1293 = vmin.f32 %v1271, %v1291
        %v1294 = vsub.f32 %v1286, %v751
        %v1295 = vsub.f32 %v1287, %v755
        %v1296 = vmul.f32 %v1294, %v1294
        %v1297 = vmul.f32 %v1295, %v1295
        %v1298 = vmin.f32 %v1276, %v1296
        %v1299 = vmin.f32 %v1277, %v1297
        %v1300 = vmin.f32 %v1290, %v1296
        %v1301 = vmin.f32 %v1291, %v1297
        %v1302 = vld [vmem:[%s915] sm:$0xff]
        %v1303 = vld [vmem:[%s915 + $0x8] sm:$0xff]
        %v1304 = vmin.f32 %v1302, %v1300
        %v1305 = vmin.f32 %v1303, %v1301
        %1306 = vst [vmem:[%s915] sm:$0xff] %v1304
        %1307 = vst [vmem:[%s915 + $0x8] sm:$0xff] %v1305
        %v1308 = vld [vmem:[%s922] sm:$0xff]
        %v1309 = vld [vmem:[%s922 + $0x8] sm:$0xff]
        %v1310 = vsub.f32 %v1308, %v750
        %v1311 = vsub.f32 %v1309, %v754
        %v1312 = vmul.f32 %v1310, %v1310
        %v1313 = vmul.f32 %v1311, %v1311
        %v1314 = vmin.f32 %v1292, %v1312
        %v1315 = vmin.f32 %v1293, %v1313
        %v1316 = vsub.f32 %v1308, %v751
        %v1317 = vsub.f32 %v1309, %v755
        %v1318 = vmul.f32 %v1316, %v1316
        %v1319 = vmul.f32 %v1317, %v1317
        %v1320 = vmin.f32 %v1298, %v1318
        %v1321 = vmin.f32 %v1299, %v1319
        %v1322 = vmin.f32 %v1312, %v1318
        %v1323 = vmin.f32 %v1313, %v1319
        %v1324 = vld [vmem:[%s939] sm:$0xff]
        %v1325 = vld [vmem:[%s939 + $0x8] sm:$0xff]
        %v1326 = vmin.f32 %v1324, %v1322
        %v1327 = vmin.f32 %v1325, %v1323
        %1328 = vst [vmem:[%s939] sm:$0xff] %v1326
        %1329 = vst [vmem:[%s939 + $0x8] sm:$0xff] %v1327
        %v1330 = vld [vmem:[%s946] sm:$0xff]
        %v1331 = vld [vmem:[%s946 + $0x8] sm:$0xff]
        %v1332 = vsub.f32 %v1330, %v750
        %v1333 = vsub.f32 %v1331, %v754
        %v1334 = vmul.f32 %v1332, %v1332
        %v1335 = vmul.f32 %v1333, %v1333
        %v1336 = vmin.f32 %v1314, %v1334
        %v1337 = vmin.f32 %v1315, %v1335
        %v1338 = vsub.f32 %v1330, %v751
        %v1339 = vsub.f32 %v1331, %v755
        %v1340 = vmul.f32 %v1338, %v1338
        %v1341 = vmul.f32 %v1339, %v1339
        %v1342 = vmin.f32 %v1320, %v1340
        %v1343 = vmin.f32 %v1321, %v1341
        %v1344 = vmin.f32 %v1334, %v1340
        %v1345 = vmin.f32 %v1335, %v1341
        %v1346 = vld [vmem:[%s963] sm:$0xff]
        %v1347 = vld [vmem:[%s963 + $0x8] sm:$0xff]
        %v1348 = vmin.f32 %v1346, %v1344
        %v1349 = vmin.f32 %v1347, %v1345
        %1350 = vst [vmem:[%s963] sm:$0xff] %v1348
        %1351 = vst [vmem:[%s963 + $0x8] sm:$0xff] %v1349
        %v1352 = vld [vmem:[%s970] sm:$0xff]
        %v1353 = vld [vmem:[%s970 + $0x8] sm:$0xff]
        %v1354 = vsub.f32 %v1352, %v750
        %v1355 = vsub.f32 %v1353, %v754
        %v1356 = vmul.f32 %v1354, %v1354
        %v1357 = vmul.f32 %v1355, %v1355
        %v1358 = vmin.f32 %v1336, %v1356
        %v1359 = vmin.f32 %v1337, %v1357
        %v1360 = vsub.f32 %v1352, %v751
        %v1361 = vsub.f32 %v1353, %v755
        %v1362 = vmul.f32 %v1360, %v1360
        %v1363 = vmul.f32 %v1361, %v1361
        %v1364 = vmin.f32 %v1342, %v1362
        %v1365 = vmin.f32 %v1343, %v1363
        %v1366 = vmin.f32 %v1356, %v1362
        %v1367 = vmin.f32 %v1357, %v1363
        %v1368 = vld [vmem:[%s987] sm:$0xff]
        %v1369 = vld [vmem:[%s987 + $0x8] sm:$0xff]
        %v1370 = vmin.f32 %v1368, %v1366
        %v1371 = vmin.f32 %v1369, %v1367
        %1372 = vst [vmem:[%s987] sm:$0xff] %v1370
        %1373 = vst [vmem:[%s987 + $0x8] sm:$0xff] %v1371
        %v1374 = vld [vmem:[%s994] sm:$0xff]
        %v1375 = vld [vmem:[%s994 + $0x8] sm:$0xff]
        %v1376 = vsub.f32 %v1374, %v750
        %v1377 = vsub.f32 %v1375, %v754
        %v1378 = vmul.f32 %v1376, %v1376
        %v1379 = vmul.f32 %v1377, %v1377
        %v1380 = vmin.f32 %v1358, %v1378
        %v1381 = vmin.f32 %v1359, %v1379
        %v1382 = vsub.f32 %v1374, %v751
        %v1383 = vsub.f32 %v1375, %v755
        %v1384 = vmul.f32 %v1382, %v1382
        %v1385 = vmul.f32 %v1383, %v1383
        %v1386 = vmin.f32 %v1364, %v1384
        %v1387 = vmin.f32 %v1365, %v1385
        %v1388 = vmin.f32 %v1378, %v1384
        %v1389 = vmin.f32 %v1379, %v1385
        %v1390 = vld [vmem:[%s1011] sm:$0xff]
        %v1391 = vld [vmem:[%s1011 + $0x8] sm:$0xff]
        %v1392 = vmin.f32 %v1390, %v1388
        %v1393 = vmin.f32 %v1391, %v1389
        %1394 = vst [vmem:[%s1011] sm:$0xff] %v1392
        %1395 = vst [vmem:[%s1011 + $0x8] sm:$0xff] %v1393
        %v1396 = vld [vmem:[%s1018] sm:$0xff]
        %v1397 = vld [vmem:[%s1018 + $0x8] sm:$0xff]
        %v1398 = vsub.f32 %v1396, %v750
        %v1399 = vsub.f32 %v1397, %v754
        %v1400 = vmul.f32 %v1398, %v1398
        %v1401 = vmul.f32 %v1399, %v1399
        %v1402 = vmin.f32 %v1380, %v1400
        %v1403 = vmin.f32 %v1381, %v1401
        %v1404 = vsub.f32 %v1396, %v751
        %v1405 = vsub.f32 %v1397, %v755
        %v1406 = vmul.f32 %v1404, %v1404
        %v1407 = vmul.f32 %v1405, %v1405
        %v1408 = vmin.f32 %v1386, %v1406
        %v1409 = vmin.f32 %v1387, %v1407
        %v1410 = vmin.f32 %v1400, %v1406
        %v1411 = vmin.f32 %v1401, %v1407
        %v1412 = vld [vmem:[%s1035] sm:$0xff]
        %v1413 = vld [vmem:[%s1035 + $0x8] sm:$0xff]
        %v1414 = vmin.f32 %v1412, %v1410
        %v1415 = vmin.f32 %v1413, %v1411
        %1416 = vst [vmem:[%s1035] sm:$0xff] %v1414
        %1417 = vst [vmem:[%s1035 + $0x8] sm:$0xff] %v1415
        %v1418 = vld [vmem:[%s1042] sm:$0xff]
        %v1419 = vld [vmem:[%s1042 + $0x8] sm:$0xff]
        %v1420 = vsub.f32 %v1418, %v750
        %v1421 = vsub.f32 %v1419, %v754
        %v1422 = vmul.f32 %v1420, %v1420
        %v1423 = vmul.f32 %v1421, %v1421
        %v1424 = vmin.f32 %v1402, %v1422
        %v1425 = vmin.f32 %v1403, %v1423
        %v1426 = vsub.f32 %v1418, %v751
        %v1427 = vsub.f32 %v1419, %v755
        %v1428 = vmul.f32 %v1426, %v1426
        %v1429 = vmul.f32 %v1427, %v1427
        %v1430 = vmin.f32 %v1408, %v1428
        %v1431 = vmin.f32 %v1409, %v1429
        %v1432 = vmin.f32 %v1422, %v1428
        %v1433 = vmin.f32 %v1423, %v1429
        %v1434 = vld [vmem:[%s1059] sm:$0xff]
        %v1435 = vld [vmem:[%s1059 + $0x8] sm:$0xff]
        %v1436 = vmin.f32 %v1434, %v1432
        %v1437 = vmin.f32 %v1435, %v1433
        %1438 = vst [vmem:[%s1059] sm:$0xff] %v1436
        %1439 = vst [vmem:[%s1059 + $0x8] sm:$0xff] %v1437
        %v1440 = vld [vmem:[%s1066] sm:$0xff]
        %v1441 = vld [vmem:[%s1066 + $0x8] sm:$0xff]
        %v1442 = vsub.f32 %v1440, %v750
        %v1443 = vsub.f32 %v1441, %v754
        %v1444 = vmul.f32 %v1442, %v1442
        %v1445 = vmul.f32 %v1443, %v1443
        %v1446 = vmin.f32 %v1424, %v1444
        %v1447 = vmin.f32 %v1425, %v1445
        %v1448 = vsub.f32 %v1440, %v751
        %v1449 = vsub.f32 %v1441, %v755
        %v1450 = vmul.f32 %v1448, %v1448
        %v1451 = vmul.f32 %v1449, %v1449
        %v1452 = vmin.f32 %v1430, %v1450
        %v1453 = vmin.f32 %v1431, %v1451
        %v1454 = vmin.f32 %v1444, %v1450
        %v1455 = vmin.f32 %v1445, %v1451
        %v1456 = vld [vmem:[%s1083] sm:$0xff]
        %v1457 = vld [vmem:[%s1083 + $0x8] sm:$0xff]
        %v1458 = vmin.f32 %v1456, %v1454
        %v1459 = vmin.f32 %v1457, %v1455
        %1460 = vst [vmem:[%s1083] sm:$0xff] %v1458
        %1461 = vst [vmem:[%s1083 + $0x8] sm:$0xff] %v1459
        %v1462 = vld [vmem:[%s1090] sm:$0xff]
        %v1463 = vld [vmem:[%s1090 + $0x8] sm:$0xff]
        %v1464 = vsub.f32 %v1462, %v750
        %v1465 = vsub.f32 %v1463, %v754
        %v1466 = vmul.f32 %v1464, %v1464
        %v1467 = vmul.f32 %v1465, %v1465
        %v1468 = vmin.f32 %v1446, %v1466
        %v1469 = vmin.f32 %v1447, %v1467
        %v1470 = vsub.f32 %v1462, %v751
        %v1471 = vsub.f32 %v1463, %v755
        %v1472 = vmul.f32 %v1470, %v1470
        %v1473 = vmul.f32 %v1471, %v1471
        %v1474 = vmin.f32 %v1452, %v1472
        %v1475 = vmin.f32 %v1453, %v1473
        %v1476 = vmin.f32 %v1466, %v1472
        %v1477 = vmin.f32 %v1467, %v1473
        %v1478 = vld [vmem:[%s1107] sm:$0xff]
        %v1479 = vld [vmem:[%s1107 + $0x8] sm:$0xff]
        %v1480 = vmin.f32 %v1478, %v1476
        %v1481 = vmin.f32 %v1479, %v1477
        %1482 = vst [vmem:[%s1107] sm:$0xff] %v1480
        %1483 = vst [vmem:[%s1107 + $0x8] sm:$0xff] %v1481
        %v1484 = vld [vmem:[%s1114] sm:$0xff]
        %v1485 = vld [vmem:[%s1114 + $0x8] sm:$0xff]
        %v1486 = vsub.f32 %v1484, %v750
        %v1487 = vsub.f32 %v1485, %v754
        %v1488 = vmul.f32 %v1486, %v1486
        %v1489 = vmul.f32 %v1487, %v1487
        %v1490 = vmin.f32 %v1468, %v1488
        %v1491 = vmin.f32 %v1469, %v1489
        %v1492 = vsub.f32 %v1484, %v751
        %v1493 = vsub.f32 %v1485, %v755
        %v1494 = vmul.f32 %v1492, %v1492
        %v1495 = vmul.f32 %v1493, %v1493
        %v1496 = vmin.f32 %v1474, %v1494
        %v1497 = vmin.f32 %v1475, %v1495
        %v1498 = vmin.f32 %v1488, %v1494
        %v1499 = vmin.f32 %v1489, %v1495
        %v1500 = vld [vmem:[%s1131] sm:$0xff]
        %v1501 = vld [vmem:[%s1131 + $0x8] sm:$0xff]
        %v1502 = vmin.f32 %v1500, %v1498
        %v1503 = vmin.f32 %v1501, %v1499
        %1504 = vst [vmem:[%s1131] sm:$0xff] %v1502
        %1505 = vst [vmem:[%s1131 + $0x8] sm:$0xff] %v1503
        %v1506 = vld [vmem:[#allocation5 + $0x10] sm:$0xff]
        %v1507 = vld [vmem:[#allocation5 + $0x30] sm:$0xff]
        %v1508 = vmul.f32 %v1490, %v718
        %v1509 = vmul.f32 %v1491, %v722
        %v1510 = vadd.f32 %v1506, %v1508
        %v1511 = vadd.f32 %v1507, %v1509
        %1512 = vst [vmem:[#allocation5 + $0x10] sm:$0xff] %v1510
        %1513 = vst [vmem:[#allocation5 + $0x30] sm:$0xff] %v1511
        %v1514 = vld [vmem:[#allocation5 + $0x18] sm:$0xff]
        %v1515 = vld [vmem:[#allocation5 + $0x38] sm:$0xff]
        %v1516 = vmul.f32 %v1496, %v719
        %v1517 = vmul.f32 %v1497, %v723
        %v1518 = vadd.f32 %v1514, %v1516
        %v1519 = vadd.f32 %v1515, %v1517
        %1520 = vst [vmem:[#allocation5 + $0x18] sm:$0xff] %v1518
        %1521 = vst [vmem:[#allocation5 + $0x38] sm:$0xff] %v1519
        %p1522 = scmp.ge.s32.totalorder %s311, 0
        // Predicated region
        $region49: #{tpu_custom_call.1} parent=31 // pred_check
          %p1523 = pneg %p1522
        $region50: #{tpu_custom_call.1} parent=31 // pred_check_branch
          %1525 = sbr.rel (%p1523) target = $region52
        $region51: #{tpu_custom_call.1} parent=31 // pred_region
          %v1526 = vlaneseq
          %v1527 = vshrl.u32 %v1526, 7
          %v1528 = vadd.s32 %v1527, 8
          %v1529 = vlaneseq
          %v1530 = vand.u32 %v1529, 127
          %v1531 = vadd.s32 %v1530, 128
          %v1532 = vadd.s32 %v1530, 256
          %v1533 = vadd.s32 %v1530, 384
          %v1534 = vand.u32 %v1527, 7
          %v1535 = vand.u32 %v1528, 7
          %v1536 = vmul.u32 %v1534, 1024
          %v1537 = vmul.u32 %v1535, 1024
          %s1538 = smul.u32 %s311, 512
          %v1539 = vstv %s1538
          %v1540 = vadd.s32 %v1536, %v1539
          %v1541 = vadd.s32 %v1537, %v1539
          %v1542 = vadd.s32 %v1540, %v1530
          %v1543 = vadd.s32 %v1540, %v1531
          %v1544 = vadd.s32 %v1540, %v1532
          %v1545 = vadd.s32 %v1540, %v1533
          %v1546 = vadd.s32 %v1541, %v1530
          %v1547 = vadd.s32 %v1541, %v1531
          %v1548 = vadd.s32 %v1541, %v1532
          %v1549 = vadd.s32 %v1541, %v1533
          %vm1550 = vcmp.lt.s32.totalorder %v1542, 4332
          %vm1551 = vcmp.lt.s32.totalorder %v1543, 4332
          %vm1552 = vcmp.lt.s32.totalorder %v1544, 4332
          %vm1553 = vcmp.lt.s32.totalorder %v1545, 4332
          %vm1554 = vcmp.lt.s32.totalorder %v1546, 4332
          %vm1555 = vcmp.lt.s32.totalorder %v1547, 4332
          %vm1556 = vcmp.lt.s32.totalorder %v1548, 4332
          %vm1557 = vcmp.lt.s32.totalorder %v1549, 4332
          %v1558 = vld [vmem:[#allocation7] sm:$0xff]
          %v1559 = vld [vmem:[#allocation7 + $0x8] sm:$0xff]
          %v1560 = vld [vmem:[#allocation7 + $0x10] sm:$0xff]
          %v1561 = vld [vmem:[#allocation7 + $0x18] sm:$0xff]
          %v1562 = vld [vmem:[#allocation7 + $0x20] sm:$0xff]
          %v1563 = vld [vmem:[#allocation7 + $0x28] sm:$0xff]
          %v1564 = vld [vmem:[#allocation7 + $0x30] sm:$0xff]
          %v1565 = vld [vmem:[#allocation7 + $0x38] sm:$0xff]
          %v1566 = vsel %vm1550, %v412, -1e+30
          %v1567 = vsel %vm1551, %v413, -1e+30
          %v1568 = vsel %vm1552, %v414, -1e+30
          %v1569 = vsel %vm1553, %v415, -1e+30
          %v1570 = vsel %vm1554, %v416, -1e+30
          %v1571 = vsel %vm1555, %v417, -1e+30
          %v1572 = vsel %vm1556, %v418, -1e+30
          %v1573 = vsel %vm1557, %v419, -1e+30
          %v1574 = vmax.f32 %v1558, %v1566
          %v1575 = vmax.f32 %v1559, %v1567
          %v1576 = vmax.f32 %v1560, %v1568
          %v1577 = vmax.f32 %v1561, %v1569
          %v1578 = vmax.f32 %v1562, %v1570
          %v1579 = vmax.f32 %v1563, %v1571
          %v1580 = vmax.f32 %v1564, %v1572
          %v1581 = vmax.f32 %v1565, %v1573
          %1582 = vst [vmem:[#allocation7] sm:$0xff] %v1574
          %1583 = vst [vmem:[#allocation7 + $0x8] sm:$0xff] %v1575
          %1584 = vst [vmem:[#allocation7 + $0x10] sm:$0xff] %v1576
          %1585 = vst [vmem:[#allocation7 + $0x18] sm:$0xff] %v1577
          %1586 = vst [vmem:[#allocation7 + $0x20] sm:$0xff] %v1578
          %1587 = vst [vmem:[#allocation7 + $0x28] sm:$0xff] %v1579
          %1588 = vst [vmem:[#allocation7 + $0x30] sm:$0xff] %v1580
          %1589 = vst [vmem:[#allocation7 + $0x38] sm:$0xff] %v1581
          %v1590 = vld [vmem:[#allocation8] sm:$0xff]
          %v1591 = vld [vmem:[#allocation8 + $0x8] sm:$0xff]
          %v1592 = vld [vmem:[#allocation8 + $0x10] sm:$0xff]
          %v1593 = vld [vmem:[#allocation8 + $0x18] sm:$0xff]
          %v1594 = vld [vmem:[#allocation8 + $0x20] sm:$0xff]
          %v1595 = vld [vmem:[#allocation8 + $0x28] sm:$0xff]
          %v1596 = vld [vmem:[#allocation8 + $0x30] sm:$0xff]
          %v1597 = vld [vmem:[#allocation8 + $0x38] sm:$0xff]
          %v1598 = vsel %vm1550, %v412, 1e+30
          %v1599 = vsel %vm1551, %v413, 1e+30
          %v1600 = vsel %vm1552, %v414, 1e+30
          %v1601 = vsel %vm1553, %v415, 1e+30
          %v1602 = vsel %vm1554, %v416, 1e+30
          %v1603 = vsel %vm1555, %v417, 1e+30
          %v1604 = vsel %vm1556, %v418, 1e+30
          %v1605 = vsel %vm1557, %v419, 1e+30
          %v1606 = vmin.f32 %v1590, %v1598
          %v1607 = vmin.f32 %v1591, %v1599
          %v1608 = vmin.f32 %v1592, %v1600
          %v1609 = vmin.f32 %v1593, %v1601
          %v1610 = vmin.f32 %v1594, %v1602
          %v1611 = vmin.f32 %v1595, %v1603
          %v1612 = vmin.f32 %v1596, %v1604
          %v1613 = vmin.f32 %v1597, %v1605
          %1614 = vst [vmem:[#allocation8] sm:$0xff] %v1606
          %1615 = vst [vmem:[#allocation8 + $0x8] sm:$0xff] %v1607
          %1616 = vst [vmem:[#allocation8 + $0x10] sm:$0xff] %v1608
          %1617 = vst [vmem:[#allocation8 + $0x18] sm:$0xff] %v1609
          %1618 = vst [vmem:[#allocation8 + $0x20] sm:$0xff] %v1610
          %1619 = vst [vmem:[#allocation8 + $0x28] sm:$0xff] %v1611
          %1620 = vst [vmem:[#allocation8 + $0x30] sm:$0xff] %v1612
          %1621 = vst [vmem:[#allocation8 + $0x38] sm:$0xff] %v1613
        $region52: #{tpu_custom_call.1} parent=31 // pred_fallthru
          _
        // Predicated region
        $region53: #{tpu_custom_call.1} parent=31 // pred_check
          %p1622 = pneg %p312
        $region54: #{tpu_custom_call.1} parent=31 // pred_check_branch
          %1624 = sbr.rel (%p1622) target = $region56
        $region55: #{tpu_custom_call.1} parent=31 // pred_region
          %v1625 = vld [vmem:[#allocation2] sm:$0xff]
          %v1626 = vld [vmem:[#allocation2 + $0x8] sm:$0xff]
          %v1627 = vld [vmem:[#allocation2 + $0x10] sm:$0xff]
          %v1628 = vld [vmem:[#allocation2 + $0x18] sm:$0xff]
          %v1629 = vld [vmem:[#allocation2 + $0x20] sm:$0xff]
          %v1630 = vld [vmem:[#allocation2 + $0x28] sm:$0xff]
          %v1631 = vld [vmem:[#allocation2 + $0x30] sm:$0xff]
          %v1632 = vld [vmem:[#allocation2 + $0x38] sm:$0xff]
          %v1633 = vadd.f32 %v1625, %v1626
          %v1634 = vadd.f32 %v1633, %v1627
          %v1635 = vadd.f32 %v1634, %v1628
          %1636 = vadd.xlane.f32.xlu0 %v1635
          %v1637 = vpop.xlane.xlu0 %1636
          %v1638 = vadd.f32 %v1629, %v1630
          %v1639 = vadd.f32 %v1638, %v1631
          %v1640 = vadd.f32 %v1639, %v1632
          %1641 = vadd.xlane.f32.xlu0 %v1640
          %v1642 = vpop.xlane.xlu0 %1641
          %vm1643 = vcmask 7168
          %1644 = vst.msk [vmem:[%s310] sm:$0xff] %vm1643, %v1637
          %1645 = vst.msk [vmem:[%s310 + $0x8] sm:$0xff] %vm1643, %v1642
          %v1646 = vld [vmem:[#allocation3] sm:$0xff]
          %v1647 = vld [vmem:[#allocation3 + $0x8] sm:$0xff]
          %v1648 = vld [vmem:[#allocation3 + $0x10] sm:$0xff]
          %v1649 = vld [vmem:[#allocation3 + $0x18] sm:$0xff]
          %v1650 = vld [vmem:[#allocation3 + $0x20] sm:$0xff]
          %v1651 = vld [vmem:[#allocation3 + $0x28] sm:$0xff]
          %v1652 = vld [vmem:[#allocation3 + $0x30] sm:$0xff]
          %v1653 = vld [vmem:[#allocation3 + $0x38] sm:$0xff]
          %v1654 = vadd.f32 %v1646, %v1647
          %v1655 = vadd.f32 %v1654, %v1648
          %v1656 = vadd.f32 %v1655, %v1649
          %1657 = vadd.xlane.f32.xlu0 %v1656
          %v1658 = vpop.xlane.xlu0 %1657
          %v1659 = vadd.f32 %v1650, %v1651
          %v1660 = vadd.f32 %v1659, %v1652
          %v1661 = vadd.f32 %v1660, %v1653
          %1662 = vadd.xlane.f32.xlu0 %v1661
          %v1663 = vpop.xlane.xlu0 %1662
          %vm1664 = vcmask 15368
          %1665 = vst.msk [vmem:[%s310] sm:$0xff] %vm1664, %v1658
          %1666 = vst.msk [vmem:[%s310 + $0x8] sm:$0xff] %vm1664, %v1663
          %v1667 = vld [vmem:[#allocation4] sm:$0xff]
          %v1668 = vld [vmem:[#allocation4 + $0x8] sm:$0xff]
          %v1669 = vld [vmem:[#allocation4 + $0x10] sm:$0xff]
          %v1670 = vld [vmem:[#allocation4 + $0x18] sm:$0xff]
          %v1671 = vld [vmem:[#allocation4 + $0x20] sm:$0xff]
          %v1672 = vld [vmem:[#allocation4 + $0x28] sm:$0xff]
          %v1673 = vld [vmem:[#allocation4 + $0x30] sm:$0xff]
          %v1674 = vld [vmem:[#allocation4 + $0x38] sm:$0xff]
          %v1675 = vadd.f32 %v1667, %v1668
          %v1676 = vadd.f32 %v1675, %v1669
          %v1677 = vadd.f32 %v1676, %v1670
          %1678 = vadd.xlane.f32.xlu0 %v1677
          %v1679 = vpop.xlane.xlu0 %1678
          %v1680 = vadd.f32 %v1671, %v1672
          %v1681 = vadd.f32 %v1680, %v1673
          %v1682 = vadd.f32 %v1681, %v1674
          %1683 = vadd.xlane.f32.xlu0 %v1682
          %v1684 = vpop.xlane.xlu0 %1683
          %vm1685 = vcmask 23568
          %1686 = vst.msk [vmem:[%s310] sm:$0xff] %vm1685, %v1679
          %1687 = vst.msk [vmem:[%s310 + $0x8] sm:$0xff] %vm1685, %v1684
          %v1688 = vld [vmem:[#allocation6] sm:$0xff]
          %v1689 = vld [vmem:[#allocation6 + $0x8] sm:$0xff]
          %v1690 = vld [vmem:[#allocation6 + $0x10] sm:$0xff]
          %v1691 = vld [vmem:[#allocation6 + $0x18] sm:$0xff]
          %v1692 = vld [vmem:[#allocation6 + $0x20] sm:$0xff]
          %v1693 = vld [vmem:[#allocation6 + $0x28] sm:$0xff]
          %v1694 = vld [vmem:[#allocation6 + $0x30] sm:$0xff]
          %v1695 = vld [vmem:[#allocation6 + $0x38] sm:$0xff]
          %v1696 = vadd.f32 %v1688, %v1689
          %v1697 = vadd.f32 %v1696, %v1690
          %v1698 = vadd.f32 %v1697, %v1691
          %1699 = vadd.xlane.f32.xlu0 %v1698
          %v1700 = vpop.xlane.xlu0 %1699
          %v1701 = vadd.f32 %v1692, %v1693
          %v1702 = vadd.f32 %v1701, %v1694
          %v1703 = vadd.f32 %v1702, %v1695
          %1704 = vadd.xlane.f32.xlu0 %v1703
          %v1705 = vpop.xlane.xlu0 %1704
          %vm1706 = vcmask 31768
          %1707 = vst.msk [vmem:[%s310] sm:$0xff] %vm1706, %v1700
          %1708 = vst.msk [vmem:[%s310 + $0x8] sm:$0xff] %vm1706, %v1705
          %v1709 = vld [vmem:[#allocation5] sm:$0xff]
          %v1710 = vld [vmem:[#allocation5 + $0x8] sm:$0xff]
          %v1711 = vld [vmem:[#allocation5 + $0x10] sm:$0xff]
          %v1712 = vld [vmem:[#allocation5 + $0x18] sm:$0xff]
          %v1713 = vld [vmem:[#allocation5 + $0x20] sm:$0xff]
          %v1714 = vld [vmem:[#allocation5 + $0x28] sm:$0xff]
          %v1715 = vld [vmem:[#allocation5 + $0x30] sm:$0xff]
          %v1716 = vld [vmem:[#allocation5 + $0x38] sm:$0xff]
          %v1717 = vadd.f32 %v1709, %v1710
          %v1718 = vadd.f32 %v1717, %v1711
          %v1719 = vadd.f32 %v1718, %v1712
          %1720 = vadd.xlane.f32.xlu0 %v1719
          %v1721 = vpop.xlane.xlu0 %1720
          %v1722 = vadd.f32 %v1713, %v1714
          %v1723 = vadd.f32 %v1722, %v1715
          %v1724 = vadd.f32 %v1723, %v1716
          %1725 = vadd.xlane.f32.xlu0 %v1724
          %v1726 = vpop.xlane.xlu0 %1725
          %vm1727 = vcmask 39968
          %1728 = vst.msk [vmem:[%s310] sm:$0xff] %vm1727, %v1721
          %1729 = vst.msk [vmem:[%s310 + $0x8] sm:$0xff] %vm1727, %v1726
          %v1730 = vld [vmem:[#allocation7] sm:$0xff]
          %v1731 = vld [vmem:[#allocation7 + $0x8] sm:$0xff]
          %v1732 = vld [vmem:[#allocation7 + $0x10] sm:$0xff]
          %v1733 = vld [vmem:[#allocation7 + $0x18] sm:$0xff]
          %v1734 = vld [vmem:[#allocation7 + $0x20] sm:$0xff]
          %v1735 = vld [vmem:[#allocation7 + $0x28] sm:$0xff]
          %v1736 = vld [vmem:[#allocation7 + $0x30] sm:$0xff]
          %v1737 = vld [vmem:[#allocation7 + $0x38] sm:$0xff]
          %v1738 = vmax.f32 %v1730, %v1732
          %v1739 = vmax.f32 %v1731, %v1733
          %v1740 = vmax.f32 %v1738, %v1739
          %1741 = vmax.xlane.f32.xlu0 %v1740
          %v1742 = vpop.xlane.xlu0 %1741
          %v1743 = vmax.f32 %v1734, %v1736
          %v1744 = vmax.f32 %v1735, %v1737
          %v1745 = vmax.f32 %v1743, %v1744
          %1746 = vmax.xlane.f32.xlu0 %v1745
          %v1747 = vpop.xlane.xlu0 %1746
          %vm1748 = vcmask 48168
          %1749 = vst.msk [vmem:[%s310] sm:$0xff] %vm1748, %v1742
          %1750 = vst.msk [vmem:[%s310 + $0x8] sm:$0xff] %vm1748, %v1747
          %v1751 = vld [vmem:[#allocation8] sm:$0xff]
          %v1752 = vld [vmem:[#allocation8 + $0x8] sm:$0xff]
          %v1753 = vld [vmem:[#allocation8 + $0x10] sm:$0xff]
          %v1754 = vld [vmem:[#allocation8 + $0x18] sm:$0xff]
          %v1755 = vld [vmem:[#allocation8 + $0x20] sm:$0xff]
          %v1756 = vld [vmem:[#allocation8 + $0x28] sm:$0xff]
          %v1757 = vld [vmem:[#allocation8 + $0x30] sm:$0xff]
          %v1758 = vld [vmem:[#allocation8 + $0x38] sm:$0xff]
          %v1759 = vmin.f32 %v1751, %v1753
          %v1760 = vmin.f32 %v1752, %v1754
          %v1761 = vmin.f32 %v1759, %v1760
          %1762 = vmin.xlane.f32.xlu0 %v1761
          %v1763 = vpop.xlane.xlu0 %1762
          %v1764 = vmin.f32 %v1755, %v1757
          %v1765 = vmin.f32 %v1756, %v1758
          %v1766 = vmin.f32 %v1764, %v1765
          %1767 = vmin.xlane.f32.xlu0 %v1766
          %v1768 = vpop.xlane.xlu0 %1767
          %vm1769 = vcmask 56368
          %1770 = vst.msk [vmem:[%s310] sm:$0xff] %vm1769, %v1763
          %1771 = vst.msk [vmem:[%s310 + $0x8] sm:$0xff] %vm1769, %v1768
          %vm1772 = vcmask 64568
          %1773 = vst.msk [vmem:[%s310] sm:$0xff] %vm1772, 0.0
          %1774 = vst.msk [vmem:[%s310 + $0x8] sm:$0xff] %vm1772, 0.0
          %v1775 = vld [vmem:[#allocation9] sm:$0xff]
          %v1776 = vld [vmem:[#allocation9 + $0x8] sm:$0xff]
          %1777 = vmin.xlane.f32.xlu0 %v1775
          %v1778 = vpop.xlane.xlu0 %1777
          %1779 = vmin.xlane.f32.xlu0 %v1776
          %v1780 = vpop.xlane.xlu0 %1779
          %1781 = vst.msk [vmem:[%s301] sm:$0xff] %vm1643, %v1778
          %1782 = vst.msk [vmem:[%s301 + $0x8] sm:$0xff] %vm1643, %v1780
          %v1783 = vld [vmem:[%s795] sm:$0xff]
          %v1784 = vld [vmem:[%s795 + $0x8] sm:$0xff]
          %1785 = vmin.xlane.f32.xlu0 %v1783
          %v1786 = vpop.xlane.xlu0 %1785
          %1787 = vmin.xlane.f32.xlu0 %v1784
          %v1788 = vpop.xlane.xlu0 %1787
          %1789 = vst.msk [vmem:[%s301] sm:$0xff] %vm1664, %v1786
          %1790 = vst.msk [vmem:[%s301 + $0x8] sm:$0xff] %vm1664, %v1788
          %v1791 = vld [vmem:[%s819] sm:$0xff]
          %v1792 = vld [vmem:[%s819 + $0x8] sm:$0xff]
          %1793 = vmin.xlane.f32.xlu0 %v1791
          %v1794 = vpop.xlane.xlu0 %1793
          %1795 = vmin.xlane.f32.xlu0 %v1792
          %v1796 = vpop.xlane.xlu0 %1795
          %1797 = vst.msk [vmem:[%s301] sm:$0xff] %vm1685, %v1794
          %1798 = vst.msk [vmem:[%s301 + $0x8] sm:$0xff] %vm1685, %v1796
          %v1799 = vld [vmem:[%s843] sm:$0xff]
          %v1800 = vld [vmem:[%s843 + $0x8] sm:$0xff]
          %1801 = vmin.xlane.f32.xlu0 %v1799
          %v1802 = vpop.xlane.xlu0 %1801
          %1803 = vmin.xlane.f32.xlu0 %v1800
          %v1804 = vpop.xlane.xlu0 %1803
          %1805 = vst.msk [vmem:[%s301] sm:$0xff] %vm1706, %v1802
          %1806 = vst.msk [vmem:[%s301 + $0x8] sm:$0xff] %vm1706, %v1804
          %v1807 = vld [vmem:[%s867] sm:$0xff]
          %v1808 = vld [vmem:[%s867 + $0x8] sm:$0xff]
          %1809 = vmin.xlane.f32.xlu0 %v1807
          %v1810 = vpop.xlane.xlu0 %1809
          %1811 = vmin.xlane.f32.xlu0 %v1808
          %v1812 = vpop.xlane.xlu0 %1811
          %1813 = vst.msk [vmem:[%s301] sm:$0xff] %vm1727, %v1810
          %1814 = vst.msk [vmem:[%s301 + $0x8] sm:$0xff] %vm1727, %v1812
          %v1815 = vld [vmem:[%s891] sm:$0xff]
          %v1816 = vld [vmem:[%s891 + $0x8] sm:$0xff]
          %1817 = vmin.xlane.f32.xlu0 %v1815
          %v1818 = vpop.xlane.xlu0 %1817
          %1819 = vmin.xlane.f32.xlu0 %v1816
          %v1820 = vpop.xlane.xlu0 %1819
          %1821 = vst.msk [vmem:[%s301] sm:$0xff] %vm1748, %v1818
          %1822 = vst.msk [vmem:[%s301 + $0x8] sm:$0xff] %vm1748, %v1820
          %v1823 = vld [vmem:[%s915] sm:$0xff]
          %v1824 = vld [vmem:[%s915 + $0x8] sm:$0xff]
          %1825 = vmin.xlane.f32.xlu0 %v1823
          %v1826 = vpop.xlane.xlu0 %1825
          %1827 = vmin.xlane.f32.xlu0 %v1824
          %v1828 = vpop.xlane.xlu0 %1827
          %1829 = vst.msk [vmem:[%s301] sm:$0xff] %vm1769, %v1826
          %1830 = vst.msk [vmem:[%s301 + $0x8] sm:$0xff] %vm1769, %v1828
          %v1831 = vld [vmem:[%s939] sm:$0xff]
          %v1832 = vld [vmem:[%s939 + $0x8] sm:$0xff]
          %1833 = vmin.xlane.f32.xlu0 %v1831
          %v1834 = vpop.xlane.xlu0 %1833
          %1835 = vmin.xlane.f32.xlu0 %v1832
          %v1836 = vpop.xlane.xlu0 %1835
          %1837 = vst.msk [vmem:[%s301] sm:$0xff] %vm1772, %v1834
          %1838 = vst.msk [vmem:[%s301 + $0x8] sm:$0xff] %vm1772, %v1836
          %v1839 = vld [vmem:[%s963] sm:$0xff]
          %v1840 = vld [vmem:[%s963 + $0x8] sm:$0xff]
          %1841 = vmin.xlane.f32.xlu0 %v1839
          %v1842 = vpop.xlane.xlu0 %1841
          %1843 = vmin.xlane.f32.xlu0 %v1840
          %v1844 = vpop.xlane.xlu0 %1843
          %vm1845 = vcmask 72768
          %1846 = vst.msk [vmem:[%s301] sm:$0xff] %vm1845, %v1842
          %1847 = vst.msk [vmem:[%s301 + $0x8] sm:$0xff] %vm1845, %v1844
          %v1848 = vld [vmem:[%s987] sm:$0xff]
          %v1849 = vld [vmem:[%s987 + $0x8] sm:$0xff]
          %1850 = vmin.xlane.f32.xlu0 %v1848
          %v1851 = vpop.xlane.xlu0 %1850
          %1852 = vmin.xlane.f32.xlu0 %v1849
          %v1853 = vpop.xlane.xlu0 %1852
          %vm1854 = vcmask 80968
          %1855 = vst.msk [vmem:[%s301] sm:$0xff] %vm1854, %v1851
          %1856 = vst.msk [vmem:[%s301 + $0x8] sm:$0xff] %vm1854, %v1853
          %v1857 = vld [vmem:[%s1011] sm:$0xff]
          %v1858 = vld [vmem:[%s1011 + $0x8] sm:$0xff]
          %1859 = vmin.xlane.f32.xlu0 %v1857
          %v1860 = vpop.xlane.xlu0 %1859
          %1861 = vmin.xlane.f32.xlu0 %v1858
          %v1862 = vpop.xlane.xlu0 %1861
          %vm1863 = vcmask 89168
          %1864 = vst.msk [vmem:[%s301] sm:$0xff] %vm1863, %v1860
          %1865 = vst.msk [vmem:[%s301 + $0x8] sm:$0xff] %vm1863, %v1862
          %v1866 = vld [vmem:[%s1035] sm:$0xff]
          %v1867 = vld [vmem:[%s1035 + $0x8] sm:$0xff]
          %1868 = vmin.xlane.f32.xlu0 %v1866
          %v1869 = vpop.xlane.xlu0 %1868
          %1870 = vmin.xlane.f32.xlu0 %v1867
          %v1871 = vpop.xlane.xlu0 %1870
          %vm1872 = vcmask 97368
          %1873 = vst.msk [vmem:[%s301] sm:$0xff] %vm1872, %v1869
          %1874 = vst.msk [vmem:[%s301 + $0x8] sm:$0xff] %vm1872, %v1871
          %v1875 = vld [vmem:[%s1059] sm:$0xff]
          %v1876 = vld [vmem:[%s1059 + $0x8] sm:$0xff]
          %1877 = vmin.xlane.f32.xlu0 %v1875
          %v1878 = vpop.xlane.xlu0 %1877
          %1879 = vmin.xlane.f32.xlu0 %v1876
          %v1880 = vpop.xlane.xlu0 %1879
          %vm1881 = vcmask 105568
          %1882 = vst.msk [vmem:[%s301] sm:$0xff] %vm1881, %v1878
          %1883 = vst.msk [vmem:[%s301 + $0x8] sm:$0xff] %vm1881, %v1880
          %v1884 = vld [vmem:[%s1083] sm:$0xff]
          %v1885 = vld [vmem:[%s1083 + $0x8] sm:$0xff]
          %1886 = vmin.xlane.f32.xlu0 %v1884
          %v1887 = vpop.xlane.xlu0 %1886
          %1888 = vmin.xlane.f32.xlu0 %v1885
          %v1889 = vpop.xlane.xlu0 %1888
          %vm1890 = vcmask 113768
          %1891 = vst.msk [vmem:[%s301] sm:$0xff] %vm1890, %v1887
          %1892 = vst.msk [vmem:[%s301 + $0x8] sm:$0xff] %vm1890, %v1889
          %v1893 = vld [vmem:[%s1107] sm:$0xff]
          %v1894 = vld [vmem:[%s1107 + $0x8] sm:$0xff]
          %1895 = vmin.xlane.f32.xlu0 %v1893
          %v1896 = vpop.xlane.xlu0 %1895
          %1897 = vmin.xlane.f32.xlu0 %v1894
          %v1898 = vpop.xlane.xlu0 %1897
          %vm1899 = vcmask 121968
          %1900 = vst.msk [vmem:[%s301] sm:$0xff] %vm1899, %v1896
          %1901 = vst.msk [vmem:[%s301 + $0x8] sm:$0xff] %vm1899, %v1898
          %v1902 = vld [vmem:[%s1131] sm:$0xff]
          %v1903 = vld [vmem:[%s1131 + $0x8] sm:$0xff]
          %1904 = vmin.xlane.f32.xlu0 %v1902
          %v1905 = vpop.xlane.xlu0 %1904
          %1906 = vmin.xlane.f32.xlu0 %v1903
          %v1907 = vpop.xlane.xlu0 %1906
          %vm1908 = vcmask 130168
          %1909 = vst.msk [vmem:[%s301] sm:$0xff] %vm1908, %v1905
          %1910 = vst.msk [vmem:[%s301 + $0x8] sm:$0xff] %vm1908, %v1907
        $region56: #{tpu_custom_call.1} parent=31 // pred_fallthru
          _
        %p1911 = scmp.lt.s32.totalorder %s29, 1
        %s1912 = scalar_select %p1911, %s29, 1
        %s1913 = smul.addr %s1912, 2
        %s1914 = smul.addr %s1913, 8
        %s1915 = scalar_lea.vmem %s3, %s1914
        %s1916 = sand.u32 %s148, 1
        %s1917 = scalar_lea.sflag [#allocation12], %s1916
        %s1918 = sand.u32 %s148, 1
        %s1919 = smul.addr %s1918, 16
        %s1920 = scalar_lea.vmem [#allocation16], %s1919
        // Predicated region
        $region57: #{tpu_custom_call.1} parent=31 // pred_check
          %p1921 = pneg %p132
        $region58: #{tpu_custom_call.1} parent=31 // pred_check_branch
          %1923 = sbr.rel (%p1921) target = $region60
        $region59: #{tpu_custom_call.1} parent=31 // pred_region
          _
        $region60: #{tpu_custom_call.1} parent=31 // pred_fallthru
          _
        // Predicated region
        $region61: #{tpu_custom_call.1} parent=31 // pred_check
          %p1924 = pneg %p158
        $region62: #{tpu_custom_call.1} parent=31 // pred_check_branch
          %1926 = sbr.rel (%p1924) target = $region64
        $region63: #{tpu_custom_call.1} parent=31 // pred_region
          %1928 = vsyncadd %s1917, 0
          %s1929 = smul.addr %s29, 2
          %s1930 = smul.addr %s1929, 8
          %s1931 = scalar_lea.hbm %s4, %s1930
          %s1932 = sshll.u32 %s1920, 4
          %s1933 = int_to_ptr.vmem [resolvable:$true] %s1932
          %s1934 = sshll.u32 %s1931, 4
          %s1935 = int_to_ptr.hbm [resolvable:$true] %s1934
          %1940 = dma.vmem_to_hbm [thread:$0]  %s1933, 256, %s1935, %s1917, 128, 128, 8
        $region64: #{tpu_custom_call.1} parent=31 // pred_fallthru
          _
      $region32: #{tpu_custom_call.1} parent=5 // pred_fallthru
        _
      %p1941 = scmp.le.s32.totalorder 2, %s20
      // Predicated region
      $region65: #{tpu_custom_call.1} parent=5 // pred_check
        %p1942 = pneg %p1941
      $region66: #{tpu_custom_call.1} parent=5 // pred_check_branch
        %1944 = sbr.rel (%p1942) target = $region68
      $region67: #{tpu_custom_call.1} parent=5 // pred_region
        %s1945 = ssub.s32 %s20, 2
        // Predicated region
        $region69: #{tpu_custom_call.1} parent=67 // pred_check
          %p1946 = pneg %p138
        $region70: #{tpu_custom_call.1} parent=67 // pred_check_branch
          %1948 = sbr.rel (%p1946) target = $region72
        $region71: #{tpu_custom_call.1} parent=67 // pred_region
          %p1949 = scmp.lt.s32.totalorder %s31, 1
          %s1950 = scalar_select %p1949, %s31, 1
          %s1951 = smul.addr %s1950, 2
          %s1952 = smul.addr %s1951, 8
          %s1953 = scalar_lea.vmem %s3, %s1952
        $region72: #{tpu_custom_call.1} parent=67 // pred_fallthru
          _
        // Predicated region
        $region73: #{tpu_custom_call.1} parent=67 // pred_check
          %p1954 = pneg %p164
        $region74: #{tpu_custom_call.1} parent=67 // pred_check_branch
          %1956 = sbr.rel (%p1954) target = $region76
        $region75: #{tpu_custom_call.1} parent=67 // pred_region
          %s1957 = sand.u32 %s149, 1
          %s1958 = scalar_lea.sflag [#allocation12], %s1957
          %s1959 = sand.u32 %s149, 1
          %s1960 = smul.addr %s1959, 16
          %s1961 = scalar_lea.vmem [#allocation16], %s1960
          %1963 = dma.done %s1958, 256
        $region76: #{tpu_custom_call.1} parent=67 // pred_fallthru
          _
      $region68: #{tpu_custom_call.1} parent=5 // pred_fallthru
        _
    $region6: #{tpu_custom_call.1} parent=1 // loop_footer
      %s24 = sadd.s32 1, %s20
    $region7: #{tpu_custom_call.1} parent=1 // loop_footer_branch
      %19 = sbr.rel target = $region3
    $region8: #{tpu_custom_call.1} parent=1 // loop_exit
      _
    %1964 = vsyncpa [#allocation11], 1
    %s1965 = scalar_lea.sflag [#allocation11], 1
    %1966 = vsyncpa %s1965, 1
    %1967 = vsyncpa [#allocation14], 1
    %s1968 = scalar_lea.sflag [#allocation14], 1
    %1969 = vsyncpa %s1968, 1
    %1970 = vsyncpa [#allocation12], 1
    %s1971 = scalar_lea.sflag [#allocation12], 1
    %1972 = vsyncpa %s1971, 1

</llo_original>
